<compile_context>
chip_gen: v7x
topology: tpu7x:2x2x1
jax: 0.10.0
libtpu: 0.0.40
codegen_flags: <defaults>
</compile_context>

<pallas_src>
import math
from functools import partial

import jax
import jax.numpy as jnp
from jax.experimental import pallas as pl
from jax.experimental.pallas import tpu as pltpu

_VMEM_LIMIT = 48 * 1024 * 1024   # under v7x's 64 MiB/TC; plenty on v5e/v6e
_TM_MAX = 512
_TK_MAX = 4096
_TN_MAX = 1024

_ASPP_DILATIONS = (1, 6, 12, 18, 24, 36)


# ----------------------------------------------------------------------------
# helpers
# ----------------------------------------------------------------------------
def _ceil_to(x, m):
    return (x + m - 1) // m * m


def _k_split(k):
    """-> (Kp, tk, nk). Single full-extent K block when it fits; else 256-mult tk."""
    kp = _ceil_to(k, 128)
    if kp <= _TK_MAX:
        return kp, kp, 1
    nk = -(-k // _TK_MAX)
    tk = _ceil_to(-(-k // nk), 256)
    return tk * nk, tk, nk


def _n_split(n):
    """-> (Np, tn, nn). Force >=2 N blocks for Np>=1024 (feeds both v7x TCs)."""
    np_ = _ceil_to(n, 128)
    nn = -(-np_ // _TN_MAX)
    if np_ >= 1024:
        nn = max(nn, 2)
    tn = _ceil_to(-(-np_ // nn), 128)
    return tn * nn, tn, nn


# ----------------------------------------------------------------------------
# Pallas kernels
# ----------------------------------------------------------------------------
def _mm1_kernel(a_ref, b_ref, s_ref, c_ref, o_ref, *, relu):
    # single K block: out = act(dot(a, dequant(b)) * scale + bias)
    y = jnp.dot(a_ref[...], b_ref[...].astype(jnp.bfloat16),
                preferred_element_type=jnp.float32)
    y = y * s_ref[...] + c_ref[...]
    if relu:
        y = jnp.maximum(y, 0.0)
    o_ref[...] = y.astype(o_ref.dtype)


def _mm1_res_kernel(a_ref, b_ref, s_ref, c_ref, r_ref, o_ref, *, relu):
    y = jnp.dot(a_ref[...], b_ref[...].astype(jnp.bfloat16),
                preferred_element_type=jnp.float32)
    y = y * s_ref[...] + c_ref[...] + r_ref[...].astype(jnp.float32)
    if relu:
        y = jnp.maximum(y, 0.0)
    o_ref[...] = y.astype(o_ref.dtype)


def _mm_kernel(a_ref, b_ref, s_ref, c_ref, o_ref, acc_ref, *, relu):
    k = pl.program_id(2)
    prod = jnp.dot(a_ref[...], b_ref[...].astype(jnp.bfloat16),
                   preferred_element_type=jnp.float32)

    @pl.when(k == 0)
    def _():
        acc_ref[...] = prod            # write on first step (no zero-init pass)

    @pl.when(k > 0)
    def _():
        acc_ref[...] += prod

    @pl.when(k == pl.num_programs(2) - 1)
    def _():
        y = acc_ref[...] * s_ref[...] + c_ref[...]
        if relu:
            y = jnp.maximum(y, 0.0)
        o_ref[...] = y.astype(o_ref.dtype)


def _mm_res_kernel(a_ref, b_ref, s_ref, c_ref, r_ref, o_ref, acc_ref, *, relu):
    k = pl.program_id(2)
    prod = jnp.dot(a_ref[...], b_ref[...].astype(jnp.bfloat16),
                   preferred_element_type=jnp.float32)

    @pl.when(k == 0)
    def _():
        acc_ref[...] = prod

    @pl.when(k > 0)
    def _():
        acc_ref[...] += prod

    @pl.when(k == pl.num_programs(2) - 1)
    def _():
        y = acc_ref[...] * s_ref[...] + c_ref[...] + r_ref[...].astype(jnp.float32)
        if relu:
            y = jnp.maximum(y, 0.0)
        o_ref[...] = y.astype(o_ref.dtype)


def _max_kernel(a_ref, o_ref):
    o_ref[...] = jnp.max(a_ref[...], axis=0, keepdims=True)


# ----------------------------------------------------------------------------
# Pallas wrappers
# ----------------------------------------------------------------------------
def matmul_bn_act(a, p, *, cout, relu, residual=None):
    """(M,K)@(Kp,Np int8 weight) with fused dequant+BN scale/bias [+res] [+ReLU]."""
    w, s, c = p["w"], p["s"], p["b"]
    Kp, Np = w.shape
    M, K = a.shape
    _, tk, nk = _k_split(Kp)
    _, tn, nn = _n_split(Np)
    tm = min(_TM_MAX, _ceil_to(M, 16))
    Mp = _ceil_to(M, tm)
    nm = Mp // tm

    ap = jnp.pad(a.astype(jnp.bfloat16), ((0, Mp - M), (0, Kp - K)))
    args = [ap, w, s, c]

    if nk == 1:
        in_specs = [
            pl.BlockSpec((tm, tk), lambda i, j: (i, 0)),
            pl.BlockSpec((tk, tn), lambda i, j: (0, j)),
            pl.BlockSpec((1, tn), lambda i, j: (0, j)),
            pl.BlockSpec((1, tn), lambda i, j: (0, j)),
        ]
        out_spec = pl.BlockSpec((tm, tn), lambda i, j: (i, j))
        grid = (nm, nn)
        scratch = []
        sem = ("parallel", "parallel")
        if residual is not None:
            in_specs.append(pl.BlockSpec((tm, tn), lambda i, j: (i, j)))
            kern = _mm1_res_kernel
        else:
            kern = _mm1_kernel
    else:
        in_specs = [
            pl.BlockSpec((tm, tk), lambda i, j, k: (i, k)),
            pl.BlockSpec((tk, tn), lambda i, j, k: (k, j)),
            pl.BlockSpec((1, tn), lambda i, j, k: (0, j)),
            pl.BlockSpec((1, tn), lambda i, j, k: (0, j)),
        ]
        out_spec = pl.BlockSpec((tm, tn), lambda i, j, k: (i, j))
        grid = (nm, nn, nk)
        scratch = [pltpu.VMEM((tm, tn), jnp.float32)]
        sem = ("parallel", "parallel", "arbitrary")
        if residual is not None:
            in_specs.append(pl.BlockSpec((tm, tn), lambda i, j, k: (i, j)))  # k-invariant
            kern = _mm_res_kernel
        else:
            kern = _mm_kernel

    if residual is not None:
        rp = jnp.pad(residual.astype(jnp.bfloat16),
                     ((0, Mp - M), (0, Np - residual.shape[1])))
        args.append(rp)

    out = pl.pallas_call(
        partial(kern, relu=relu),
        out_shape=jax.ShapeDtypeStruct((Mp, Np), jnp.bfloat16),
        grid_spec=pltpu.PrefetchScalarGridSpec(
            num_scalar_prefetch=0,
            grid=grid,
            in_specs=in_specs,
            out_specs=out_spec,
            scratch_shapes=scratch,
        ),
        compiler_params=pltpu.CompilerParams(
            dimension_semantics=sem,
            vmem_limit_bytes=_VMEM_LIMIT),
    )(*args)
    return out[:M, :cout]


def conv2d_bn_act(x, p, *, cout, kh=1, kw=1, stride=1, padding=0, dilation=1,
                  relu=True, residual=None):
    """NHWC conv with int8 pre-folded weight, fused BN scale/bias, opt res/ReLU."""
    N, H, W, Cin = x.shape
    Hout = (H + 2 * padding - dilation * (kh - 1) - 1) // stride + 1
    Wout = (W + 2 * padding - dilation * (kw - 1) - 1) // stride + 1

    if kh == 1 and kw == 1 and padding == 0:
        xs = x if stride == 1 else x[:, ::stride, ::stride, :]
        patches = xs.reshape(N * Hout * Wout, Cin)           # pure reshape, no copy
    else:
        # TODO(synk): im2col still materialized by XLA (bf16 channel concat).
        xpad = jnp.pad(x, ((0, 0), (padding, padding), (padding, padding), (0, 0)))
        cols = []
        for ky in range(kh):
            for kx in range(kw):
                ys, xo = ky * dilation, kx * dilation
                cols.append(xpad[:, ys:ys + stride * (Hout - 1) + 1:stride,
                                 xo:xo + stride * (Wout - 1) + 1:stride, :])
        patches = jnp.concatenate(cols, axis=-1).reshape(N * Hout * Wout, kh * kw * Cin)

    res2d = residual.reshape(N * Hout * Wout, -1) if residual is not None else None
    out = matmul_bn_act(patches, p, cout=cout, relu=relu, residual=res2d)
    return out.reshape(N, Hout, Wout, cout)


def maxpool2d_3x3_s2_p1(x):
    """NHWC 3x3 stride-2 pad-1 max pool (Pallas max-reduce over the 9 taps)."""
    N, H, W, C = x.shape
    Hout = (H - 1) // 2 + 1
    Wout = (W - 1) // 2 + 1
    xpad = jnp.pad(x, ((0, 0), (1, 1), (1, 1), (0, 0)), constant_values=-jnp.inf)
    cols = [xpad[:, ky:ky + 2 * (Hout - 1) + 1:2, kx:kx + 2 * (Wout - 1) + 1:2, :]
            for ky in range(3) for kx in range(3)]
    stk = jnp.stack(cols, axis=0).reshape(9, N * Hout * Wout * C)
    Mtot = stk.shape[1]
    tn = min(_ceil_to(Mtot, 128), 32768)                     # big lane-dense blocks
    Mp = _ceil_to(Mtot, tn)
    sp = jnp.pad(stk, ((0, 0), (0, Mp - Mtot)), constant_values=-jnp.inf)
    out = pl.pallas_call(
        _max_kernel,
        out_shape=jax.ShapeDtypeStruct((1, Mp), x.dtype),
        grid=(Mp // tn,),
        in_specs=[pl.BlockSpec((9, tn), lambda j: (0, j))],
        out_specs=pl.BlockSpec((1, tn), lambda j: (0, j)),
        compiler_params=pltpu.CompilerParams(vmem_limit_bytes=_VMEM_LIMIT),
    )(sp)
    return out[0, :Mtot].reshape(N, Hout, Wout, C)


# ----------------------------------------------------------------------------
# JAX glue: bilinear resize (align_corners=False, PyTorch semantics), NHWC
# ----------------------------------------------------------------------------
def bilinear_resize(x, out_h, out_w):
    # TODO(synk): gather-based bilinear resize stays in plain JAX glue (tiny op).
    N, H, W, C = x.shape
    if H == out_h and W == out_w:
        return x
    dy = jnp.maximum((jnp.arange(out_h, dtype=jnp.float32) + 0.5) * (H / out_h) - 0.5, 0.0)
    dx = jnp.maximum((jnp.arange(out_w, dtype=jnp.float32) + 0.5) * (W / out_w) - 0.5, 0.0)
    y0f, x0f = jnp.floor(dy), jnp.floor(dx)
    wy, wx = dy - y0f, dx - x0f
    y0 = jnp.clip(y0f.astype(jnp.int32), 0, H - 1)
    y1 = jnp.clip(y0 + 1, 0, H - 1)
    x0 = jnp.clip(x0f.astype(jnp.int32), 0, W - 1)
    x1 = jnp.clip(x0 + 1, 0, W - 1)
    top, bot = x[:, y0, :, :], x[:, y1, :, :]

    def hor(img):
        return (img[:, :, x0, :] * (1.0 - wx)[None, None, :, None]
                + img[:, :, x1, :] * wx[None, None, :, None])

    t, b = hor(top), hor(bot)
    return t * (1.0 - wy)[None, :, None, None] + b * wy[None, :, None, None]


# ----------------------------------------------------------------------------
# deterministic parameter init (PyTorch-equivalent structure)
# ----------------------------------------------------------------------------
def make_conv(key, cout, cin, kh, kw):
    fan_in = cin * kh * kw
    return (jax.random.normal(key, (cout, cin, kh, kw), dtype=jnp.float32)
            * math.sqrt(2.0 / fan_in))


def make_bn(key, c):
    k1, k2, k3, k4 = jax.random.split(key, 4)
    gamma = jax.random.uniform(k1, (c,), minval=0.5, maxval=1.0, dtype=jnp.float32)
    beta = 0.1 * jax.random.normal(k2, (c,), dtype=jnp.float32)
    mean = 0.1 * jax.random.normal(k3, (c,), dtype=jnp.float32)
    var = jax.random.uniform(k4, (c,), minval=0.8, maxval=1.2, dtype=jnp.float32)
    scale = gamma / jnp.sqrt(var + 1e-5)
    bias = beta - mean * scale
    return scale, bias


def make_layer(key, inplanes, planes, blocks, stride):
    params = []
    keys = jax.random.split(key, blocks)
    for i in range(blocks):
        kk = jax.random.split(keys[i], 8)
        inp = inplanes if i == 0 else planes * 4
        blk = {
            "w1": make_conv(kk[0], planes, inp, 1, 1), "bn1": make_bn(kk[1], planes),
            "w2": make_conv(kk[2], planes, planes, 3, 3), "bn2": make_bn(kk[3], planes),
            "w3": make_conv(kk[4], planes * 4, planes, 1, 1), "bn3": make_bn(kk[5], planes * 4),
            "downsample": ((make_conv(kk[6], planes * 4, inp, 1, 1),
                            make_bn(kk[7], planes * 4)) if i == 0 else None),
        }
        params.append(blk)
    return params


def init_params(key, in_channels=1, out_channels=1):
    keys = jax.random.split(key, 16)
    bb = {
        "conv1_w": make_conv(keys[0], 64, in_channels, 7, 7),
        "bn1": make_bn(keys[1], 64),
        "layer1": make_layer(keys[2], 64, 64, 3, 1),
        "layer2": make_layer(keys[3], 256, 128, 4, 2),
        "layer3": make_layer(keys[4], 512, 256, 23, 2),
        "layer4": make_layer(keys[5], 1024, 512, 3, 2),
    }
    akeys = jax.random.split(keys[6], len(_ASPP_DILATIONS) * 2)
    branches = [(make_conv(akeys[2 * i], 1024, 2048, 3, 3),
                 make_bn(akeys[2 * i + 1], 1024), d)
                for i, d in enumerate(_ASPP_DILATIONS)]
    gk = jax.random.split(keys[7], 2)
    gp = (make_conv(gk[0], 1024, 2048, 1, 1),
          0.1 * jax.random.normal(gk[1], (1024,), dtype=jnp.float32))
    pk = jax.random.split(keys[8], 2)
    project = (make_conv(pk[0], 2048, 1024 * 7, 1, 1), make_bn(pk[1], 2048))
    ck = jax.random.split(keys[9], 6)
    classifier = {
        "w1": make_conv(ck[0], 1024, 2048, 3, 3), "bn1": make_bn(ck[1], 1024),
        "w2": make_conv(ck[2], 512, 1024, 3, 3), "bn2": make_bn(ck[3], 512),
        "w3": make_conv(ck[4], out_channels, 512, 1, 1),
        "b3": 0.1 * jax.random.normal(ck[5], (out_channels,), dtype=jnp.float32),
    }
    return {"backbone": bb,
            "aspp": {"branches": branches, "gp": gp, "project": project},
            "classifier": classifier}


# ----------------------------------------------------------------------------
# one-time weight preparation: fold to matmul layout, int8 quantize, pad
# ----------------------------------------------------------------------------
def _quantize_cols(wmat):
    absmax = jnp.max(jnp.abs(wmat), axis=0)
    qscale = jnp.maximum(absmax, 1e-12) / 127.0
    wq = jnp.clip(jnp.round(wmat / qscale), -127.0, 127.0).astype(jnp.int8)
    return wq, qscale


def _prep_matmul(wmat, scale, bias):
    # wmat: (K, cout) fp32; per-column int8 quant; dequant scale folded into BN scale.
    K, cout = wmat.shape
    Kp, _, _ = _k_split(K)
    Np, _, _ = _n_split(cout)
    wq, qscale = _quantize_cols(wmat.astype(jnp.float32))
    w = jnp.pad(wq, ((0, Kp - K), (0, Np - cout)))
    s = jnp.pad((scale.astype(jnp.float32) * qscale).reshape(1, -1),
                ((0, 0), (0, Np - cout)))
    b = jnp.pad(bias.astype(jnp.float32).reshape(1, -1), ((0, 0), (0, Np - cout)))
    return {"w": w, "s": s, "b": b}


def _prep_conv(w, scale, bias):
    cout, cin, kh, kw = w.shape
    # patches are ordered (ky, kx, cin) -> weight rows must match
    wmat = w.transpose(2, 3, 1, 0).reshape(kh * kw * cin, cout)
    return _prep_matmul(wmat, scale, bias)


def prepare_params(params):
    bb = params["backbone"]
    pbb = {"conv1": _prep_conv(bb["conv1_w"], *bb["bn1"])}
    for name in ("layer1", "layer2", "layer3", "layer4"):
        blks = []
        for blk in bb[name]:
            p = {"c1": _prep_conv(blk["w1"], *blk["bn1"]),
                 "c2": _prep_conv(blk["w2"], *blk["bn2"]),
                 "c3": _prep_conv(blk["w3"], *blk["bn3"])}
            if blk["downsample"] is not None:
                wd, bnd = blk["downsample"]
                p["down"] = _prep_conv(wd, *bnd)
            blks.append(p)
        pbb[name] = blks

    asp = params["aspp"]
    branches_full = [_prep_conv(w, *bn) for (w, bn, _) in asp["branches"]]
    # center-tap (1x1-equivalent) weights of branches[1:], concatenated along N
    cen_w, cen_s, cen_b = [], [], []
    for (w, (s, b), _) in asp["branches"][1:]:
        cen_w.append(w[:, :, 1, 1].transpose(1, 0))           # (cin, cout)
        cen_s.append(s)
        cen_b.append(b)
    center_cat = _prep_matmul(jnp.concatenate(cen_w, axis=1),
                              jnp.concatenate(cen_s),
                              jnp.concatenate(cen_b))
    gpw, gpb = asp["gp"]
    pw, pbn = asp["project"]
    paspp = {"branches_full": branches_full,
             "center_cat": center_cat,
             "gp": _prep_conv(gpw, jnp.ones((gpw.shape[0],), jnp.float32), gpb),
             "project": _prep_conv(pw, *pbn)}

    cl = params["classifier"]
    pcls = {"c1": _prep_conv(cl["w1"], *cl["bn1"]),
            "c2": _prep_conv(cl["w2"], *cl["bn2"]),
            "c3": _prep_conv(cl["w3"], jnp.ones((cl["w3"].shape[0],), jnp.float32),
                             cl["b3"])}
    return {"backbone": pbb, "aspp": paspp, "classifier": pcls,
            "meta": {"out_channels": int(cl["w3"].shape[0])}}


# ----------------------------------------------------------------------------
# model forward (input/output NCHW to match PyTorch; NHWC + bf16 internally)
# ----------------------------------------------------------------------------
@jax.jit
def _stem(x, p_conv1):
    h = jnp.transpose(x, (0, 2, 3, 1)).astype(jnp.bfloat16)   # NCHW -> NHWC once
    h = conv2d_bn_act(h, p_conv1, cout=64, kh=7, kw=7, stride=2, padding=3, relu=True)
    return maxpool2d_3x3_s2_p1(h)


@partial(jax.jit, static_argnames=("stride", "planes"))
def _bottleneck(x, blk, *, stride, planes):
    identity = x
    out = conv2d_bn_act(x, blk["c1"], cout=planes, relu=True)
    out = conv2d_bn_act(out, blk["c2"], cout=planes, kh=3, kw=3,
                        stride=stride, padding=1, relu=True)
    if "down" in blk:
        identity = conv2d_bn_act(x, blk["down"], cout=planes * 4,
                                 stride=stride, relu=False)
    return conv2d_bn_act(out, blk["c3"], cout=planes * 4, relu=True,
                         residual=identity)


@jax.jit
def _aspp(x, p):
    N, H, W, C = x.shape
    cb = 1024
    full = p["branches_full"]
    if max(H, W) <= min(_ASPP_DILATIONS[1:]):
        # Branches with dilation >= feature size only see padding off-center:
        # run them as ONE 1x1 matmul over the concatenated center-tap weights.
        out0 = conv2d_bn_act(x, full[0], cout=cb, kh=3, kw=3,
                             padding=_ASPP_DILATIONS[0], dilation=_ASPP_DILATIONS[0],
                             relu=True)
        rest = conv2d_bn_act(x, p["center_cat"],
                             cout=cb * (len(_ASPP_DILATIONS) - 1), relu=True)
        feats = jnp.concatenate([out0, rest], axis=-1)
    else:
        outs = [conv2d_bn_act(x, full[i], cout=cb, kh=3, kw=3,
                              padding=d, dilation=d, relu=True)
                for i, d in enumerate(_ASPP_DILATIONS)]
        feats = jnp.concatenate(outs, axis=-1)

    # global pooling branch: avgpool -> 1x1 conv (bias, no BN) -> ReLU -> upsample
    gp_in = jnp.mean(x.astype(jnp.float32), axis=(1, 2), keepdims=True)
    gp = conv2d_bn_act(gp_in, p["gp"], cout=cb, relu=True)
    gp = jnp.broadcast_to(gp, (N, H, W, cb)).astype(feats.dtype)

    h = jnp.concatenate([feats, gp], axis=-1)
    # Dropout(0.5): identity at inference.
    return conv2d_bn_act(h, p["project"], cout=2 * cb, relu=True)


@partial(jax.jit, static_argnames=("out_channels", "out_h", "out_w"))
def _classifier(x, p, *, out_channels, out_h, out_w):
    h = conv2d_bn_act(x, p["c1"], cout=1024, kh=3, kw=3, padding=1, relu=True)
    h = conv2d_bn_act(h, p["c2"], cout=512, kh=3, kw=3, padding=1, relu=True)
    h = conv2d_bn_act(h, p["c3"], cout=out_channels, relu=False)
    h = bilinear_resize(h.astype(jnp.float32), out_h, out_w)
    return jnp.transpose(h, (0, 3, 1, 2))                     # back to NCHW


def deeplabv3_forward(x, prep):
    in_h, in_w = x.shape[2], x.shape[3]
    h = _stem(x, prep["backbone"]["conv1"])
    for name, planes, stride in (("layer1", 64, 1), ("layer2", 128, 2),
                                 ("layer3", 256, 2), ("layer4", 512, 2)):
        for bi, blk in enumerate(prep["backbone"][name]):
            h = _bottleneck(h, blk, stride=(stride if bi == 0 else 1), planes=planes)
    h = _aspp(h, prep["aspp"])
    return _classifier(h, prep["classifier"],
                       out_channels=prep["meta"]["out_channels"],
                       out_h=in_h, out_w=in_w)


# ----------------------------------------------------------------------------
if __name__ == "__main__":
    key = jax.random.PRNGKey(0)
    pkey, xkey = jax.random.split(key)
    params = init_params(pkey, in_channels=1, out_channels=1)
    prep = prepare_params(params)
    x = jax.random.normal(xkey, (1, 1, 64, 64), dtype=jnp.float32)

    out = deeplabv3_forward(x, prep)
    out = jax.block_until_ready(out)

    assert out.shape == (1, 1, 64, 64), out.shape
    assert bool(jnp.all(jnp.isfinite(out)))
    print("KERNEL_OK")
</pallas_src>

<mosaic_0001>
module attributes {stable_mosaic.version = 11 : i64} {
  func.func @_mm1_kernel(%arg0: i32, %arg1: i32, %arg2: memref<512x128xbf16, #tpu.memory_space<vmem>>, %arg3: memref<128x128xi8, #tpu.memory_space<vmem>>, %arg4: memref<1x128xf32, #tpu.memory_space<vmem>>, %arg5: memref<1x128xf32, #tpu.memory_space<vmem>>, %arg6: memref<512x128xbf16, #tpu.memory_space<vmem>>) attributes {dimension_semantics = [#tpu.dimension_semantics<parallel>, #tpu.dimension_semantics<parallel>], iteration_bounds = array<i64: 2, 1>, scalar_prefetch = 0 : i64, scratch_operands = 0 : i64, tpu.core_type = #tpu.core_type<tc>, window_params = [{transform_indices = @transform_0, window_bounds = array<i64: 512, 128>}, {transform_indices = @transform_1, window_bounds = array<i64: 128, 128>}, {transform_indices = @transform_2, window_bounds = array<i64: 1, 128>}, {transform_indices = @transform_3, window_bounds = array<i64: 1, 128>}, {transform_indices = @transform_4, window_bounds = array<i64: 512, 128>}]} {
    %c0 = arith.constant 0 : index
    %c0_0 = arith.constant 0 : index
    %0 = vector.load %arg2[%c0, %c0_0] : memref<512x128xbf16, #tpu.memory_space<vmem>>, vector<512x128xbf16>
    %c0_1 = arith.constant 0 : index
    %c0_2 = arith.constant 0 : index
    %1 = vector.load %arg3[%c0_1, %c0_2] : memref<128x128xi8, #tpu.memory_space<vmem>>, vector<128x128xi8>
    %2 = arith.sitofp %1 : vector<128x128xi8> to vector<128x128xbf16>
    %cst = arith.constant dense<0.000000e+00> : vector<512x128xf32>
    %3 = tpu.matmul %0, %2, %cst {dimension_numbers = #tpu.dot_dimension_numbers<[1], [0], [0], [1], [0, 0, 1, 1], [], []>} : vector<512x128xbf16>, vector<128x128xbf16>, vector<512x128xf32> -> vector<512x128xf32>
    %c0_3 = arith.constant 0 : index
    %c0_4 = arith.constant 0 : index
    %4 = vector.load %arg4[%c0_3, %c0_4] : memref<1x128xf32, #tpu.memory_space<vmem>>, vector<1x128xf32>
    %5 = vector.broadcast %4 : vector<1x128xf32> to vector<512x128xf32>
    %6 = arith.mulf %3, %5 : vector<512x128xf32>
    %c0_5 = arith.constant 0 : index
    %c0_6 = arith.constant 0 : index
    %7 = vector.load %arg5[%c0_5, %c0_6] : memref<1x128xf32, #tpu.memory_space<vmem>>, vector<1x128xf32>
    %8 = vector.broadcast %7 : vector<1x128xf32> to vector<512x128xf32>
    %9 = arith.addf %6, %8 : vector<512x128xf32>
    %cst_7 = arith.constant 0.000000e+00 : f32
    %10 = vector.broadcast %cst_7 : f32 to vector<512x128xf32>
    %11 = arith.maximumf %9, %10 : vector<512x128xf32>
    %12 = arith.truncf %11 : vector<512x128xf32> to vector<512x128xbf16>
    %c0_8 = arith.constant 0 : index
    %c0_9 = arith.constant 0 : index
    %13 = vector.load %arg6[%c0_8, %c0_9] : memref<512x128xbf16, #tpu.memory_space<vmem>>, vector<512x128xbf16>
    tpu.vector_store %arg6[%c0_8, %c0_9], %12 {strides = array<i32>} : memref<512x128xbf16, #tpu.memory_space<vmem>>, vector<512x128xbf16>,
    return
  }
  func.func @transform_0(%arg0: i32, %arg1: i32) -> (i32, i32) {
    %c0_i32 = arith.constant 0 : i32
    %c0_i32_0 = arith.constant 0 : i32
    return %arg0, %c0_i32 : i32, i32
  }
  func.func @transform_1(%arg0: i32, %arg1: i32) -> (i32, i32) {
    %c0_i32 = arith.constant 0 : i32
    %c0_i32_0 = arith.constant 0 : i32
    return %c0_i32, %arg1 : i32, i32
  }
  func.func @transform_2(%arg0: i32, %arg1: i32) -> (i32, i32) {
    %c0_i32 = arith.constant 0 : i32
    %c0_i32_0 = arith.constant 0 : i32
    return %c0_i32, %arg1 : i32, i32
  }
  func.func @transform_3(%arg0: i32, %arg1: i32) -> (i32, i32) {
    %c0_i32 = arith.constant 0 : i32
    %c0_i32_0 = arith.constant 0 : i32
    return %c0_i32, %arg1 : i32, i32
  }
  func.func @transform_4(%arg0: i32, %arg1: i32) -> (i32, i32) {
    %c0_i32 = arith.constant 0 : i32
    return %arg0, %arg1 : i32, i32
  }
}

module attributes {stable_mosaic.version = 11 : i64} {
  func.func @_max_kernel(%arg0: i32, %arg1: memref<9x16384xbf16, #tpu.memory_space<vmem>>, %arg2: memref<1x16384xbf16, #tpu.memory_space<vmem>>) attributes {dimension_semantics = [#tpu.dimension_semantics<arbitrary>], iteration_bounds = array<i64: 1>, scalar_prefetch = 0 : i64, scratch_operands = 0 : i64, tpu.core_type = #tpu.core_type<tc>, window_params = [{transform_indices = @transform_0, window_bounds = array<i64: 9, 16384>}, {transform_indices = @transform_1, window_bounds = array<i64: 1, 16384>}]} {
    %c0 = arith.constant 0 : index
    %c0_0 = arith.constant 0 : index
    %0 = vector.load %arg1[%c0, %c0_0] : memref<9x16384xbf16, #tpu.memory_space<vmem>>, vector<9x16384xbf16>
    %cst = arith.constant dense<0xFF80> : vector<16384xbf16>
    %1 = vector.multi_reduction <maximumf>, %0, %cst [0] : vector<9x16384xbf16> to vector<16384xbf16>
    %2 = vector.shape_cast %1 : vector<16384xbf16> to vector<1x16384xbf16>
    %c0_1 = arith.constant 0 : index
    %c0_2 = arith.constant 0 : index
    %3 = vector.load %arg2[%c0_1, %c0_2] : memref<1x16384xbf16, #tpu.memory_space<vmem>>, vector<1x16384xbf16>
    tpu.vector_store %arg2[%c0_1, %c0_2], %2 {strides = array<i32>} : memref<1x16384xbf16, #tpu.memory_space<vmem>>, vector<1x16384xbf16>,
    return
  }
  func.func @transform_0(%arg0: i32) -> (i32, i32) {
    %c0_i32 = arith.constant 0 : i32
    %c0_i32_0 = arith.constant 0 : i32
    return %c0_i32, %arg0 : i32, i32
  }
  func.func @transform_1(%arg0: i32) -> (i32, i32) {
    %c0_i32 = arith.constant 0 : i32
    %c0_i32_0 = arith.constant 0 : i32
    return %c0_i32, %arg0 : i32, i32
  }
}

</mosaic_0001>

<llo_original>
// kernel: _stem.2
$region0: #{_stem.2}
  #allocation0 [shape = 'u32[]', space=smem, size = 0x4, offset = 0x4, fixed_abs, tag = 'smem constant byte address 0x4 - core index']
  #allocation1 [shape = 'u32[144,128]{1,0:T(1,128)}', space=vmem, size = 0x12000, scoped, tag = 'internal scratch']
  %s0 = inlined_call_operand.vmem [shape: bf16[1024,128], index: 0, kind: input, shape index: {}]
  %s1 = inlined_call_operand.vmem [shape: s8[128,128], index: 1, kind: input, shape index: {}]
  %s2 = inlined_call_operand.vmem [shape: f32[1,128], index: 2, kind: input, shape index: {}]
  %s3 = inlined_call_operand.vmem [shape: f32[1,128], index: 3, kind: input, shape index: {}]
  %s4 = inlined_call_operand.vmem [shape: bf16[1024,128], index: 4, kind: output, shape index: {}]
  %s5 = sld [smem:[#allocation0]]
  $region49: #{_stem.2} parent=0
    _
  %s7 = ssub.s32 1, %s5
  %s8 = scalar_select 0, %s7, %s5
  loop: start=0, step=1, limit=4
  $region2: #{_stem.2} parent=0 // loop_pre_header
    _
  $region3: #{_stem.2} parent=0 // loop_header
    %s10 = sphi 0, %s14
    %p11 = scmp.ge.s32.totalorder %s10, 4
    %s17 = sphi 0, %s29
    %s18 = sphi 0, %s25
    %s19 = sphi 0, %s17
    %s20 = sphi 0, %s18
    %s21 = sphi 0, %s19
    %s22 = sphi 0, %s20
    %s32 = sphi 0, %s34
    %s35 = sphi 0, %s32
    %s36 = sphi 0, %s35
    %s52 = sphi 0, %s36
    %s58 = sphi 0, %s60
    %s61 = sphi 0, %s58
    %s62 = sphi 0, %s61
    %s78 = sphi 0, %s62
    %s84 = sphi 0, %s86
    %s87 = sphi 0, %s84
    %s88 = sphi 0, %s87
    %s104 = sphi 0, %s88
    %s110 = sphi 0, %s112
    %s113 = sphi 0, %s110
    %s114 = sphi 0, %s113
    %s130 = sphi 0, %s114
    %s138 = sphi 0, %s140
    %s141 = sphi 0, %s138
    %s142 = sphi 0, %s141
    %s158 = sphi 0, %s142
  $region4: #{_stem.2} parent=0 // loop_header_branch
    %13 = sbr.rel (%p11) target = $region8
  $region5: #{_stem.2} parent=0 // loop_body
    %s15 = ssub.s32 %s10, 1
    %s16 = ssub.s32 %s10, 2
    %s23 = sadd.s32 1, %s18
    %p24 = scmp.ge.s32.totalorder %s23, 1
    %s25 = scalar_select %p24, 0, %s23
    %s26 = sadd.s32 1, %s17
    %s27 = scalar_select %p24, %s26, %s17
    %p28 = scmp.ge.s32.totalorder %s27, 2
    %s29 = scalar_select %p28, 0, %s27
    %s30 = ssub.s32 %s17, %s29
    %p31 = scmp.eq.s32.totalorder %s30, 0
    %s33 = sadd.s32 %s32, 1
    %s34 = scalar_select %p31, %s32, %s33
    %p37 = pneg %p31
    %p38 = scmp.eq.s32.totalorder %s10, 1
    %p39 = por %p37, %p38
    %p40 = scmp.ne.s32.totalorder %s32, %s35
    %p41 = scmp.eq.s32.totalorder %s10, 0
    %p42 = por %p40, %p41
    %p43 = scmp.ne.s32.totalorder %s32, %s35
    %p44 = scmp.eq.s32.totalorder %s15, 1
    %p45 = por %p43, %p44
    %p46 = scmp.ne.s32.totalorder %s35, %s36
    %p47 = scmp.eq.s32.totalorder %s15, 0
    %p48 = por %p46, %p47
    %p49 = scmp.ne.s32.totalorder %s35, %s36
    %p50 = scmp.eq.s32.totalorder %s16, 1
    %p51 = por %p49, %p50
    %p53 = scmp.ne.s32.totalorder %s36, %s52
    %p54 = scmp.eq.s32.totalorder %s16, 0
    %p55 = por %p53, %p54
    %s56 = ssub.s32 %s18, %s25
    %p57 = scmp.eq.s32.totalorder %s56, 0
    %s59 = sadd.s32 %s58, 1
    %s60 = scalar_select %p57, %s58, %s59
    %p63 = pneg %p57
    %p64 = scmp.eq.s32.totalorder %s10, 1
    %p65 = por %p63, %p64
    %p66 = scmp.ne.s32.totalorder %s58, %s61
    %p67 = scmp.eq.s32.totalorder %s10, 0
    %p68 = por %p66, %p67
    %p69 = scmp.ne.s32.totalorder %s58, %s61
    %p70 = scmp.eq.s32.totalorder %s15, 1
    %p71 = por %p69, %p70
    %p72 = scmp.ne.s32.totalorder %s61, %s62
    %p73 = scmp.eq.s32.totalorder %s15, 0
    %p74 = por %p72, %p73
    %p75 = scmp.ne.s32.totalorder %s61, %s62
    %p76 = scmp.eq.s32.totalorder %s16, 1
    %p77 = por %p75, %p76
    %p79 = scmp.ne.s32.totalorder %s62, %s78
    %p80 = scmp.eq.s32.totalorder %s16, 0
    %p81 = por %p79, %p80
    %s82 = ssub.s32 %s18, %s25
    %p83 = scmp.eq.s32.totalorder %s82, 0
    %s85 = sadd.s32 %s84, 1
    %s86 = scalar_select %p83, %s84, %s85
    %p89 = pneg %p83
    %p90 = scmp.eq.s32.totalorder %s10, 1
    %p91 = por %p89, %p90
    %p92 = scmp.ne.s32.totalorder %s84, %s87
    %p93 = scmp.eq.s32.totalorder %s10, 0
    %p94 = por %p92, %p93
    %p95 = scmp.ne.s32.totalorder %s84, %s87
    %p96 = scmp.eq.s32.totalorder %s15, 1
    %p97 = por %p95, %p96
    %p98 = scmp.ne.s32.totalorder %s87, %s88
    %p99 = scmp.eq.s32.totalorder %s15, 0
    %p100 = por %p98, %p99
    %p101 = scmp.ne.s32.totalorder %s87, %s88
    %p102 = scmp.eq.s32.totalorder %s16, 1
    %p103 = por %p101, %p102
    %p105 = scmp.ne.s32.totalorder %s88, %s104
    %p106 = scmp.eq.s32.totalorder %s16, 0
    %p107 = por %p105, %p106
    %s108 = ssub.s32 %s18, %s25
    %p109 = scmp.eq.s32.totalorder %s108, 0
    %s111 = sadd.s32 %s110, 1
    %s112 = scalar_select %p109, %s110, %s111
    %p115 = pneg %p109
    %p116 = scmp.eq.s32.totalorder %s10, 1
    %p117 = por %p115, %p116
    %p118 = scmp.ne.s32.totalorder %s110, %s113
    %p119 = scmp.eq.s32.totalorder %s10, 0
    %p120 = por %p118, %p119
    %p121 = scmp.ne.s32.totalorder %s110, %s113
    %p122 = scmp.eq.s32.totalorder %s15, 1
    %p123 = por %p121, %p122
    %p124 = scmp.ne.s32.totalorder %s113, %s114
    %p125 = scmp.eq.s32.totalorder %s15, 0
    %p126 = por %p124, %p125
    %p127 = scmp.ne.s32.totalorder %s113, %s114
    %p128 = scmp.eq.s32.totalorder %s16, 1
    %p129 = por %p127, %p128
    %p131 = scmp.ne.s32.totalorder %s114, %s130
    %p132 = scmp.eq.s32.totalorder %s16, 0
    %p133 = por %p131, %p132
    %s134 = ssub.s32 %s17, %s29
    %s135 = ssub.s32 %s18, %s25
    %s136 = sor.u32 %s134, %s135
    %p137 = scmp.eq.s32.totalorder %s136, 0
    %s139 = sadd.s32 %s138, 1
    %s140 = scalar_select %p137, %s138, %s139
    %p143 = pneg %p137
    %p144 = scmp.eq.s32.totalorder %s10, 1
    %p145 = por %p143, %p144
    %p146 = scmp.ne.s32.totalorder %s138, %s141
    %p147 = scmp.eq.s32.totalorder %s10, 0
    %p148 = por %p146, %p147
    %p149 = scmp.ne.s32.totalorder %s138, %s141
    %p150 = scmp.eq.s32.totalorder %s15, 1
    %p151 = por %p149, %p150
    %p152 = scmp.ne.s32.totalorder %s141, %s142
    %p153 = scmp.eq.s32.totalorder %s15, 0
    %p154 = por %p152, %p153
    %p155 = scmp.ne.s32.totalorder %s141, %s142
    %p156 = scmp.eq.s32.totalorder %s16, 1
    %p157 = por %p155, %p156
    %p159 = scmp.ne.s32.totalorder %s142, %s158
    %p160 = scmp.eq.s32.totalorder %s16, 0
    %p161 = por %p159, %p160
    %p162 = scmp.le.s32.totalorder 1, %s10
    %p163 = scmp.lt.s32.totalorder %s10, 3
    %p164 = pnand %p162, %p163
    %p165 = pneg %p164
    // Predicated region
    $region9: #{_stem.2} parent=5 // pred_check
      _
    $region10: #{_stem.2} parent=5 // pred_check_branch
      %167 = sbr.rel (%p164) target = $region12
    $region11: #{_stem.2} parent=5 // pred_region
      %s168 = ssub.s32 %s10, 1
      // Predicated region
      $region13: #{_stem.2} parent=11 // pred_check
        %p169 = pneg %p74
      $region14: #{_stem.2} parent=11 // pred_check_branch
        %171 = sbr.rel (%p169) target = $region16
      $region15: #{_stem.2} parent=11 // pred_region
        %p172 = scmp.lt.s32.totalorder %s20, 0
        %s173 = scalar_select %p172, %s20, 0
        %s174 = smul.addr %s173, 8
        %s175 = scalar_lea.vmem %s1, %s174
      $region16: #{_stem.2} parent=11 // pred_fallthru
        _
      // Predicated region
      $region17: #{_stem.2} parent=11 // pred_check
        %p176 = pneg %p100
      $region18: #{_stem.2} parent=11 // pred_check_branch
        %178 = sbr.rel (%p176) target = $region20
      $region19: #{_stem.2} parent=11 // pred_region
        %p179 = scmp.lt.s32.totalorder %s20, 0
        %s180 = scalar_select %p179, %s20, 0
        %s181 = scalar_lea.vmem %s2, %s180
      $region20: #{_stem.2} parent=11 // pred_fallthru
        _
      // Predicated region
      $region21: #{_stem.2} parent=11 // pred_check
        %p182 = pneg %p126
      $region22: #{_stem.2} parent=11 // pred_check_branch
        %184 = sbr.rel (%p182) target = $region24
      $region23: #{_stem.2} parent=11 // pred_region
        %p185 = scmp.lt.s32.totalorder %s20, 0
        %s186 = scalar_select %p185, %s20, 0
        %s187 = scalar_lea.vmem %s3, %s186
      $region24: #{_stem.2} parent=11 // pred_fallthru
        _
    $region12: #{_stem.2} parent=5 // pred_fallthru
      _
    %p188 = scmp.lt.s32.totalorder %s10, 2
    // Predicated region
    $region25: #{_stem.2} parent=5 // pred_check
      %p189 = pneg %p188
    $region26: #{_stem.2} parent=5 // pred_check_branch
      %191 = sbr.rel (%p189) target = $region28
    $region27: #{_stem.2} parent=5 // pred_region
      // Predicated region
      $region29: #{_stem.2} parent=27 // pred_check
        %p192 = pneg %p42
      $region30: #{_stem.2} parent=27 // pred_check_branch
        %194 = sbr.rel (%p192) target = $region32
      $region31: #{_stem.2} parent=27 // pred_region
        %s195 = smul.u32 64, %s17
        %p196 = scmp.lt.s32.totalorder %s195, 127
        %s197 = scalar_select %p196, %s195, 127
        %s198 = smul.addr %s197, 4
        %s199 = scalar_lea.vmem %s0, %s198
        %s200 = smul.u32 64, %s17
      $region32: #{_stem.2} parent=27 // pred_fallthru
        _
    $region28: #{_stem.2} parent=5 // pred_fallthru
      _
    %p201 = scmp.le.s32.totalorder 1, %s10
    %p202 = scmp.lt.s32.totalorder %s10, 3
    %p203 = pnand %p201, %p202
    %p204 = pneg %p203
    // Predicated region
    $region33: #{_stem.2} parent=5 // pred_check
      _
    $region34: #{_stem.2} parent=5 // pred_check_branch
      %206 = sbr.rel (%p203) target = $region36
    $region35: #{_stem.2} parent=5 // pred_region
      %s207 = ssub.s32 %s10, 1
      %s208 = smul.u32 64, %s19
      %p209 = scmp.lt.s32.totalorder %s208, 127
      %s210 = scalar_select %p209, %s208, 127
      %s211 = smul.addr %s210, 4
      %s212 = scalar_lea.vmem %s0, %s211
      %p213 = pneg %p48
      %p214 = pneg %p45
      %p215 = scmp.lt.s32.totalorder %s20, 0
      %s216 = scalar_select %p215, %s20, 0
      %s217 = smul.addr %s216, 8
      %s218 = scalar_lea.vmem %s1, %s217
      %p219 = pneg %p74
      %p220 = pneg %p71
      %p221 = scmp.lt.s32.totalorder %s20, 0
      %s222 = scalar_select %p221, %s20, 0
      %s223 = scalar_lea.vmem %s2, %s222
      %p224 = pneg %p100
      %p225 = pneg %p97
      %p226 = scmp.lt.s32.totalorder %s20, 0
      %s227 = scalar_select %p226, %s20, 0
      %s228 = scalar_lea.vmem %s3, %s227
      %p229 = pneg %p126
      %p230 = pneg %p123
      %p231 = pneg %p154
      %p232 = pneg %p151
      %s233 = smul.u32 64, %s19
      %p234 = scmp.lt.s32.totalorder %s233, 127
      %s235 = scalar_select %p234, %s233, 127
      %p236 = scmp.lt.s32.totalorder %s20, 0
      %s237 = scalar_select %p236, %s20, 0
      %s238 = sadd.s32 %s237, %s235
      %s239 = smul.addr %s238, 4
      %s240 = scalar_lea.vmem %s4, %s239
      %s241 = smul.u32 64, %s19
      %p242 = scmp.lt.s32.totalorder %s241, 127
      %s243 = scalar_select %p242, %s241, 127
      %s244 = smul.addr %s243, 4
      %s245 = scalar_lea.vmem %s0, %s244
      %s246 = smul.u32 64, %s19
      %p247 = scmp.lt.s32.totalorder %s20, 0
      %s248 = scalar_select %p247, %s20, 0
      %s249 = smul.addr %s248, 8
      %s250 = scalar_lea.vmem %s1, %s249
      %p251 = scmp.lt.s32.totalorder %s20, 0
      %s252 = scalar_select %p251, %s20, 0
      %s253 = scalar_lea.vmem %s2, %s252
      %p254 = scmp.lt.s32.totalorder %s20, 0
      %s255 = scalar_select %p254, %s20, 0
      %s256 = scalar_lea.vmem %s3, %s255
      %s257 = smul.u32 64, %s19
      %p258 = scmp.lt.s32.totalorder %s257, 127
      %s259 = scalar_select %p258, %s257, 127
      %p260 = scmp.lt.s32.totalorder %s20, 0
      %s261 = scalar_select %p260, %s20, 0
      %s262 = sadd.s32 %s261, %s259
      %s263 = smul.addr %s262, 4
      %s264 = scalar_lea.vmem %s4, %s263
      %s265 = smul.u32 64, %s19
      %v267 = vld [vmem:[%s245] sm:$0xf]
      %v268 = vld [vmem:[%s245 + $0x4] sm:$0xf]
      %v269 = vld [vmem:[%s245 + $0x8] sm:$0xf]
      %v270 = vld [vmem:[%s245 + $0xc] sm:$0xf]
      %v271 = vld [vmem:[%s245 + $0x10] sm:$0xf]
      %v272 = vld [vmem:[%s245 + $0x14] sm:$0xf]
      %v273 = vld [vmem:[%s245 + $0x18] sm:$0xf]
      %v274 = vld [vmem:[%s245 + $0x1c] sm:$0xf]
      %v275 = vld [vmem:[%s245 + $0x20] sm:$0xf]
      %v276 = vld [vmem:[%s245 + $0x24] sm:$0xf]
      %v277 = vld [vmem:[%s245 + $0x28] sm:$0xf]
      %v278 = vld [vmem:[%s245 + $0x2c] sm:$0xf]
      %v279 = vld [vmem:[%s245 + $0x30] sm:$0xf]
      %v280 = vld [vmem:[%s245 + $0x34] sm:$0xf]
      %v281 = vld [vmem:[%s245 + $0x38] sm:$0xf]
      %v282 = vld [vmem:[%s245 + $0x3c] sm:$0xf]
      %v283 = vld [vmem:[%s245 + $0x40] sm:$0xf]
      %v284 = vld [vmem:[%s245 + $0x44] sm:$0xf]
      %v285 = vld [vmem:[%s245 + $0x48] sm:$0xf]
      %v286 = vld [vmem:[%s245 + $0x4c] sm:$0xf]
      %v287 = vld [vmem:[%s245 + $0x50] sm:$0xf]
      %v288 = vld [vmem:[%s245 + $0x54] sm:$0xf]
      %v289 = vld [vmem:[%s245 + $0x58] sm:$0xf]
      %v290 = vld [vmem:[%s245 + $0x5c] sm:$0xf]
      %v291 = vld [vmem:[%s245 + $0x60] sm:$0xf]
      %v292 = vld [vmem:[%s245 + $0x64] sm:$0xf]
      %v293 = vld [vmem:[%s245 + $0x68] sm:$0xf]
      %v294 = vld [vmem:[%s245 + $0x6c] sm:$0xf]
      %v295 = vld [vmem:[%s245 + $0x70] sm:$0xf]
      %v296 = vld [vmem:[%s245 + $0x74] sm:$0xf]
      %v297 = vld [vmem:[%s245 + $0x78] sm:$0xf]
      %v298 = vld [vmem:[%s245 + $0x7c] sm:$0xf]
      %v299 = vld [vmem:[%s245 + $0x80] sm:$0xf]
      %v300 = vld [vmem:[%s245 + $0x84] sm:$0xf]
      %v301 = vld [vmem:[%s245 + $0x88] sm:$0xf]
      %v302 = vld [vmem:[%s245 + $0x8c] sm:$0xf]
      %v303 = vld [vmem:[%s245 + $0x90] sm:$0xf]
      %v304 = vld [vmem:[%s245 + $0x94] sm:$0xf]
      %v305 = vld [vmem:[%s245 + $0x98] sm:$0xf]
      %v306 = vld [vmem:[%s245 + $0x9c] sm:$0xf]
      %v307 = vld [vmem:[%s245 + $0xa0] sm:$0xf]
      %v308 = vld [vmem:[%s245 + $0xa4] sm:$0xf]
      %v309 = vld [vmem:[%s245 + $0xa8] sm:$0xf]
      %v310 = vld [vmem:[%s245 + $0xac] sm:$0xf]
      %v311 = vld [vmem:[%s245 + $0xb0] sm:$0xf]
      %v312 = vld [vmem:[%s245 + $0xb4] sm:$0xf]
      %v313 = vld [vmem:[%s245 + $0xb8] sm:$0xf]
      %v314 = vld [vmem:[%s245 + $0xbc] sm:$0xf]
      %v315 = vld [vmem:[%s245 + $0xc0] sm:$0xf]
      %v316 = vld [vmem:[%s245 + $0xc4] sm:$0xf]
      %v317 = vld [vmem:[%s245 + $0xc8] sm:$0xf]
      %v318 = vld [vmem:[%s245 + $0xcc] sm:$0xf]
      %v319 = vld [vmem:[%s245 + $0xd0] sm:$0xf]
      %v320 = vld [vmem:[%s245 + $0xd4] sm:$0xf]
      %v321 = vld [vmem:[%s245 + $0xd8] sm:$0xf]
      %v322 = vld [vmem:[%s245 + $0xdc] sm:$0xf]
      %v323 = vld [vmem:[%s245 + $0xe0] sm:$0xf]
      %v324 = vld [vmem:[%s245 + $0xe4] sm:$0xf]
      %v325 = vld [vmem:[%s245 + $0xe8] sm:$0xf]
      %v326 = vld [vmem:[%s245 + $0xec] sm:$0xf]
      %v327 = vld [vmem:[%s245 + $0xf0] sm:$0xf]
      %v328 = vld [vmem:[%s245 + $0xf4] sm:$0xf]
      %v329 = vld [vmem:[%s245 + $0xf8] sm:$0xf]
      %v330 = vld [vmem:[%s245 + $0xfc] sm:$0xf]
      %v331 = vld [vmem:[%s250] sm:$0xff]
      %v332 = vld [vmem:[%s250 + $0x8] sm:$0xff]
      %v333 = vld [vmem:[%s250 + $0x10] sm:$0xff]
      %v334 = vld [vmem:[%s250 + $0x18] sm:$0xff]
      %v335 = vunpack.c.l.s8.bf16 %v331
      %v336 = vunpack.c.h.s8.bf16 %v331
      %v337 = vunpack.c.l.s8.bf16 %v332
      %v338 = vunpack.c.h.s8.bf16 %v332
      %v339 = vunpack.c.l.s8.bf16 %v333
      %v340 = vunpack.c.h.s8.bf16 %v333
      %v341 = vunpack.c.l.s8.bf16 %v334
      %v342 = vunpack.c.h.s8.bf16 %v334
      %v407 = vunpack.c.l.b16 %v267
      %v408 = vunpack.c.l.b16 %v268
      %v409 = vunpack.c.l.b16 %v269
      %v410 = vunpack.c.l.b16 %v270
      %v411 = vunpack.c.l.b16 %v271
      %v412 = vunpack.c.l.b16 %v272
      %v413 = vunpack.c.l.b16 %v273
      %v414 = vunpack.c.l.b16 %v274
      %v415 = vunpack.c.l.b16 %v275
      %v416 = vunpack.c.l.b16 %v276
      %v417 = vunpack.c.l.b16 %v277
      %v418 = vunpack.c.l.b16 %v278
      %v419 = vunpack.c.l.b16 %v279
      %v420 = vunpack.c.l.b16 %v280
      %v421 = vunpack.c.l.b16 %v281
      %v422 = vunpack.c.l.b16 %v282
      %v423 = vunpack.c.l.b16 %v283
      %v424 = vunpack.c.l.b16 %v284
      %v425 = vunpack.c.l.b16 %v285
      %v426 = vunpack.c.l.b16 %v286
      %v427 = vunpack.c.l.b16 %v287
      %v428 = vunpack.c.l.b16 %v288
      %v429 = vunpack.c.l.b16 %v289
      %v430 = vunpack.c.l.b16 %v290
      %v431 = vunpack.c.l.b16 %v291
      %v432 = vunpack.c.l.b16 %v292
      %v433 = vunpack.c.l.b16 %v293
      %v434 = vunpack.c.l.b16 %v294
      %v435 = vunpack.c.l.b16 %v295
      %v436 = vunpack.c.l.b16 %v296
      %v437 = vunpack.c.l.b16 %v297
      %v438 = vunpack.c.l.b16 %v298
      %v439 = vunpack.c.l.b16 %v299
      %v440 = vunpack.c.l.b16 %v300
      %v441 = vunpack.c.l.b16 %v301
      %v442 = vunpack.c.l.b16 %v302
      %v443 = vunpack.c.l.b16 %v303
      %v444 = vunpack.c.l.b16 %v304
      %v445 = vunpack.c.l.b16 %v305
      %v446 = vunpack.c.l.b16 %v306
      %v447 = vunpack.c.l.b16 %v307
      %v448 = vunpack.c.l.b16 %v308
      %v449 = vunpack.c.l.b16 %v309
      %v450 = vunpack.c.l.b16 %v310
      %v451 = vunpack.c.l.b16 %v311
      %v452 = vunpack.c.l.b16 %v312
      %v453 = vunpack.c.l.b16 %v313
      %v454 = vunpack.c.l.b16 %v314
      %v455 = vunpack.c.l.b16 %v315
      %v456 = vunpack.c.l.b16 %v316
      %v457 = vunpack.c.l.b16 %v317
      %v458 = vunpack.c.l.b16 %v318
      %v459 = vunpack.c.l.b16 %v319
      %v460 = vunpack.c.l.b16 %v320
      %v461 = vunpack.c.l.b16 %v321
      %v462 = vunpack.c.l.b16 %v322
      %v463 = vunpack.c.l.b16 %v323
      %v464 = vunpack.c.l.b16 %v324
      %v465 = vunpack.c.l.b16 %v325
      %v466 = vunpack.c.l.b16 %v326
      %v467 = vunpack.c.l.b16 %v327
      %v468 = vunpack.c.l.b16 %v328
      %v469 = vunpack.c.l.b16 %v329
      %v470 = vunpack.c.l.b16 %v330
      %v471 = vpack.c.b16 %v408, %v407
      %v472 = vpack.c.b16 %v410, %v409
      %v473 = vpack.c.b16 %v412, %v411
      %v474 = vpack.c.b16 %v414, %v413
      %v475 = vpack.c.b16 %v416, %v415
      %v476 = vpack.c.b16 %v418, %v417
      %v477 = vpack.c.b16 %v420, %v419
      %v478 = vpack.c.b16 %v422, %v421
      %v479 = vpack.c.b16 %v424, %v423
      %v480 = vpack.c.b16 %v426, %v425
      %v481 = vpack.c.b16 %v428, %v427
      %v482 = vpack.c.b16 %v430, %v429
      %v483 = vpack.c.b16 %v432, %v431
      %v484 = vpack.c.b16 %v434, %v433
      %v485 = vpack.c.b16 %v436, %v435
      %v486 = vpack.c.b16 %v438, %v437
      %v487 = vpack.c.b16 %v440, %v439
      %v488 = vpack.c.b16 %v442, %v441
      %v489 = vpack.c.b16 %v444, %v443
      %v490 = vpack.c.b16 %v446, %v445
      %v491 = vpack.c.b16 %v448, %v447
      %v492 = vpack.c.b16 %v450, %v449
      %v493 = vpack.c.b16 %v452, %v451
      %v494 = vpack.c.b16 %v454, %v453
      %v495 = vpack.c.b16 %v456, %v455
      %v496 = vpack.c.b16 %v458, %v457
      %v497 = vpack.c.b16 %v460, %v459
      %v498 = vpack.c.b16 %v462, %v461
      %v499 = vpack.c.b16 %v464, %v463
      %v500 = vpack.c.b16 %v466, %v465
      %v501 = vpack.c.b16 %v468, %v467
      %v502 = vpack.c.b16 %v470, %v469
      %535 = vmatprep.subr.bf16.mxu0 0
      %536 = vmatpush1.bf16.msra.mxu0 %v335
      %537 = vmatprep.subr.bf16.mxu0 0
      %538 = vmatpush1.bf16.msra.mxu0 %v336
      %539 = vmatprep.subr.bf16.mxu0 0
      %540 = vmatpush1.bf16.msra.mxu0 %v337
      %541 = vmatprep.subr.bf16.mxu0 0
      %542 = vmatpush1.bf16.msra.mxu0 %v338
      %543 = vmatprep.subr.bf16.mxu0 0
      %544 = vmatpush1.bf16.msra.mxu0 %v339
      %545 = vmatprep.subr.bf16.mxu0 0
      %546 = vmatpush1.bf16.msra.mxu0 %v340
      %547 = vmatprep.subr.bf16.mxu0 0
      %548 = vmatpush1.bf16.msra.mxu0 %v341
      %549 = vmatprep.subr.bf16.mxu0 0
      %550 = vmatpush1.bf16.msra.mxu0 %v342
      %551 = vmatprep.subr.bf16.mxu0 0
      %552 = vmatpush1.bf16.msra.mxu0 0
      %553 = vmatprep.subr.bf16.mxu0 0
      %554 = vmatpush1.bf16.msra.mxu0 0
      %555 = vmatprep.subr.bf16.mxu0 0
      %556 = vmatpush1.bf16.msra.mxu0 0
      %557 = vmatprep.subr.bf16.mxu0 0
      %558 = vmatpush1.bf16.msra.mxu0 0
      %559 = vmatprep.subr.bf16.mxu0 0
      %560 = vmatpush1.bf16.msra.mxu0 0
      %561 = vmatprep.subr.bf16.mxu0 0
      %562 = vmatpush1.bf16.msra.mxu0 0
      %563 = vmatprep.subr.bf16.mxu0 0
      %564 = vmatpush1.bf16.msra.mxu0 0
      %565 = vmatprep.subr.bf16.mxu0 0
      %566 = vmatpush1.bf16.msra.mxu0 0
      %567 = vmatprep.mubr.bf16.mxu0 0
      %568 = vmatmul.mubr.bf16.gmra.mrb[0].mxu0 %v471
      %v569 = vpop.f32.mrb[0].mxu0
      %v570 = vadd.f32 0.0, %v569
      %v571 = vpop.f32.mrb[0].mxu0
      %v572 = vpop.f32.mrb[0].mxu0
      %v573 = vadd.f32 0.0, %v572
      %v574 = vpop.f32.mrb[0].mxu0
      %575 = vmatprep.mubr.bf16.mxu0 0
      %576 = vmatmul.mubr.bf16.gmra.mrb[0].mxu0 %v472
      %v577 = vpop.f32.mrb[0].mxu0
      %v578 = vadd.f32 0.0, %v577
      %v579 = vpop.f32.mrb[0].mxu0
      %v580 = vpop.f32.mrb[0].mxu0
      %v581 = vadd.f32 0.0, %v580
      %v582 = vpop.f32.mrb[0].mxu0
      %583 = vmatprep.mubr.bf16.mxu0 0
      %584 = vmatmul.mubr.bf16.gmra.mrb[0].mxu0 %v473
      %v585 = vpop.f32.mrb[0].mxu0
      %v586 = vadd.f32 0.0, %v585
      %v587 = vpop.f32.mrb[0].mxu0
      %v588 = vpop.f32.mrb[0].mxu0
      %v589 = vadd.f32 0.0, %v588
      %v590 = vpop.f32.mrb[0].mxu0
      %591 = vmatprep.mubr.bf16.mxu0 0
      %592 = vmatmul.mubr.bf16.gmra.mrb[0].mxu0 %v474
      %v593 = vpop.f32.mrb[0].mxu0
      %v594 = vadd.f32 0.0, %v593
      %v595 = vpop.f32.mrb[0].mxu0
      %v596 = vpop.f32.mrb[0].mxu0
      %v597 = vadd.f32 0.0, %v596
      %v598 = vpop.f32.mrb[0].mxu0
      %599 = vmatprep.mubr.bf16.mxu0 0
      %600 = vmatmul.mubr.bf16.gmra.mrb[0].mxu0 %v475
      %v601 = vpop.f32.mrb[0].mxu0
      %v602 = vadd.f32 0.0, %v601
      %v603 = vpop.f32.mrb[0].mxu0
      %v604 = vpop.f32.mrb[0].mxu0
      %v605 = vadd.f32 0.0, %v604
      %v606 = vpop.f32.mrb[0].mxu0
      %607 = vmatprep.mubr.bf16.mxu0 0
      %608 = vmatmul.mubr.bf16.gmra.mrb[0].mxu0 %v476
      %v609 = vpop.f32.mrb[0].mxu0
      %v610 = vadd.f32 0.0, %v609
      %v611 = vpop.f32.mrb[0].mxu0
      %v612 = vpop.f32.mrb[0].mxu0
      %v613 = vadd.f32 0.0, %v612
      %v614 = vpop.f32.mrb[0].mxu0
      %615 = vmatprep.mubr.bf16.mxu0 0
      %616 = vmatmul.mubr.bf16.gmra.mrb[0].mxu0 %v477
      %v617 = vpop.f32.mrb[0].mxu0
      %v618 = vadd.f32 0.0, %v617
      %v619 = vpop.f32.mrb[0].mxu0
      %v620 = vpop.f32.mrb[0].mxu0
      %v621 = vadd.f32 0.0, %v620
      %v622 = vpop.f32.mrb[0].mxu0
      %623 = vmatprep.mubr.bf16.mxu0 0
      %624 = vmatmul.mubr.bf16.gmra.mrb[0].mxu0 %v478
      %v625 = vpop.f32.mrb[0].mxu0
      %v626 = vadd.f32 0.0, %v625
      %v627 = vpop.f32.mrb[0].mxu0
      %v628 = vpop.f32.mrb[0].mxu0
      %v629 = vadd.f32 0.0, %v628
      %v630 = vpop.f32.mrb[0].mxu0
      %631 = vmatprep.mubr.bf16.mxu0 0
      %632 = vmatmul.mubr.bf16.gmra.mrb[0].mxu0 %v479
      %v633 = vpop.f32.mrb[0].mxu0
      %v634 = vadd.f32 0.0, %v633
      %v635 = vpop.f32.mrb[0].mxu0
      %v636 = vpop.f32.mrb[0].mxu0
      %v637 = vadd.f32 0.0, %v636
      %v638 = vpop.f32.mrb[0].mxu0
      %639 = vmatprep.mubr.bf16.mxu0 0
      %640 = vmatmul.mubr.bf16.gmra.mrb[0].mxu0 %v480
      %v641 = vpop.f32.mrb[0].mxu0
      %v642 = vadd.f32 0.0, %v641
      %v643 = vpop.f32.mrb[0].mxu0
      %v644 = vpop.f32.mrb[0].mxu0
      %v645 = vadd.f32 0.0, %v644
      %v646 = vpop.f32.mrb[0].mxu0
      %647 = vmatprep.mubr.bf16.mxu0 0
      %648 = vmatmul.mubr.bf16.gmra.mrb[0].mxu0 %v481
      %v649 = vpop.f32.mrb[0].mxu0
      %v650 = vadd.f32 0.0, %v649
      %v651 = vpop.f32.mrb[0].mxu0
      %v652 = vpop.f32.mrb[0].mxu0
      %v653 = vadd.f32 0.0, %v652
      %v654 = vpop.f32.mrb[0].mxu0
      %655 = vmatprep.mubr.bf16.mxu0 0
      %656 = vmatmul.mubr.bf16.gmra.mrb[0].mxu0 %v482
      %v657 = vpop.f32.mrb[0].mxu0
      %v658 = vadd.f32 0.0, %v657
      %v659 = vpop.f32.mrb[0].mxu0
      %v660 = vpop.f32.mrb[0].mxu0
      %v661 = vadd.f32 0.0, %v660
      %v662 = vpop.f32.mrb[0].mxu0
      %663 = vmatprep.mubr.bf16.mxu0 0
      %664 = vmatmul.mubr.bf16.gmra.mrb[0].mxu0 %v483
      %v665 = vpop.f32.mrb[0].mxu0
      %v666 = vadd.f32 0.0, %v665
      %v667 = vpop.f32.mrb[0].mxu0
      %v668 = vpop.f32.mrb[0].mxu0
      %v669 = vadd.f32 0.0, %v668
      %v670 = vpop.f32.mrb[0].mxu0
      %671 = vmatprep.mubr.bf16.mxu0 0
      %672 = vmatmul.mubr.bf16.gmra.mrb[0].mxu0 %v484
      %v673 = vpop.f32.mrb[0].mxu0
      %v674 = vadd.f32 0.0, %v673
      %v675 = vpop.f32.mrb[0].mxu0
      %v676 = vpop.f32.mrb[0].mxu0
      %v677 = vadd.f32 0.0, %v676
      %v678 = vpop.f32.mrb[0].mxu0
      %679 = vmatprep.mubr.bf16.mxu0 0
      %680 = vmatmul.mubr.bf16.gmra.mrb[0].mxu0 %v485
      %v681 = vpop.f32.mrb[0].mxu0
      %v682 = vadd.f32 0.0, %v681
      %v683 = vpop.f32.mrb[0].mxu0
      %v684 = vpop.f32.mrb[0].mxu0
      %v685 = vadd.f32 0.0, %v684
      %v686 = vpop.f32.mrb[0].mxu0
      %687 = vmatprep.mubr.bf16.mxu0 0
      %688 = vmatmul.mubr.bf16.gmra.mrb[0].mxu0 %v486
      %v689 = vpop.f32.mrb[0].mxu0
      %v690 = vadd.f32 0.0, %v689
      %v691 = vpop.f32.mrb[0].mxu0
      %v692 = vpop.f32.mrb[0].mxu0
      %v693 = vadd.f32 0.0, %v692
      %v694 = vpop.f32.mrb[0].mxu0
      %695 = vmatprep.mubr.bf16.mxu0 0
      %696 = vmatmul.mubr.bf16.gmra.mrb[0].mxu0 %v487
      %v697 = vpop.f32.mrb[0].mxu0
      %v698 = vadd.f32 0.0, %v697
      %v699 = vpop.f32.mrb[0].mxu0
      %v700 = vpop.f32.mrb[0].mxu0
      %v701 = vadd.f32 0.0, %v700
      %v702 = vpop.f32.mrb[0].mxu0
      %703 = vmatprep.mubr.bf16.mxu0 0
      %704 = vmatmul.mubr.bf16.gmra.mrb[0].mxu0 %v488
      %v705 = vpop.f32.mrb[0].mxu0
      %v706 = vadd.f32 0.0, %v705
      %v707 = vpop.f32.mrb[0].mxu0
      %v708 = vpop.f32.mrb[0].mxu0
      %v709 = vadd.f32 0.0, %v708
      %v710 = vpop.f32.mrb[0].mxu0
      %711 = vmatprep.mubr.bf16.mxu0 0
      %712 = vmatmul.mubr.bf16.gmra.mrb[0].mxu0 %v489
      %v713 = vpop.f32.mrb[0].mxu0
      %v714 = vadd.f32 0.0, %v713
      %v715 = vpop.f32.mrb[0].mxu0
      %v716 = vpop.f32.mrb[0].mxu0
      %v717 = vadd.f32 0.0, %v716
      %v718 = vpop.f32.mrb[0].mxu0
      %719 = vmatprep.mubr.bf16.mxu0 0
      %720 = vmatmul.mubr.bf16.gmra.mrb[0].mxu0 %v490
      %v721 = vpop.f32.mrb[0].mxu0
      %v722 = vadd.f32 0.0, %v721
      %v723 = vpop.f32.mrb[0].mxu0
      %v724 = vpop.f32.mrb[0].mxu0
      %v725 = vadd.f32 0.0, %v724
      %v726 = vpop.f32.mrb[0].mxu0
      %727 = vmatprep.mubr.bf16.mxu0 0
      %728 = vmatmul.mubr.bf16.gmra.mrb[0].mxu0 %v491
      %v729 = vpop.f32.mrb[0].mxu0
      %v730 = vadd.f32 0.0, %v729
      %v731 = vpop.f32.mrb[0].mxu0
      %v732 = vpop.f32.mrb[0].mxu0
      %v733 = vadd.f32 0.0, %v732
      %v734 = vpop.f32.mrb[0].mxu0
      %735 = vmatprep.mubr.bf16.mxu0 0
      %736 = vmatmul.mubr.bf16.gmra.mrb[0].mxu0 %v492
      %v737 = vpop.f32.mrb[0].mxu0
      %v738 = vadd.f32 0.0, %v737
      %v739 = vpop.f32.mrb[0].mxu0
      %v740 = vpop.f32.mrb[0].mxu0
      %v741 = vadd.f32 0.0, %v740
      %v742 = vpop.f32.mrb[0].mxu0
      %743 = vmatprep.mubr.bf16.mxu0 0
      %744 = vmatmul.mubr.bf16.gmra.mrb[0].mxu0 %v493
      %v745 = vpop.f32.mrb[0].mxu0
      %v746 = vadd.f32 0.0, %v745
      %v747 = vpop.f32.mrb[0].mxu0
      %v748 = vpop.f32.mrb[0].mxu0
      %v749 = vadd.f32 0.0, %v748
      %v750 = vpop.f32.mrb[0].mxu0
      %751 = vmatprep.mubr.bf16.mxu0 0
      %752 = vmatmul.mubr.bf16.gmra.mrb[0].mxu0 %v494
      %v753 = vpop.f32.mrb[0].mxu0
      %v754 = vadd.f32 0.0, %v753
      %v755 = vpop.f32.mrb[0].mxu0
      %v756 = vpop.f32.mrb[0].mxu0
      %v757 = vadd.f32 0.0, %v756
      %v758 = vpop.f32.mrb[0].mxu0
      %759 = vmatprep.mubr.bf16.mxu0 0
      %760 = vmatmul.mubr.bf16.gmra.mrb[0].mxu0 %v495
      %v761 = vpop.f32.mrb[0].mxu0
      %v762 = vadd.f32 0.0, %v761
      %v763 = vpop.f32.mrb[0].mxu0
      %v764 = vpop.f32.mrb[0].mxu0
      %v765 = vadd.f32 0.0, %v764
      %v766 = vpop.f32.mrb[0].mxu0
      %767 = vmatprep.mubr.bf16.mxu0 0
      %768 = vmatmul.mubr.bf16.gmra.mrb[0].mxu0 %v496
      %v769 = vpop.f32.mrb[0].mxu0
      %v770 = vadd.f32 0.0, %v769
      %v771 = vpop.f32.mrb[0].mxu0
      %v772 = vpop.f32.mrb[0].mxu0
      %v773 = vadd.f32 0.0, %v772
      %v774 = vpop.f32.mrb[0].mxu0
      %775 = vmatprep.mubr.bf16.mxu0 0
      %776 = vmatmul.mubr.bf16.gmra.mrb[0].mxu0 %v497
      %v777 = vpop.f32.mrb[0].mxu0
      %v778 = vadd.f32 0.0, %v777
      %v779 = vpop.f32.mrb[0].mxu0
      %v780 = vpop.f32.mrb[0].mxu0
      %v781 = vadd.f32 0.0, %v780
      %v782 = vpop.f32.mrb[0].mxu0
      %783 = vmatprep.mubr.bf16.mxu0 0
      %784 = vmatmul.mubr.bf16.gmra.mrb[0].mxu0 %v498
      %v785 = vpop.f32.mrb[0].mxu0
      %v786 = vadd.f32 0.0, %v785
      %v787 = vpop.f32.mrb[0].mxu0
      %v788 = vpop.f32.mrb[0].mxu0
      %v789 = vadd.f32 0.0, %v788
      %v790 = vpop.f32.mrb[0].mxu0
      %791 = vmatprep.mubr.bf16.mxu0 0
      %792 = vmatmul.mubr.bf16.gmra.mrb[0].mxu0 %v499
      %v793 = vpop.f32.mrb[0].mxu0
      %v794 = vadd.f32 0.0, %v793
      %v795 = vpop.f32.mrb[0].mxu0
      %v796 = vpop.f32.mrb[0].mxu0
      %v797 = vadd.f32 0.0, %v796
      %v798 = vpop.f32.mrb[0].mxu0
      %799 = vmatprep.mubr.bf16.mxu0 0
      %800 = vmatmul.mubr.bf16.gmra.mrb[0].mxu0 %v500
      %v801 = vpop.f32.mrb[0].mxu0
      %v802 = vadd.f32 0.0, %v801
      %v803 = vpop.f32.mrb[0].mxu0
      %v804 = vpop.f32.mrb[0].mxu0
      %v805 = vadd.f32 0.0, %v804
      %v806 = vpop.f32.mrb[0].mxu0
      %807 = vmatprep.mubr.bf16.mxu0 0
      %808 = vmatmul.mubr.bf16.gmra.mrb[0].mxu0 %v501
      %v809 = vpop.f32.mrb[0].mxu0
      %v810 = vadd.f32 0.0, %v809
      %v811 = vpop.f32.mrb[0].mxu0
      %v812 = vpop.f32.mrb[0].mxu0
      %v813 = vadd.f32 0.0, %v812
      %v814 = vpop.f32.mrb[0].mxu0
      %815 = vmatprep.mubr.bf16.mxu0 0
      %816 = vmatmul.mubr.bf16.gmra.mrb[0].mxu0 %v502
      %v817 = vpop.f32.mrb[0].mxu0
      %v818 = vadd.f32 0.0, %v817
      %v819 = vpop.f32.mrb[0].mxu0
      %v820 = vpop.f32.mrb[0].mxu0
      %v821 = vadd.f32 0.0, %v820
      %v822 = vpop.f32.mrb[0].mxu0
      %823 = vdwg.mxu0
      %v824 = vld [vmem:[%s253] sm:$0x1]
      %v826 = vlaneseq
      %v827 = vshrl.u32 %v826, 7
      %v828 = vsub.s32 0, %v827
      %v829 = vrot.slane %v824, %v828
      %v831 = vmul.f32 %v570, %v829
      %v832 = vmul.f32 %v573, %v829
      %v833 = vmul.f32 %v578, %v829
      %v834 = vmul.f32 %v581, %v829
      %v835 = vmul.f32 %v586, %v829
      %v836 = vmul.f32 %v589, %v829
      %v837 = vmul.f32 %v594, %v829
      %v838 = vmul.f32 %v597, %v829
      %v839 = vmul.f32 %v602, %v829
      %v840 = vmul.f32 %v605, %v829
      %v841 = vmul.f32 %v610, %v829
      %v842 = vmul.f32 %v613, %v829
      %v843 = vmul.f32 %v618, %v829
      %v844 = vmul.f32 %v621, %v829
      %v845 = vmul.f32 %v626, %v829
      %v846 = vmul.f32 %v629, %v829
      %v847 = vmul.f32 %v634, %v829
      %v848 = vmul.f32 %v637, %v829
      %v849 = vmul.f32 %v642, %v829
      %v850 = vmul.f32 %v645, %v829
      %v851 = vmul.f32 %v650, %v829
      %v852 = vmul.f32 %v653, %v829
      %v853 = vmul.f32 %v658, %v829
      %v854 = vmul.f32 %v661, %v829
      %v855 = vmul.f32 %v666, %v829
      %v856 = vmul.f32 %v669, %v829
      %v857 = vmul.f32 %v674, %v829
      %v858 = vmul.f32 %v677, %v829
      %v859 = vmul.f32 %v682, %v829
      %v860 = vmul.f32 %v685, %v829
      %v861 = vmul.f32 %v690, %v829
      %v862 = vmul.f32 %v693, %v829
      %v863 = vmul.f32 %v698, %v829
      %v864 = vmul.f32 %v701, %v829
      %v865 = vmul.f32 %v706, %v829
      %v866 = vmul.f32 %v709, %v829
      %v867 = vmul.f32 %v714, %v829
      %v868 = vmul.f32 %v717, %v829
      %v869 = vmul.f32 %v722, %v829
      %v870 = vmul.f32 %v725, %v829
      %v871 = vmul.f32 %v730, %v829
      %v872 = vmul.f32 %v733, %v829
      %v873 = vmul.f32 %v738, %v829
      %v874 = vmul.f32 %v741, %v829
      %v875 = vmul.f32 %v746, %v829
      %v876 = vmul.f32 %v749, %v829
      %v877 = vmul.f32 %v754, %v829
      %v878 = vmul.f32 %v757, %v829
      %v879 = vmul.f32 %v762, %v829
      %v880 = vmul.f32 %v765, %v829
      %v881 = vmul.f32 %v770, %v829
      %v882 = vmul.f32 %v773, %v829
      %v883 = vmul.f32 %v778, %v829
      %v884 = vmul.f32 %v781, %v829
      %v885 = vmul.f32 %v786, %v829
      %v886 = vmul.f32 %v789, %v829
      %v887 = vmul.f32 %v794, %v829
      %v888 = vmul.f32 %v797, %v829
      %v889 = vmul.f32 %v802, %v829
      %v890 = vmul.f32 %v805, %v829
      %v891 = vmul.f32 %v810, %v829
      %v892 = vmul.f32 %v813, %v829
      %v893 = vmul.f32 %v818, %v829
      %v894 = vmul.f32 %v821, %v829
      %v895 = vld [vmem:[%s256] sm:$0x1]
      %v897 = vlaneseq
      %v898 = vshrl.u32 %v897, 7
      %v899 = vsub.s32 0, %v898
      %v900 = vrot.slane %v895, %v899
      %v902 = vadd.f32 %v831, %v900
      %v903 = vadd.f32 %v832, %v900
      %v904 = vadd.f32 %v833, %v900
      %v905 = vadd.f32 %v834, %v900
      %v906 = vadd.f32 %v835, %v900
      %v907 = vadd.f32 %v836, %v900
      %v908 = vadd.f32 %v837, %v900
      %v909 = vadd.f32 %v838, %v900
      %v910 = vadd.f32 %v839, %v900
      %v911 = vadd.f32 %v840, %v900
      %v912 = vadd.f32 %v841, %v900
      %v913 = vadd.f32 %v842, %v900
      %v914 = vadd.f32 %v843, %v900
      %v915 = vadd.f32 %v844, %v900
      %v916 = vadd.f32 %v845, %v900
      %v917 = vadd.f32 %v846, %v900
      %v918 = vadd.f32 %v847, %v900
      %v919 = vadd.f32 %v848, %v900
      %v920 = vadd.f32 %v849, %v900
      %v921 = vadd.f32 %v850, %v900
      %v922 = vadd.f32 %v851, %v900
      %v923 = vadd.f32 %v852, %v900
      %v924 = vadd.f32 %v853, %v900
      %v925 = vadd.f32 %v854, %v900
      %v926 = vadd.f32 %v855, %v900
      %v927 = vadd.f32 %v856, %v900
      %v928 = vadd.f32 %v857, %v900
      %v929 = vadd.f32 %v858, %v900
      %v930 = vadd.f32 %v859, %v900
      %v931 = vadd.f32 %v860, %v900
      %v932 = vadd.f32 %v861, %v900
      %v933 = vadd.f32 %v862, %v900
      %v934 = vadd.f32 %v863, %v900
      %v935 = vadd.f32 %v864, %v900
      %v936 = vadd.f32 %v865, %v900
      %v937 = vadd.f32 %v866, %v900
      %v938 = vadd.f32 %v867, %v900
      %v939 = vadd.f32 %v868, %v900
      %v940 = vadd.f32 %v869, %v900
      %v941 = vadd.f32 %v870, %v900
      %v942 = vadd.f32 %v871, %v900
      %v943 = vadd.f32 %v872, %v900
      %v944 = vadd.f32 %v873, %v900
      %v945 = vadd.f32 %v874, %v900
      %v946 = vadd.f32 %v875, %v900
      %v947 = vadd.f32 %v876, %v900
      %v948 = vadd.f32 %v877, %v900
      %v949 = vadd.f32 %v878, %v900
      %v950 = vadd.f32 %v879, %v900
      %v951 = vadd.f32 %v880, %v900
      %v952 = vadd.f32 %v881, %v900
      %v953 = vadd.f32 %v882, %v900
      %v954 = vadd.f32 %v883, %v900
      %v955 = vadd.f32 %v884, %v900
      %v956 = vadd.f32 %v885, %v900
      %v957 = vadd.f32 %v886, %v900
      %v958 = vadd.f32 %v887, %v900
      %v959 = vadd.f32 %v888, %v900
      %v960 = vadd.f32 %v889, %v900
      %v961 = vadd.f32 %v890, %v900
      %v962 = vadd.f32 %v891, %v900
      %v963 = vadd.f32 %v892, %v900
      %v964 = vadd.f32 %v893, %v900
      %v965 = vadd.f32 %v894, %v900
      %v966 = vmax.f32 %v902, 0.0
      %v967 = vmax.f32 %v903, 0.0
      %v968 = vmax.f32 %v904, 0.0
      %v969 = vmax.f32 %v905, 0.0
      %v970 = vmax.f32 %v906, 0.0
      %v971 = vmax.f32 %v907, 0.0
      %v972 = vmax.f32 %v908, 0.0
      %v973 = vmax.f32 %v909, 0.0
      %v974 = vmax.f32 %v910, 0.0
      %v975 = vmax.f32 %v911, 0.0
      %v976 = vmax.f32 %v912, 0.0
      %v977 = vmax.f32 %v913, 0.0
      %v978 = vmax.f32 %v914, 0.0
      %v979 = vmax.f32 %v915, 0.0
      %v980 = vmax.f32 %v916, 0.0
      %v981 = vmax.f32 %v917, 0.0
      %v982 = vmax.f32 %v918, 0.0
      %v983 = vmax.f32 %v919, 0.0
      %v984 = vmax.f32 %v920, 0.0
      %v985 = vmax.f32 %v921, 0.0
      %v986 = vmax.f32 %v922, 0.0
      %v987 = vmax.f32 %v923, 0.0
      %v988 = vmax.f32 %v924, 0.0
      %v989 = vmax.f32 %v925, 0.0
      %v990 = vmax.f32 %v926, 0.0
      %v991 = vmax.f32 %v927, 0.0
      %v992 = vmax.f32 %v928, 0.0
      %v993 = vmax.f32 %v929, 0.0
      %v994 = vmax.f32 %v930, 0.0
      %v995 = vmax.f32 %v931, 0.0
      %v996 = vmax.f32 %v932, 0.0
      %v997 = vmax.f32 %v933, 0.0
      %v998 = vmax.f32 %v934, 0.0
      %v999 = vmax.f32 %v935, 0.0
      %v1000 = vmax.f32 %v936, 0.0
      %v1001 = vmax.f32 %v937, 0.0
      %v1002 = vmax.f32 %v938, 0.0
      %v1003 = vmax.f32 %v939, 0.0
      %v1004 = vmax.f32 %v940, 0.0
      %v1005 = vmax.f32 %v941, 0.0
      %v1006 = vmax.f32 %v942, 0.0
      %v1007 = vmax.f32 %v943, 0.0
      %v1008 = vmax.f32 %v944, 0.0
      %v1009 = vmax.f32 %v945, 0.0
      %v1010 = vmax.f32 %v946, 0.0
      %v1011 = vmax.f32 %v947, 0.0
      %v1012 = vmax.f32 %v948, 0.0
      %v1013 = vmax.f32 %v949, 0.0
      %v1014 = vmax.f32 %v950, 0.0
      %v1015 = vmax.f32 %v951, 0.0
      %v1016 = vmax.f32 %v952, 0.0
      %v1017 = vmax.f32 %v953, 0.0
      %v1018 = vmax.f32 %v954, 0.0
      %v1019 = vmax.f32 %v955, 0.0
      %v1020 = vmax.f32 %v956, 0.0
      %v1021 = vmax.f32 %v957, 0.0
      %v1022 = vmax.f32 %v958, 0.0
      %v1023 = vmax.f32 %v959, 0.0
      %v1024 = vmax.f32 %v960, 0.0
      %v1025 = vmax.f32 %v961, 0.0
      %v1026 = vmax.f32 %v962, 0.0
      %v1027 = vmax.f32 %v963, 0.0
      %v1028 = vmax.f32 %v964, 0.0
      %v1029 = vmax.f32 %v965, 0.0
      %v1030 = vpack.c.bf16 %v967, %v966
      %v1031 = vpack.c.bf16 %v969, %v968
      %v1032 = vpack.c.bf16 %v971, %v970
      %v1033 = vpack.c.bf16 %v973, %v972
      %v1034 = vpack.c.bf16 %v975, %v974
      %v1035 = vpack.c.bf16 %v977, %v976
      %v1036 = vpack.c.bf16 %v979, %v978
      %v1037 = vpack.c.bf16 %v981, %v980
      %v1038 = vpack.c.bf16 %v983, %v982
      %v1039 = vpack.c.bf16 %v985, %v984
      %v1040 = vpack.c.bf16 %v987, %v986
      %v1041 = vpack.c.bf16 %v989, %v988
      %v1042 = vpack.c.bf16 %v991, %v990
      %v1043 = vpack.c.bf16 %v993, %v992
      %v1044 = vpack.c.bf16 %v995, %v994
      %v1045 = vpack.c.bf16 %v997, %v996
      %v1046 = vpack.c.bf16 %v999, %v998
      %v1047 = vpack.c.bf16 %v1001, %v1000
      %v1048 = vpack.c.bf16 %v1003, %v1002
      %v1049 = vpack.c.bf16 %v1005, %v1004
      %v1050 = vpack.c.bf16 %v1007, %v1006
      %v1051 = vpack.c.bf16 %v1009, %v1008
      %v1052 = vpack.c.bf16 %v1011, %v1010
      %v1053 = vpack.c.bf16 %v1013, %v1012
      %v1054 = vpack.c.bf16 %v1015, %v1014
      %v1055 = vpack.c.bf16 %v1017, %v1016
      %v1056 = vpack.c.bf16 %v1019, %v1018
      %v1057 = vpack.c.bf16 %v1021, %v1020
      %v1058 = vpack.c.bf16 %v1023, %v1022
      %v1059 = vpack.c.bf16 %v1025, %v1024
      %v1060 = vpack.c.bf16 %v1027, %v1026
      %v1061 = vpack.c.bf16 %v1029, %v1028
      %v1094 = vunpack.c.l.b16 %v1030
      %v1095 = vunpack.c.h.b16 %v1030
      %v1096 = vunpack.c.l.b16 %v1031
      %v1097 = vunpack.c.h.b16 %v1031
      %v1098 = vunpack.c.l.b16 %v1032
      %v1099 = vunpack.c.h.b16 %v1032
      %v1100 = vunpack.c.l.b16 %v1033
      %v1101 = vunpack.c.h.b16 %v1033
      %v1102 = vunpack.c.l.b16 %v1034
      %v1103 = vunpack.c.h.b16 %v1034
      %v1104 = vunpack.c.l.b16 %v1035
      %v1105 = vunpack.c.h.b16 %v1035
      %v1106 = vunpack.c.l.b16 %v1036
      %v1107 = vunpack.c.h.b16 %v1036
      %v1108 = vunpack.c.l.b16 %v1037
      %v1109 = vunpack.c.h.b16 %v1037
      %v1110 = vunpack.c.l.b16 %v1038
      %v1111 = vunpack.c.h.b16 %v1038
      %v1112 = vunpack.c.l.b16 %v1039
      %v1113 = vunpack.c.h.b16 %v1039
      %v1114 = vunpack.c.l.b16 %v1040
      %v1115 = vunpack.c.h.b16 %v1040
      %v1116 = vunpack.c.l.b16 %v1041
      %v1117 = vunpack.c.h.b16 %v1041
      %v1118 = vunpack.c.l.b16 %v1042
      %v1119 = vunpack.c.h.b16 %v1042
      %v1120 = vunpack.c.l.b16 %v1043
      %v1121 = vunpack.c.h.b16 %v1043
      %v1122 = vunpack.c.l.b16 %v1044
      %v1123 = vunpack.c.h.b16 %v1044
      %v1124 = vunpack.c.l.b16 %v1045
      %v1125 = vunpack.c.h.b16 %v1045
      %v1126 = vunpack.c.l.b16 %v1046
      %v1127 = vunpack.c.h.b16 %v1046
      %v1128 = vunpack.c.l.b16 %v1047
      %v1129 = vunpack.c.h.b16 %v1047
      %v1130 = vunpack.c.l.b16 %v1048
      %v1131 = vunpack.c.h.b16 %v1048
      %v1132 = vunpack.c.l.b16 %v1049
      %v1133 = vunpack.c.h.b16 %v1049
      %v1134 = vunpack.c.l.b16 %v1050
      %v1135 = vunpack.c.h.b16 %v1050
      %v1136 = vunpack.c.l.b16 %v1051
      %v1137 = vunpack.c.h.b16 %v1051
      %v1138 = vunpack.c.l.b16 %v1052
      %v1139 = vunpack.c.h.b16 %v1052
      %v1140 = vunpack.c.l.b16 %v1053
      %v1141 = vunpack.c.h.b16 %v1053
      %v1142 = vunpack.c.l.b16 %v1054
      %v1143 = vunpack.c.h.b16 %v1054
      %v1144 = vunpack.c.l.b16 %v1055
      %v1145 = vunpack.c.h.b16 %v1055
      %v1146 = vunpack.c.l.b16 %v1056
      %v1147 = vunpack.c.h.b16 %v1056
      %v1148 = vunpack.c.l.b16 %v1057
      %v1149 = vunpack.c.h.b16 %v1057
      %v1150 = vunpack.c.l.b16 %v1058
      %v1151 = vunpack.c.h.b16 %v1058
      %v1152 = vunpack.c.l.b16 %v1059
      %v1153 = vunpack.c.h.b16 %v1059
      %v1154 = vunpack.c.l.b16 %v1060
      %v1155 = vunpack.c.h.b16 %v1060
      %v1156 = vunpack.c.l.b16 %v1061
      %v1157 = vunpack.c.h.b16 %v1061
      %v1158 = vpack.c.b16 %v1094, %v1094
      %v1159 = vpack.c.b16 %v1095, %v1095
      %v1160 = vpack.c.b16 %v1096, %v1096
      %v1161 = vpack.c.b16 %v1097, %v1097
      %v1162 = vpack.c.b16 %v1098, %v1098
      %v1163 = vpack.c.b16 %v1099, %v1099
      %v1164 = vpack.c.b16 %v1100, %v1100
      %v1165 = vpack.c.b16 %v1101, %v1101
      %v1166 = vpack.c.b16 %v1102, %v1102
      %v1167 = vpack.c.b16 %v1103, %v1103
      %v1168 = vpack.c.b16 %v1104, %v1104
      %v1169 = vpack.c.b16 %v1105, %v1105
      %v1170 = vpack.c.b16 %v1106, %v1106
      %v1171 = vpack.c.b16 %v1107, %v1107
      %v1172 = vpack.c.b16 %v1108, %v1108
      %v1173 = vpack.c.b16 %v1109, %v1109
      %v1174 = vpack.c.b16 %v1110, %v1110
      %v1175 = vpack.c.b16 %v1111, %v1111
      %v1176 = vpack.c.b16 %v1112, %v1112
      %v1177 = vpack.c.b16 %v1113, %v1113
      %v1178 = vpack.c.b16 %v1114, %v1114
      %v1179 = vpack.c.b16 %v1115, %v1115
      %v1180 = vpack.c.b16 %v1116, %v1116
      %v1181 = vpack.c.b16 %v1117, %v1117
      %v1182 = vpack.c.b16 %v1118, %v1118
      %v1183 = vpack.c.b16 %v1119, %v1119
      %v1184 = vpack.c.b16 %v1120, %v1120
      %v1185 = vpack.c.b16 %v1121, %v1121
      %v1186 = vpack.c.b16 %v1122, %v1122
      %v1187 = vpack.c.b16 %v1123, %v1123
      %v1188 = vpack.c.b16 %v1124, %v1124
      %v1189 = vpack.c.b16 %v1125, %v1125
      %v1190 = vpack.c.b16 %v1126, %v1126
      %v1191 = vpack.c.b16 %v1127, %v1127
      %v1192 = vpack.c.b16 %v1128, %v1128
      %v1193 = vpack.c.b16 %v1129, %v1129
      %v1194 = vpack.c.b16 %v1130, %v1130
      %v1195 = vpack.c.b16 %v1131, %v1131
      %v1196 = vpack.c.b16 %v1132, %v1132
      %v1197 = vpack.c.b16 %v1133, %v1133
      %v1198 = vpack.c.b16 %v1134, %v1134
      %v1199 = vpack.c.b16 %v1135, %v1135
      %v1200 = vpack.c.b16 %v1136, %v1136
      %v1201 = vpack.c.b16 %v1137, %v1137
      %v1202 = vpack.c.b16 %v1138, %v1138
      %v1203 = vpack.c.b16 %v1139, %v1139
      %v1204 = vpack.c.b16 %v1140, %v1140
      %v1205 = vpack.c.b16 %v1141, %v1141
      %v1206 = vpack.c.b16 %v1142, %v1142
      %v1207 = vpack.c.b16 %v1143, %v1143
      %v1208 = vpack.c.b16 %v1144, %v1144
      %v1209 = vpack.c.b16 %v1145, %v1145
      %v1210 = vpack.c.b16 %v1146, %v1146
      %v1211 = vpack.c.b16 %v1147, %v1147
      %v1212 = vpack.c.b16 %v1148, %v1148
      %v1213 = vpack.c.b16 %v1149, %v1149
      %v1214 = vpack.c.b16 %v1150, %v1150
      %v1215 = vpack.c.b16 %v1151, %v1151
      %v1216 = vpack.c.b16 %v1152, %v1152
      %v1217 = vpack.c.b16 %v1153, %v1153
      %v1218 = vpack.c.b16 %v1154, %v1154
      %v1219 = vpack.c.b16 %v1155, %v1155
      %v1220 = vpack.c.b16 %v1156, %v1156
      %v1221 = vpack.c.b16 %v1157, %v1157
      %1286 = vst [vmem:[%s264] sm:$0xf] %v1158
      %1287 = vst [vmem:[%s264 + $0x4] sm:$0xf] %v1159
      %1288 = vst [vmem:[%s264 + $0x8] sm:$0xf] %v1160
      %1289 = vst [vmem:[%s264 + $0xc] sm:$0xf] %v1161
      %1290 = vst [vmem:[%s264 + $0x10] sm:$0xf] %v1162
      %1291 = vst [vmem:[%s264 + $0x14] sm:$0xf] %v1163
      %1292 = vst [vmem:[%s264 + $0x18] sm:$0xf] %v1164
      %1293 = vst [vmem:[%s264 + $0x1c] sm:$0xf] %v1165
      %1294 = vst [vmem:[%s264 + $0x20] sm:$0xf] %v1166
      %1295 = vst [vmem:[%s264 + $0x24] sm:$0xf] %v1167
      %1296 = vst [vmem:[%s264 + $0x28] sm:$0xf] %v1168
      %1297 = vst [vmem:[%s264 + $0x2c] sm:$0xf] %v1169
      %1298 = vst [vmem:[%s264 + $0x30] sm:$0xf] %v1170
      %1299 = vst [vmem:[%s264 + $0x34] sm:$0xf] %v1171
      %1300 = vst [vmem:[%s264 + $0x38] sm:$0xf] %v1172
      %1301 = vst [vmem:[%s264 + $0x3c] sm:$0xf] %v1173
      %1302 = vst [vmem:[%s264 + $0x40] sm:$0xf] %v1174
      %1303 = vst [vmem:[%s264 + $0x44] sm:$0xf] %v1175
      %1304 = vst [vmem:[%s264 + $0x48] sm:$0xf] %v1176
      %1305 = vst [vmem:[%s264 + $0x4c] sm:$0xf] %v1177
      %1306 = vst [vmem:[%s264 + $0x50] sm:$0xf] %v1178
      %1307 = vst [vmem:[%s264 + $0x54] sm:$0xf] %v1179
      %1308 = vst [vmem:[%s264 + $0x58] sm:$0xf] %v1180
      %1309 = vst [vmem:[%s264 + $0x5c] sm:$0xf] %v1181
      %1310 = vst [vmem:[%s264 + $0x60] sm:$0xf] %v1182
      %1311 = vst [vmem:[%s264 + $0x64] sm:$0xf] %v1183
      %1312 = vst [vmem:[%s264 + $0x68] sm:$0xf] %v1184
      %1313 = vst [vmem:[%s264 + $0x6c] sm:$0xf] %v1185
      %1314 = vst [vmem:[%s264 + $0x70] sm:$0xf] %v1186
      %1315 = vst [vmem:[%s264 + $0x74] sm:$0xf] %v1187
      %1316 = vst [vmem:[%s264 + $0x78] sm:$0xf] %v1188
      %1317 = vst [vmem:[%s264 + $0x7c] sm:$0xf] %v1189
      %1318 = vst [vmem:[%s264 + $0x80] sm:$0xf] %v1190
      %1319 = vst [vmem:[%s264 + $0x84] sm:$0xf] %v1191
      %1320 = vst [vmem:[%s264 + $0x88] sm:$0xf] %v1192
      %1321 = vst [vmem:[%s264 + $0x8c] sm:$0xf] %v1193
      %1322 = vst [vmem:[%s264 + $0x90] sm:$0xf] %v1194
      %1323 = vst [vmem:[%s264 + $0x94] sm:$0xf] %v1195
      %1324 = vst [vmem:[%s264 + $0x98] sm:$0xf] %v1196
      %1325 = vst [vmem:[%s264 + $0x9c] sm:$0xf] %v1197
      %1326 = vst [vmem:[%s264 + $0xa0] sm:$0xf] %v1198
      %1327 = vst [vmem:[%s264 + $0xa4] sm:$0xf] %v1199
      %1328 = vst [vmem:[%s264 + $0xa8] sm:$0xf] %v1200
      %1329 = vst [vmem:[%s264 + $0xac] sm:$0xf] %v1201
      %1330 = vst [vmem:[%s264 + $0xb0] sm:$0xf] %v1202
      %1331 = vst [vmem:[%s264 + $0xb4] sm:$0xf] %v1203
      %1332 = vst [vmem:[%s264 + $0xb8] sm:$0xf] %v1204
      %1333 = vst [vmem:[%s264 + $0xbc] sm:$0xf] %v1205
      %1334 = vst [vmem:[%s264 + $0xc0] sm:$0xf] %v1206
      %1335 = vst [vmem:[%s264 + $0xc4] sm:$0xf] %v1207
      %1336 = vst [vmem:[%s264 + $0xc8] sm:$0xf] %v1208
      %1337 = vst [vmem:[%s264 + $0xcc] sm:$0xf] %v1209
      %1338 = vst [vmem:[%s264 + $0xd0] sm:$0xf] %v1210
      %1339 = vst [vmem:[%s264 + $0xd4] sm:$0xf] %v1211
      %1340 = vst [vmem:[%s264 + $0xd8] sm:$0xf] %v1212
      %1341 = vst [vmem:[%s264 + $0xdc] sm:$0xf] %v1213
      %1342 = vst [vmem:[%s264 + $0xe0] sm:$0xf] %v1214
      %1343 = vst [vmem:[%s264 + $0xe4] sm:$0xf] %v1215
      %1344 = vst [vmem:[%s264 + $0xe8] sm:$0xf] %v1216
      %1345 = vst [vmem:[%s264 + $0xec] sm:$0xf] %v1217
      %1346 = vst [vmem:[%s264 + $0xf0] sm:$0xf] %v1218
      %1347 = vst [vmem:[%s264 + $0xf4] sm:$0xf] %v1219
      %1348 = vst [vmem:[%s264 + $0xf8] sm:$0xf] %v1220
      %1349 = vst [vmem:[%s264 + $0xfc] sm:$0xf] %v1221
      %s1350 = smul.u32 64, %s19
      %p1351 = scmp.lt.s32.totalorder %s1350, 127
      %s1352 = scalar_select %p1351, %s1350, 127
      %p1353 = scmp.lt.s32.totalorder %s20, 0
      %s1354 = scalar_select %p1353, %s20, 0
      %s1355 = sadd.s32 %s1354, %s1352
      %s1356 = smul.addr %s1355, 4
      %s1357 = scalar_lea.vmem %s4, %s1356
      // Predicated region
      $region37: #{_stem.2} parent=35 // pred_check
        %p1358 = pneg %p151
      $region38: #{_stem.2} parent=35 // pred_check_branch
        %1360 = sbr.rel (%p1358) target = $region40
      $region39: #{_stem.2} parent=35 // pred_region
        %s1361 = smul.u32 64, %s19
      $region40: #{_stem.2} parent=35 // pred_fallthru
        _
    $region36: #{_stem.2} parent=5 // pred_fallthru
      _
    %p1362 = scmp.le.s32.totalorder 2, %s10
    // Predicated region
    $region41: #{_stem.2} parent=5 // pred_check
      %p1363 = pneg %p1362
    $region42: #{_stem.2} parent=5 // pred_check_branch
      %1365 = sbr.rel (%p1363) target = $region44
    $region43: #{_stem.2} parent=5 // pred_region
      %s1366 = ssub.s32 %s10, 2
      // Predicated region
      $region45: #{_stem.2} parent=43 // pred_check
        %p1367 = pneg %p157
      $region46: #{_stem.2} parent=43 // pred_check_branch
        %1369 = sbr.rel (%p1367) target = $region48
      $region47: #{_stem.2} parent=43 // pred_region
        %s1370 = smul.u32 64, %s21
        %p1371 = scmp.lt.s32.totalorder %s1370, 127
        %s1372 = scalar_select %p1371, %s1370, 127
        %p1373 = scmp.lt.s32.totalorder %s22, 0
        %s1374 = scalar_select %p1373, %s22, 0
        %s1375 = sadd.s32 %s1374, %s1372
        %s1376 = smul.addr %s1375, 4
        %s1377 = scalar_lea.vmem %s4, %s1376
      $region48: #{_stem.2} parent=43 // pred_fallthru
        _
    $region44: #{_stem.2} parent=5 // pred_fallthru
      _
  $region6: #{_stem.2} parent=0 // loop_footer
    %s14 = sadd.s32 1, %s10
  $region7: #{_stem.2} parent=0 // loop_footer_branch
    %9 = sbr.rel target = $region3
  $region8: #{_stem.2} parent=0 // loop_exit
    _

// kernel: _stem.3
$region0: #{_stem.3}
  #allocation0 [shape = 'u32[]', space=smem, size = 0x4, offset = 0x4, fixed_abs, tag = 'smem constant byte address 0x4 - core index']
  #allocation1 [shape = 'u32[144,128]{1,0:T(1,128)}', space=vmem, size = 0x12000, scoped, tag = 'internal scratch']
  %s0 = inlined_call_operand.vmem [shape: bf16[9,16384], index: 0, kind: input, shape index: {}]
  %s1 = inlined_call_operand.vmem [shape: bf16[1,16384], index: 1, kind: output, shape index: {}]
  %s2 = sld [smem:[#allocation0]]
  $region14: #{_stem.3} parent=0
    _
  %s4 = ssub.s32 1, %s2
  %s5 = scalar_select 0, %s4, %s2
  // Predicated region
  $region2: #{_stem.3} parent=0 // pred_check
    _
  $region3: #{_stem.3} parent=0 // pred_check_branch
    %7 = sbr.rel (0) target = $region5
  $region4: #{_stem.3} parent=0 // pred_region
    _
  $region5: #{_stem.3} parent=0 // pred_fallthru
    _
  %v9 = vld [vmem:[%s0] sm:$0xff]
  %v10 = vld [vmem:[%s0 + $0x8] sm:$0xff]
  %v11 = vld [vmem:[%s0 + $0x10] sm:$0xff]
  %v12 = vld [vmem:[%s0 + $0x18] sm:$0xff]
  %v13 = vld [vmem:[%s0 + $0x20] sm:$0xff]
  %v14 = vld [vmem:[%s0 + $0x28] sm:$0xff]
  %v15 = vld [vmem:[%s0 + $0x30] sm:$0xff]
  %v16 = vld [vmem:[%s0 + $0x38] sm:$0xff]
  %v17 = vld [vmem:[%s0 + $0x40] sm:$0xff]
  %v18 = vld [vmem:[%s0 + $0x48] sm:$0xff]
  %v19 = vld [vmem:[%s0 + $0x50] sm:$0xff]
  %v20 = vld [vmem:[%s0 + $0x58] sm:$0xff]
  %v21 = vld [vmem:[%s0 + $0x60] sm:$0xff]
  %v22 = vld [vmem:[%s0 + $0x68] sm:$0xff]
  %v23 = vld [vmem:[%s0 + $0x70] sm:$0xff]
  %v24 = vld [vmem:[%s0 + $0x78] sm:$0xff]
  %v25 = vld [vmem:[%s0 + $0x80] sm:$0xff]
  %v26 = vld [vmem:[%s0 + $0x88] sm:$0xff]
  %v27 = vld [vmem:[%s0 + $0x90] sm:$0xff]
  %v28 = vld [vmem:[%s0 + $0x98] sm:$0xff]
  %v29 = vld [vmem:[%s0 + $0xa0] sm:$0xff]
  %v30 = vld [vmem:[%s0 + $0xa8] sm:$0xff]
  %v31 = vld [vmem:[%s0 + $0xb0] sm:$0xff]
  %v32 = vld [vmem:[%s0 + $0xb8] sm:$0xff]
  %v33 = vld [vmem:[%s0 + $0xc0] sm:$0xff]
  %v34 = vld [vmem:[%s0 + $0xc8] sm:$0xff]
  %v35 = vld [vmem:[%s0 + $0xd0] sm:$0xff]
  %v36 = vld [vmem:[%s0 + $0xd8] sm:$0xff]
  %v37 = vld [vmem:[%s0 + $0xe0] sm:$0xff]
  %v38 = vld [vmem:[%s0 + $0xe8] sm:$0xff]
  %v39 = vld [vmem:[%s0 + $0xf0] sm:$0xff]
  %v40 = vld [vmem:[%s0 + $0xf8] sm:$0xff]
  %v41 = vld [vmem:[%s0 + $0x100] sm:$0xff]
  %v42 = vld [vmem:[%s0 + $0x108] sm:$0xff]
  %v43 = vld [vmem:[%s0 + $0x110] sm:$0xff]
  %v44 = vld [vmem:[%s0 + $0x118] sm:$0xff]
  %v45 = vld [vmem:[%s0 + $0x120] sm:$0xff]
  %v46 = vld [vmem:[%s0 + $0x128] sm:$0xff]
  %v47 = vld [vmem:[%s0 + $0x130] sm:$0xff]
  %v48 = vld [vmem:[%s0 + $0x138] sm:$0xff]
  %v49 = vld [vmem:[%s0 + $0x140] sm:$0xff]
  %v50 = vld [vmem:[%s0 + $0x148] sm:$0xff]
  %v51 = vld [vmem:[%s0 + $0x150] sm:$0xff]
  %v52 = vld [vmem:[%s0 + $0x158] sm:$0xff]
  %v53 = vld [vmem:[%s0 + $0x160] sm:$0xff]
  %v54 = vld [vmem:[%s0 + $0x168] sm:$0xff]
  %v55 = vld [vmem:[%s0 + $0x170] sm:$0xff]
  %v56 = vld [vmem:[%s0 + $0x178] sm:$0xff]
  %v57 = vld [vmem:[%s0 + $0x180] sm:$0xff]
  %v58 = vld [vmem:[%s0 + $0x188] sm:$0xff]
  %v59 = vld [vmem:[%s0 + $0x190] sm:$0xff]
  %v60 = vld [vmem:[%s0 + $0x198] sm:$0xff]
  %v61 = vld [vmem:[%s0 + $0x1a0] sm:$0xff]
  %v62 = vld [vmem:[%s0 + $0x1a8] sm:$0xff]
  %v63 = vld [vmem:[%s0 + $0x1b0] sm:$0xff]
  %v64 = vld [vmem:[%s0 + $0x1b8] sm:$0xff]
  %v65 = vld [vmem:[%s0 + $0x1c0] sm:$0xff]
  %v66 = vld [vmem:[%s0 + $0x1c8] sm:$0xff]
  %v67 = vld [vmem:[%s0 + $0x1d0] sm:$0xff]
  %v68 = vld [vmem:[%s0 + $0x1d8] sm:$0xff]
  %v69 = vld [vmem:[%s0 + $0x1e0] sm:$0xff]
  %v70 = vld [vmem:[%s0 + $0x1e8] sm:$0xff]
  %v71 = vld [vmem:[%s0 + $0x1f0] sm:$0xff]
  %v72 = vld [vmem:[%s0 + $0x1f8] sm:$0xff]
  %v73 = vld [vmem:[%s0 + $0x200] sm:$0x11]
  %v74 = vld [vmem:[%s0 + $0x208] sm:$0x11]
  %v75 = vld [vmem:[%s0 + $0x210] sm:$0x11]
  %v76 = vld [vmem:[%s0 + $0x218] sm:$0x11]
  %v77 = vld [vmem:[%s0 + $0x220] sm:$0x11]
  %v78 = vld [vmem:[%s0 + $0x228] sm:$0x11]
  %v79 = vld [vmem:[%s0 + $0x230] sm:$0x11]
  %v80 = vld [vmem:[%s0 + $0x238] sm:$0x11]
  %v81 = vld [vmem:[%s0 + $0x240] sm:$0x11]
  %v82 = vld [vmem:[%s0 + $0x248] sm:$0x11]
  %v83 = vld [vmem:[%s0 + $0x250] sm:$0x11]
  %v84 = vld [vmem:[%s0 + $0x258] sm:$0x11]
  %v85 = vld [vmem:[%s0 + $0x260] sm:$0x11]
  %v86 = vld [vmem:[%s0 + $0x268] sm:$0x11]
  %v87 = vld [vmem:[%s0 + $0x270] sm:$0x11]
  %v88 = vld [vmem:[%s0 + $0x278] sm:$0x11]
  %v89 = vld [vmem:[%s0 + $0x280] sm:$0x11]
  %v90 = vld [vmem:[%s0 + $0x288] sm:$0x11]
  %v91 = vld [vmem:[%s0 + $0x290] sm:$0x11]
  %v92 = vld [vmem:[%s0 + $0x298] sm:$0x11]
  %v93 = vld [vmem:[%s0 + $0x2a0] sm:$0x11]
  %v94 = vld [vmem:[%s0 + $0x2a8] sm:$0x11]
  %v95 = vld [vmem:[%s0 + $0x2b0] sm:$0x11]
  %v96 = vld [vmem:[%s0 + $0x2b8] sm:$0x11]
  %v97 = vld [vmem:[%s0 + $0x2c0] sm:$0x11]
  %v98 = vld [vmem:[%s0 + $0x2c8] sm:$0x11]
  %v99 = vld [vmem:[%s0 + $0x2d0] sm:$0x11]
  %v100 = vld [vmem:[%s0 + $0x2d8] sm:$0x11]
  %v101 = vld [vmem:[%s0 + $0x2e0] sm:$0x11]
  %v102 = vld [vmem:[%s0 + $0x2e8] sm:$0x11]
  %v103 = vld [vmem:[%s0 + $0x2f0] sm:$0x11]
  %v104 = vld [vmem:[%s0 + $0x2f8] sm:$0x11]
  %v105 = vld [vmem:[%s0 + $0x300] sm:$0x11]
  %v106 = vld [vmem:[%s0 + $0x308] sm:$0x11]
  %v107 = vld [vmem:[%s0 + $0x310] sm:$0x11]
  %v108 = vld [vmem:[%s0 + $0x318] sm:$0x11]
  %v109 = vld [vmem:[%s0 + $0x320] sm:$0x11]
  %v110 = vld [vmem:[%s0 + $0x328] sm:$0x11]
  %v111 = vld [vmem:[%s0 + $0x330] sm:$0x11]
  %v112 = vld [vmem:[%s0 + $0x338] sm:$0x11]
  %v113 = vld [vmem:[%s0 + $0x340] sm:$0x11]
  %v114 = vld [vmem:[%s0 + $0x348] sm:$0x11]
  %v115 = vld [vmem:[%s0 + $0x350] sm:$0x11]
  %v116 = vld [vmem:[%s0 + $0x358] sm:$0x11]
  %v117 = vld [vmem:[%s0 + $0x360] sm:$0x11]
  %v118 = vld [vmem:[%s0 + $0x368] sm:$0x11]
  %v119 = vld [vmem:[%s0 + $0x370] sm:$0x11]
  %v120 = vld [vmem:[%s0 + $0x378] sm:$0x11]
  %v121 = vld [vmem:[%s0 + $0x380] sm:$0x11]
  %v122 = vld [vmem:[%s0 + $0x388] sm:$0x11]
  %v123 = vld [vmem:[%s0 + $0x390] sm:$0x11]
  %v124 = vld [vmem:[%s0 + $0x398] sm:$0x11]
  %v125 = vld [vmem:[%s0 + $0x3a0] sm:$0x11]
  %v126 = vld [vmem:[%s0 + $0x3a8] sm:$0x11]
  %v127 = vld [vmem:[%s0 + $0x3b0] sm:$0x11]
  %v128 = vld [vmem:[%s0 + $0x3b8] sm:$0x11]
  %v129 = vld [vmem:[%s0 + $0x3c0] sm:$0x11]
  %v130 = vld [vmem:[%s0 + $0x3c8] sm:$0x11]
  %v131 = vld [vmem:[%s0 + $0x3d0] sm:$0x11]
  %v132 = vld [vmem:[%s0 + $0x3d8] sm:$0x11]
  %v133 = vld [vmem:[%s0 + $0x3e0] sm:$0x11]
  %v134 = vld [vmem:[%s0 + $0x3e8] sm:$0x11]
  %v135 = vld [vmem:[%s0 + $0x3f0] sm:$0x11]
  %v136 = vld [vmem:[%s0 + $0x3f8] sm:$0x11]
  %v265 = vunpack.c.l.b16 %v9
  %v266 = vunpack.c.h.b16 %v9
  %v267 = vunpack.c.l.b16 %v10
  %v268 = vunpack.c.h.b16 %v10
  %v269 = vunpack.c.l.b16 %v11
  %v270 = vunpack.c.h.b16 %v11
  %v271 = vunpack.c.l.b16 %v12
  %v272 = vunpack.c.h.b16 %v12
  %v273 = vunpack.c.l.b16 %v13
  %v274 = vunpack.c.h.b16 %v13
  %v275 = vunpack.c.l.b16 %v14
  %v276 = vunpack.c.h.b16 %v14
  %v277 = vunpack.c.l.b16 %v15
  %v278 = vunpack.c.h.b16 %v15
  %v279 = vunpack.c.l.b16 %v16
  %v280 = vunpack.c.h.b16 %v16
  %v281 = vunpack.c.l.b16 %v17
  %v282 = vunpack.c.h.b16 %v17
  %v283 = vunpack.c.l.b16 %v18
  %v284 = vunpack.c.h.b16 %v18
  %v285 = vunpack.c.l.b16 %v19
  %v286 = vunpack.c.h.b16 %v19
  %v287 = vunpack.c.l.b16 %v20
  %v288 = vunpack.c.h.b16 %v20
  %v289 = vunpack.c.l.b16 %v21
  %v290 = vunpack.c.h.b16 %v21
  %v291 = vunpack.c.l.b16 %v22
  %v292 = vunpack.c.h.b16 %v22
  %v293 = vunpack.c.l.b16 %v23
  %v294 = vunpack.c.h.b16 %v23
  %v295 = vunpack.c.l.b16 %v24
  %v296 = vunpack.c.h.b16 %v24
  %v297 = vunpack.c.l.b16 %v25
  %v298 = vunpack.c.h.b16 %v25
  %v299 = vunpack.c.l.b16 %v26
  %v300 = vunpack.c.h.b16 %v26
  %v301 = vunpack.c.l.b16 %v27
  %v302 = vunpack.c.h.b16 %v27
  %v303 = vunpack.c.l.b16 %v28
  %v304 = vunpack.c.h.b16 %v28
  %v305 = vunpack.c.l.b16 %v29
  %v306 = vunpack.c.h.b16 %v29
  %v307 = vunpack.c.l.b16 %v30
  %v308 = vunpack.c.h.b16 %v30
  %v309 = vunpack.c.l.b16 %v31
  %v310 = vunpack.c.h.b16 %v31
  %v311 = vunpack.c.l.b16 %v32
  %v312 = vunpack.c.h.b16 %v32
  %v313 = vunpack.c.l.b16 %v33
  %v314 = vunpack.c.h.b16 %v33
  %v315 = vunpack.c.l.b16 %v34
  %v316 = vunpack.c.h.b16 %v34
  %v317 = vunpack.c.l.b16 %v35
  %v318 = vunpack.c.h.b16 %v35
  %v319 = vunpack.c.l.b16 %v36
  %v320 = vunpack.c.h.b16 %v36
  %v321 = vunpack.c.l.b16 %v37
  %v322 = vunpack.c.h.b16 %v37
  %v323 = vunpack.c.l.b16 %v38
  %v324 = vunpack.c.h.b16 %v38
  %v325 = vunpack.c.l.b16 %v39
  %v326 = vunpack.c.h.b16 %v39
  %v327 = vunpack.c.l.b16 %v40
  %v328 = vunpack.c.h.b16 %v40
  %v329 = vunpack.c.l.b16 %v41
  %v330 = vunpack.c.h.b16 %v41
  %v331 = vunpack.c.l.b16 %v42
  %v332 = vunpack.c.h.b16 %v42
  %v333 = vunpack.c.l.b16 %v43
  %v334 = vunpack.c.h.b16 %v43
  %v335 = vunpack.c.l.b16 %v44
  %v336 = vunpack.c.h.b16 %v44
  %v337 = vunpack.c.l.b16 %v45
  %v338 = vunpack.c.h.b16 %v45
  %v339 = vunpack.c.l.b16 %v46
  %v340 = vunpack.c.h.b16 %v46
  %v341 = vunpack.c.l.b16 %v47
  %v342 = vunpack.c.h.b16 %v47
  %v343 = vunpack.c.l.b16 %v48
  %v344 = vunpack.c.h.b16 %v48
  %v345 = vunpack.c.l.b16 %v49
  %v346 = vunpack.c.h.b16 %v49
  %v347 = vunpack.c.l.b16 %v50
  %v348 = vunpack.c.h.b16 %v50
  %v349 = vunpack.c.l.b16 %v51
  %v350 = vunpack.c.h.b16 %v51
  %v351 = vunpack.c.l.b16 %v52
  %v352 = vunpack.c.h.b16 %v52
  %v353 = vunpack.c.l.b16 %v53
  %v354 = vunpack.c.h.b16 %v53
  %v355 = vunpack.c.l.b16 %v54
  %v356 = vunpack.c.h.b16 %v54
  %v357 = vunpack.c.l.b16 %v55
  %v358 = vunpack.c.h.b16 %v55
  %v359 = vunpack.c.l.b16 %v56
  %v360 = vunpack.c.h.b16 %v56
  %v361 = vunpack.c.l.b16 %v57
  %v362 = vunpack.c.h.b16 %v57
  %v363 = vunpack.c.l.b16 %v58
  %v364 = vunpack.c.h.b16 %v58
  %v365 = vunpack.c.l.b16 %v59
  %v366 = vunpack.c.h.b16 %v59
  %v367 = vunpack.c.l.b16 %v60
  %v368 = vunpack.c.h.b16 %v60
  %v369 = vunpack.c.l.b16 %v61
  %v370 = vunpack.c.h.b16 %v61
  %v371 = vunpack.c.l.b16 %v62
  %v372 = vunpack.c.h.b16 %v62
  %v373 = vunpack.c.l.b16 %v63
  %v374 = vunpack.c.h.b16 %v63
  %v375 = vunpack.c.l.b16 %v64
  %v376 = vunpack.c.h.b16 %v64
  %v377 = vunpack.c.l.b16 %v65
  %v378 = vunpack.c.h.b16 %v65
  %v379 = vunpack.c.l.b16 %v66
  %v380 = vunpack.c.h.b16 %v66
  %v381 = vunpack.c.l.b16 %v67
  %v382 = vunpack.c.h.b16 %v67
  %v383 = vunpack.c.l.b16 %v68
  %v384 = vunpack.c.h.b16 %v68
  %v385 = vunpack.c.l.b16 %v69
  %v386 = vunpack.c.h.b16 %v69
  %v387 = vunpack.c.l.b16 %v70
  %v388 = vunpack.c.h.b16 %v70
  %v389 = vunpack.c.l.b16 %v71
  %v390 = vunpack.c.h.b16 %v71
  %v391 = vunpack.c.l.b16 %v72
  %v392 = vunpack.c.h.b16 %v72
  %v393 = vunpack.c.l.b16 %v73
  %v394 = vunpack.c.h.b16 %v73
  %v395 = vunpack.c.l.b16 %v74
  %v396 = vunpack.c.h.b16 %v74
  %v397 = vunpack.c.l.b16 %v75
  %v398 = vunpack.c.h.b16 %v75
  %v399 = vunpack.c.l.b16 %v76
  %v400 = vunpack.c.h.b16 %v76
  %v401 = vunpack.c.l.b16 %v77
  %v402 = vunpack.c.h.b16 %v77
  %v403 = vunpack.c.l.b16 %v78
  %v404 = vunpack.c.h.b16 %v78
  %v405 = vunpack.c.l.b16 %v79
  %v406 = vunpack.c.h.b16 %v79
  %v407 = vunpack.c.l.b16 %v80
  %v408 = vunpack.c.h.b16 %v80
  %v409 = vunpack.c.l.b16 %v81
  %v410 = vunpack.c.h.b16 %v81
  %v411 = vunpack.c.l.b16 %v82
  %v412 = vunpack.c.h.b16 %v82
  %v413 = vunpack.c.l.b16 %v83
  %v414 = vunpack.c.h.b16 %v83
  %v415 = vunpack.c.l.b16 %v84
  %v416 = vunpack.c.h.b16 %v84
  %v417 = vunpack.c.l.b16 %v85
  %v418 = vunpack.c.h.b16 %v85
  %v419 = vunpack.c.l.b16 %v86
  %v420 = vunpack.c.h.b16 %v86
  %v421 = vunpack.c.l.b16 %v87
  %v422 = vunpack.c.h.b16 %v87
  %v423 = vunpack.c.l.b16 %v88
  %v424 = vunpack.c.h.b16 %v88
  %v425 = vunpack.c.l.b16 %v89
  %v426 = vunpack.c.h.b16 %v89
  %v427 = vunpack.c.l.b16 %v90
  %v428 = vunpack.c.h.b16 %v90
  %v429 = vunpack.c.l.b16 %v91
  %v430 = vunpack.c.h.b16 %v91
  %v431 = vunpack.c.l.b16 %v92
  %v432 = vunpack.c.h.b16 %v92
  %v433 = vunpack.c.l.b16 %v93
  %v434 = vunpack.c.h.b16 %v93
  %v435 = vunpack.c.l.b16 %v94
  %v436 = vunpack.c.h.b16 %v94
  %v437 = vunpack.c.l.b16 %v95
  %v438 = vunpack.c.h.b16 %v95
  %v439 = vunpack.c.l.b16 %v96
  %v440 = vunpack.c.h.b16 %v96
  %v441 = vunpack.c.l.b16 %v97
  %v442 = vunpack.c.h.b16 %v97
  %v443 = vunpack.c.l.b16 %v98
  %v444 = vunpack.c.h.b16 %v98
  %v445 = vunpack.c.l.b16 %v99
  %v446 = vunpack.c.h.b16 %v99
  %v447 = vunpack.c.l.b16 %v100
  %v448 = vunpack.c.h.b16 %v100
  %v449 = vunpack.c.l.b16 %v101
  %v450 = vunpack.c.h.b16 %v101
  %v451 = vunpack.c.l.b16 %v102
  %v452 = vunpack.c.h.b16 %v102
  %v453 = vunpack.c.l.b16 %v103
  %v454 = vunpack.c.h.b16 %v103
  %v455 = vunpack.c.l.b16 %v104
  %v456 = vunpack.c.h.b16 %v104
  %v457 = vunpack.c.l.b16 %v105
  %v458 = vunpack.c.h.b16 %v105
  %v459 = vunpack.c.l.b16 %v106
  %v460 = vunpack.c.h.b16 %v106
  %v461 = vunpack.c.l.b16 %v107
  %v462 = vunpack.c.h.b16 %v107
  %v463 = vunpack.c.l.b16 %v108
  %v464 = vunpack.c.h.b16 %v108
  %v465 = vunpack.c.l.b16 %v109
  %v466 = vunpack.c.h.b16 %v109
  %v467 = vunpack.c.l.b16 %v110
  %v468 = vunpack.c.h.b16 %v110
  %v469 = vunpack.c.l.b16 %v111
  %v470 = vunpack.c.h.b16 %v111
  %v471 = vunpack.c.l.b16 %v112
  %v472 = vunpack.c.h.b16 %v112
  %v473 = vunpack.c.l.b16 %v113
  %v474 = vunpack.c.h.b16 %v113
  %v475 = vunpack.c.l.b16 %v114
  %v476 = vunpack.c.h.b16 %v114
  %v477 = vunpack.c.l.b16 %v115
  %v478 = vunpack.c.h.b16 %v115
  %v479 = vunpack.c.l.b16 %v116
  %v480 = vunpack.c.h.b16 %v116
  %v481 = vunpack.c.l.b16 %v117
  %v482 = vunpack.c.h.b16 %v117
  %v483 = vunpack.c.l.b16 %v118
  %v484 = vunpack.c.h.b16 %v118
  %v485 = vunpack.c.l.b16 %v119
  %v486 = vunpack.c.h.b16 %v119
  %v487 = vunpack.c.l.b16 %v120
  %v488 = vunpack.c.h.b16 %v120
  %v489 = vunpack.c.l.b16 %v121
  %v490 = vunpack.c.h.b16 %v121
  %v491 = vunpack.c.l.b16 %v122
  %v492 = vunpack.c.h.b16 %v122
  %v493 = vunpack.c.l.b16 %v123
  %v494 = vunpack.c.h.b16 %v123
  %v495 = vunpack.c.l.b16 %v124
  %v496 = vunpack.c.h.b16 %v124
  %v497 = vunpack.c.l.b16 %v125
  %v498 = vunpack.c.h.b16 %v125
  %v499 = vunpack.c.l.b16 %v126
  %v500 = vunpack.c.h.b16 %v126
  %v501 = vunpack.c.l.b16 %v127
  %v502 = vunpack.c.h.b16 %v127
  %v503 = vunpack.c.l.b16 %v128
  %v504 = vunpack.c.h.b16 %v128
  %v505 = vunpack.c.l.b16 %v129
  %v506 = vunpack.c.h.b16 %v129
  %v507 = vunpack.c.l.b16 %v130
  %v508 = vunpack.c.h.b16 %v130
  %v509 = vunpack.c.l.b16 %v131
  %v510 = vunpack.c.h.b16 %v131
  %v511 = vunpack.c.l.b16 %v132
  %v512 = vunpack.c.h.b16 %v132
  %v513 = vunpack.c.l.b16 %v133
  %v514 = vunpack.c.h.b16 %v133
  %v515 = vunpack.c.l.b16 %v134
  %v516 = vunpack.c.h.b16 %v134
  %v517 = vunpack.c.l.b16 %v135
  %v518 = vunpack.c.h.b16 %v135
  %v519 = vunpack.c.l.b16 %v136
  %v520 = vunpack.c.h.b16 %v136
  %v521 = vpack.c.b16 %v393, %v265
  %v522 = vpack.c.b16 %v394, %v266
  %v523 = vpack.c.b16 %v395, %v267
  %v524 = vpack.c.b16 %v396, %v268
  %v525 = vpack.c.b16 %v397, %v269
  %v526 = vpack.c.b16 %v398, %v270
  %v527 = vpack.c.b16 %v399, %v271
  %v528 = vpack.c.b16 %v400, %v272
  %v529 = vpack.c.b16 %v401, %v273
  %v530 = vpack.c.b16 %v402, %v274
  %v531 = vpack.c.b16 %v403, %v275
  %v532 = vpack.c.b16 %v404, %v276
  %v533 = vpack.c.b16 %v405, %v277
  %v534 = vpack.c.b16 %v406, %v278
  %v535 = vpack.c.b16 %v407, %v279
  %v536 = vpack.c.b16 %v408, %v280
  %v537 = vpack.c.b16 %v409, %v281
  %v538 = vpack.c.b16 %v410, %v282
  %v539 = vpack.c.b16 %v411, %v283
  %v540 = vpack.c.b16 %v412, %v284
  %v541 = vpack.c.b16 %v413, %v285
  %v542 = vpack.c.b16 %v414, %v286
  %v543 = vpack.c.b16 %v415, %v287
  %v544 = vpack.c.b16 %v416, %v288
  %v545 = vpack.c.b16 %v417, %v289
  %v546 = vpack.c.b16 %v418, %v290
  %v547 = vpack.c.b16 %v419, %v291
  %v548 = vpack.c.b16 %v420, %v292
  %v549 = vpack.c.b16 %v421, %v293
  %v550 = vpack.c.b16 %v422, %v294
  %v551 = vpack.c.b16 %v423, %v295
  %v552 = vpack.c.b16 %v424, %v296
  %v553 = vpack.c.b16 %v425, %v297
  %v554 = vpack.c.b16 %v426, %v298
  %v555 = vpack.c.b16 %v427, %v299
  %v556 = vpack.c.b16 %v428, %v300
  %v557 = vpack.c.b16 %v429, %v301
  %v558 = vpack.c.b16 %v430, %v302
  %v559 = vpack.c.b16 %v431, %v303
  %v560 = vpack.c.b16 %v432, %v304
  %v561 = vpack.c.b16 %v433, %v305
  %v562 = vpack.c.b16 %v434, %v306
  %v563 = vpack.c.b16 %v435, %v307
  %v564 = vpack.c.b16 %v436, %v308
  %v565 = vpack.c.b16 %v437, %v309
  %v566 = vpack.c.b16 %v438, %v310
  %v567 = vpack.c.b16 %v439, %v311
  %v568 = vpack.c.b16 %v440, %v312
  %v569 = vpack.c.b16 %v441, %v313
  %v570 = vpack.c.b16 %v442, %v314
  %v571 = vpack.c.b16 %v443, %v315
  %v572 = vpack.c.b16 %v444, %v316
  %v573 = vpack.c.b16 %v445, %v317
  %v574 = vpack.c.b16 %v446, %v318
  %v575 = vpack.c.b16 %v447, %v319
  %v576 = vpack.c.b16 %v448, %v320
  %v577 = vpack.c.b16 %v449, %v321
  %v578 = vpack.c.b16 %v450, %v322
  %v579 = vpack.c.b16 %v451, %v323
  %v580 = vpack.c.b16 %v452, %v324
  %v581 = vpack.c.b16 %v453, %v325
  %v582 = vpack.c.b16 %v454, %v326
  %v583 = vpack.c.b16 %v455, %v327
  %v584 = vpack.c.b16 %v456, %v328
  %v585 = vpack.c.b16 %v457, %v329
  %v586 = vpack.c.b16 %v458, %v330
  %v587 = vpack.c.b16 %v459, %v331
  %v588 = vpack.c.b16 %v460, %v332
  %v589 = vpack.c.b16 %v461, %v333
  %v590 = vpack.c.b16 %v462, %v334
  %v591 = vpack.c.b16 %v463, %v335
  %v592 = vpack.c.b16 %v464, %v336
  %v593 = vpack.c.b16 %v465, %v337
  %v594 = vpack.c.b16 %v466, %v338
  %v595 = vpack.c.b16 %v467, %v339
  %v596 = vpack.c.b16 %v468, %v340
  %v597 = vpack.c.b16 %v469, %v341
  %v598 = vpack.c.b16 %v470, %v342
  %v599 = vpack.c.b16 %v471, %v343
  %v600 = vpack.c.b16 %v472, %v344
  %v601 = vpack.c.b16 %v473, %v345
  %v602 = vpack.c.b16 %v474, %v346
  %v603 = vpack.c.b16 %v475, %v347
  %v604 = vpack.c.b16 %v476, %v348
  %v605 = vpack.c.b16 %v477, %v349
  %v606 = vpack.c.b16 %v478, %v350
  %v607 = vpack.c.b16 %v479, %v351
  %v608 = vpack.c.b16 %v480, %v352
  %v609 = vpack.c.b16 %v481, %v353
  %v610 = vpack.c.b16 %v482, %v354
  %v611 = vpack.c.b16 %v483, %v355
  %v612 = vpack.c.b16 %v484, %v356
  %v613 = vpack.c.b16 %v485, %v357
  %v614 = vpack.c.b16 %v486, %v358
  %v615 = vpack.c.b16 %v487, %v359
  %v616 = vpack.c.b16 %v488, %v360
  %v617 = vpack.c.b16 %v489, %v361
  %v618 = vpack.c.b16 %v490, %v362
  %v619 = vpack.c.b16 %v491, %v363
  %v620 = vpack.c.b16 %v492, %v364
  %v621 = vpack.c.b16 %v493, %v365
  %v622 = vpack.c.b16 %v494, %v366
  %v623 = vpack.c.b16 %v495, %v367
  %v624 = vpack.c.b16 %v496, %v368
  %v625 = vpack.c.b16 %v497, %v369
  %v626 = vpack.c.b16 %v498, %v370
  %v627 = vpack.c.b16 %v499, %v371
  %v628 = vpack.c.b16 %v500, %v372
  %v629 = vpack.c.b16 %v501, %v373
  %v630 = vpack.c.b16 %v502, %v374
  %v631 = vpack.c.b16 %v503, %v375
  %v632 = vpack.c.b16 %v504, %v376
  %v633 = vpack.c.b16 %v505, %v377
  %v634 = vpack.c.b16 %v506, %v378
  %v635 = vpack.c.b16 %v507, %v379
  %v636 = vpack.c.b16 %v508, %v380
  %v637 = vpack.c.b16 %v509, %v381
  %v638 = vpack.c.b16 %v510, %v382
  %v639 = vpack.c.b16 %v511, %v383
  %v640 = vpack.c.b16 %v512, %v384
  %v641 = vpack.c.b16 %v513, %v385
  %v642 = vpack.c.b16 %v514, %v386
  %v643 = vpack.c.b16 %v515, %v387
  %v644 = vpack.c.b16 %v516, %v388
  %v645 = vpack.c.b16 %v517, %v389
  %v646 = vpack.c.b16 %v518, %v390
  %v647 = vpack.c.b16 %v519, %v391
  %v648 = vpack.c.b16 %v520, %v392
  %vm777 = vcmask 1044480
  %vm778 = vsmask.f32 4352
  %vm779 = vmand %vm777, %vm778
  %v780 = vsel %vm779, %v521, 4286644096
  %v781 = vunpack.i.l.bf16 %v780
  %v782 = vunpack.i.h.bf16 %v780
  %v783 = vmax.f32 %v781, %v782
  %v784 = vrot.slane %v783, 4
  %v785 = vmax.f32 %v783, %v784
  %v786 = vrot.slane %v785, 2
  %v787 = vmax.f32 %v785, %v786
  %v788 = vrot.slane %v787, 1
  %v789 = vmax.f32 %v787, %v788
  %v790 = vpack.i.bf16 %v789, %v789
  %v791 = vsel %vm779, %v522, 4286644096
  %v792 = vunpack.i.l.bf16 %v791
  %v793 = vunpack.i.h.bf16 %v791
  %v794 = vmax.f32 %v792, %v793
  %v795 = vrot.slane %v794, 4
  %v796 = vmax.f32 %v794, %v795
  %v797 = vrot.slane %v796, 2
  %v798 = vmax.f32 %v796, %v797
  %v799 = vrot.slane %v798, 1
  %v800 = vmax.f32 %v798, %v799
  %v801 = vpack.i.bf16 %v800, %v800
  %v802 = vsel %vm779, %v523, 4286644096
  %v803 = vunpack.i.l.bf16 %v802
  %v804 = vunpack.i.h.bf16 %v802
  %v805 = vmax.f32 %v803, %v804
  %v806 = vrot.slane %v805, 4
  %v807 = vmax.f32 %v805, %v806
  %v808 = vrot.slane %v807, 2
  %v809 = vmax.f32 %v807, %v808
  %v810 = vrot.slane %v809, 1
  %v811 = vmax.f32 %v809, %v810
  %v812 = vpack.i.bf16 %v811, %v811
  %v813 = vsel %vm779, %v524, 4286644096
  %v814 = vunpack.i.l.bf16 %v813
  %v815 = vunpack.i.h.bf16 %v813
  %v816 = vmax.f32 %v814, %v815
  %v817 = vrot.slane %v816, 4
  %v818 = vmax.f32 %v816, %v817
  %v819 = vrot.slane %v818, 2
  %v820 = vmax.f32 %v818, %v819
  %v821 = vrot.slane %v820, 1
  %v822 = vmax.f32 %v820, %v821
  %v823 = vpack.i.bf16 %v822, %v822
  %v824 = vsel %vm779, %v525, 4286644096
  %v825 = vunpack.i.l.bf16 %v824
  %v826 = vunpack.i.h.bf16 %v824
  %v827 = vmax.f32 %v825, %v826
  %v828 = vrot.slane %v827, 4
  %v829 = vmax.f32 %v827, %v828
  %v830 = vrot.slane %v829, 2
  %v831 = vmax.f32 %v829, %v830
  %v832 = vrot.slane %v831, 1
  %v833 = vmax.f32 %v831, %v832
  %v834 = vpack.i.bf16 %v833, %v833
  %v835 = vsel %vm779, %v526, 4286644096
  %v836 = vunpack.i.l.bf16 %v835
  %v837 = vunpack.i.h.bf16 %v835
  %v838 = vmax.f32 %v836, %v837
  %v839 = vrot.slane %v838, 4
  %v840 = vmax.f32 %v838, %v839
  %v841 = vrot.slane %v840, 2
  %v842 = vmax.f32 %v840, %v841
  %v843 = vrot.slane %v842, 1
  %v844 = vmax.f32 %v842, %v843
  %v845 = vpack.i.bf16 %v844, %v844
  %v846 = vsel %vm779, %v527, 4286644096
  %v847 = vunpack.i.l.bf16 %v846
  %v848 = vunpack.i.h.bf16 %v846
  %v849 = vmax.f32 %v847, %v848
  %v850 = vrot.slane %v849, 4
  %v851 = vmax.f32 %v849, %v850
  %v852 = vrot.slane %v851, 2
  %v853 = vmax.f32 %v851, %v852
  %v854 = vrot.slane %v853, 1
  %v855 = vmax.f32 %v853, %v854
  %v856 = vpack.i.bf16 %v855, %v855
  %v857 = vsel %vm779, %v528, 4286644096
  %v858 = vunpack.i.l.bf16 %v857
  %v859 = vunpack.i.h.bf16 %v857
  %v860 = vmax.f32 %v858, %v859
  %v861 = vrot.slane %v860, 4
  %v862 = vmax.f32 %v860, %v861
  %v863 = vrot.slane %v862, 2
  %v864 = vmax.f32 %v862, %v863
  %v865 = vrot.slane %v864, 1
  %v866 = vmax.f32 %v864, %v865
  %v867 = vpack.i.bf16 %v866, %v866
  %v868 = vsel %vm779, %v529, 4286644096
  %v869 = vunpack.i.l.bf16 %v868
  %v870 = vunpack.i.h.bf16 %v868
  %v871 = vmax.f32 %v869, %v870
  %v872 = vrot.slane %v871, 4
  %v873 = vmax.f32 %v871, %v872
  %v874 = vrot.slane %v873, 2
  %v875 = vmax.f32 %v873, %v874
  %v876 = vrot.slane %v875, 1
  %v877 = vmax.f32 %v875, %v876
  %v878 = vpack.i.bf16 %v877, %v877
  %v879 = vsel %vm779, %v530, 4286644096
  %v880 = vunpack.i.l.bf16 %v879
  %v881 = vunpack.i.h.bf16 %v879
  %v882 = vmax.f32 %v880, %v881
  %v883 = vrot.slane %v882, 4
  %v884 = vmax.f32 %v882, %v883
  %v885 = vrot.slane %v884, 2
  %v886 = vmax.f32 %v884, %v885
  %v887 = vrot.slane %v886, 1
  %v888 = vmax.f32 %v886, %v887
  %v889 = vpack.i.bf16 %v888, %v888
  %v890 = vsel %vm779, %v531, 4286644096
  %v891 = vunpack.i.l.bf16 %v890
  %v892 = vunpack.i.h.bf16 %v890
  %v893 = vmax.f32 %v891, %v892
  %v894 = vrot.slane %v893, 4
  %v895 = vmax.f32 %v893, %v894
  %v896 = vrot.slane %v895, 2
  %v897 = vmax.f32 %v895, %v896
  %v898 = vrot.slane %v897, 1
  %v899 = vmax.f32 %v897, %v898
  %v900 = vpack.i.bf16 %v899, %v899
  %v901 = vsel %vm779, %v532, 4286644096
  %v902 = vunpack.i.l.bf16 %v901
  %v903 = vunpack.i.h.bf16 %v901
  %v904 = vmax.f32 %v902, %v903
  %v905 = vrot.slane %v904, 4
  %v906 = vmax.f32 %v904, %v905
  %v907 = vrot.slane %v906, 2
  %v908 = vmax.f32 %v906, %v907
  %v909 = vrot.slane %v908, 1
  %v910 = vmax.f32 %v908, %v909
  %v911 = vpack.i.bf16 %v910, %v910
  %v912 = vsel %vm779, %v533, 4286644096
  %v913 = vunpack.i.l.bf16 %v912
  %v914 = vunpack.i.h.bf16 %v912
  %v915 = vmax.f32 %v913, %v914
  %v916 = vrot.slane %v915, 4
  %v917 = vmax.f32 %v915, %v916
  %v918 = vrot.slane %v917, 2
  %v919 = vmax.f32 %v917, %v918
  %v920 = vrot.slane %v919, 1
  %v921 = vmax.f32 %v919, %v920
  %v922 = vpack.i.bf16 %v921, %v921
  %v923 = vsel %vm779, %v534, 4286644096
  %v924 = vunpack.i.l.bf16 %v923
  %v925 = vunpack.i.h.bf16 %v923
  %v926 = vmax.f32 %v924, %v925
  %v927 = vrot.slane %v926, 4
  %v928 = vmax.f32 %v926, %v927
  %v929 = vrot.slane %v928, 2
  %v930 = vmax.f32 %v928, %v929
  %v931 = vrot.slane %v930, 1
  %v932 = vmax.f32 %v930, %v931
  %v933 = vpack.i.bf16 %v932, %v932
  %v934 = vsel %vm779, %v535, 4286644096
  %v935 = vunpack.i.l.bf16 %v934
  %v936 = vunpack.i.h.bf16 %v934
  %v937 = vmax.f32 %v935, %v936
  %v938 = vrot.slane %v937, 4
  %v939 = vmax.f32 %v937, %v938
  %v940 = vrot.slane %v939, 2
  %v941 = vmax.f32 %v939, %v940
  %v942 = vrot.slane %v941, 1
  %v943 = vmax.f32 %v941, %v942
  %v944 = vpack.i.bf16 %v943, %v943
  %v945 = vsel %vm779, %v536, 4286644096
  %v946 = vunpack.i.l.bf16 %v945
  %v947 = vunpack.i.h.bf16 %v945
  %v948 = vmax.f32 %v946, %v947
  %v949 = vrot.slane %v948, 4
  %v950 = vmax.f32 %v948, %v949
  %v951 = vrot.slane %v950, 2
  %v952 = vmax.f32 %v950, %v951
  %v953 = vrot.slane %v952, 1
  %v954 = vmax.f32 %v952, %v953
  %v955 = vpack.i.bf16 %v954, %v954
  %v956 = vsel %vm779, %v537, 4286644096
  %v957 = vunpack.i.l.bf16 %v956
  %v958 = vunpack.i.h.bf16 %v956
  %v959 = vmax.f32 %v957, %v958
  %v960 = vrot.slane %v959, 4
  %v961 = vmax.f32 %v959, %v960
  %v962 = vrot.slane %v961, 2
  %v963 = vmax.f32 %v961, %v962
  %v964 = vrot.slane %v963, 1
  %v965 = vmax.f32 %v963, %v964
  %v966 = vpack.i.bf16 %v965, %v965
  %v967 = vsel %vm779, %v538, 4286644096
  %v968 = vunpack.i.l.bf16 %v967
  %v969 = vunpack.i.h.bf16 %v967
  %v970 = vmax.f32 %v968, %v969
  %v971 = vrot.slane %v970, 4
  %v972 = vmax.f32 %v970, %v971
  %v973 = vrot.slane %v972, 2
  %v974 = vmax.f32 %v972, %v973
  %v975 = vrot.slane %v974, 1
  %v976 = vmax.f32 %v974, %v975
  %v977 = vpack.i.bf16 %v976, %v976
  %v978 = vsel %vm779, %v539, 4286644096
  %v979 = vunpack.i.l.bf16 %v978
  %v980 = vunpack.i.h.bf16 %v978
  %v981 = vmax.f32 %v979, %v980
  %v982 = vrot.slane %v981, 4
  %v983 = vmax.f32 %v981, %v982
  %v984 = vrot.slane %v983, 2
  %v985 = vmax.f32 %v983, %v984
  %v986 = vrot.slane %v985, 1
  %v987 = vmax.f32 %v985, %v986
  %v988 = vpack.i.bf16 %v987, %v987
  %v989 = vsel %vm779, %v540, 4286644096
  %v990 = vunpack.i.l.bf16 %v989
  %v991 = vunpack.i.h.bf16 %v989
  %v992 = vmax.f32 %v990, %v991
  %v993 = vrot.slane %v992, 4
  %v994 = vmax.f32 %v992, %v993
  %v995 = vrot.slane %v994, 2
  %v996 = vmax.f32 %v994, %v995
  %v997 = vrot.slane %v996, 1
  %v998 = vmax.f32 %v996, %v997
  %v999 = vpack.i.bf16 %v998, %v998
  %v1000 = vsel %vm779, %v541, 4286644096
  %v1001 = vunpack.i.l.bf16 %v1000
  %v1002 = vunpack.i.h.bf16 %v1000
  %v1003 = vmax.f32 %v1001, %v1002
  %v1004 = vrot.slane %v1003, 4
  %v1005 = vmax.f32 %v1003, %v1004
  %v1006 = vrot.slane %v1005, 2
  %v1007 = vmax.f32 %v1005, %v1006
  %v1008 = vrot.slane %v1007, 1
  %v1009 = vmax.f32 %v1007, %v1008
  %v1010 = vpack.i.bf16 %v1009, %v1009
  %v1011 = vsel %vm779, %v542, 4286644096
  %v1012 = vunpack.i.l.bf16 %v1011
  %v1013 = vunpack.i.h.bf16 %v1011
  %v1014 = vmax.f32 %v1012, %v1013
  %v1015 = vrot.slane %v1014, 4
  %v1016 = vmax.f32 %v1014, %v1015
  %v1017 = vrot.slane %v1016, 2
  %v1018 = vmax.f32 %v1016, %v1017
  %v1019 = vrot.slane %v1018, 1
  %v1020 = vmax.f32 %v1018, %v1019
  %v1021 = vpack.i.bf16 %v1020, %v1020
  %v1022 = vsel %vm779, %v543, 4286644096
  %v1023 = vunpack.i.l.bf16 %v1022
  %v1024 = vunpack.i.h.bf16 %v1022
  %v1025 = vmax.f32 %v1023, %v1024
  %v1026 = vrot.slane %v1025, 4
  %v1027 = vmax.f32 %v1025, %v1026
  %v1028 = vrot.slane %v1027, 2
  %v1029 = vmax.f32 %v1027, %v1028
  %v1030 = vrot.slane %v1029, 1
  %v1031 = vmax.f32 %v1029, %v1030
  %v1032 = vpack.i.bf16 %v1031, %v1031
  %v1033 = vsel %vm779, %v544, 4286644096
  %v1034 = vunpack.i.l.bf16 %v1033
  %v1035 = vunpack.i.h.bf16 %v1033
  %v1036 = vmax.f32 %v1034, %v1035
  %v1037 = vrot.slane %v1036, 4
  %v1038 = vmax.f32 %v1036, %v1037
  %v1039 = vrot.slane %v1038, 2
  %v1040 = vmax.f32 %v1038, %v1039
  %v1041 = vrot.slane %v1040, 1
  %v1042 = vmax.f32 %v1040, %v1041
  %v1043 = vpack.i.bf16 %v1042, %v1042
  %v1044 = vsel %vm779, %v545, 4286644096
  %v1045 = vunpack.i.l.bf16 %v1044
  %v1046 = vunpack.i.h.bf16 %v1044
  %v1047 = vmax.f32 %v1045, %v1046
  %v1048 = vrot.slane %v1047, 4
  %v1049 = vmax.f32 %v1047, %v1048
  %v1050 = vrot.slane %v1049, 2
  %v1051 = vmax.f32 %v1049, %v1050
  %v1052 = vrot.slane %v1051, 1
  %v1053 = vmax.f32 %v1051, %v1052
  %v1054 = vpack.i.bf16 %v1053, %v1053
  %v1055 = vsel %vm779, %v546, 4286644096
  %v1056 = vunpack.i.l.bf16 %v1055
  %v1057 = vunpack.i.h.bf16 %v1055
  %v1058 = vmax.f32 %v1056, %v1057
  %v1059 = vrot.slane %v1058, 4
  %v1060 = vmax.f32 %v1058, %v1059
  %v1061 = vrot.slane %v1060, 2
  %v1062 = vmax.f32 %v1060, %v1061
  %v1063 = vrot.slane %v1062, 1
  %v1064 = vmax.f32 %v1062, %v1063
  %v1065 = vpack.i.bf16 %v1064, %v1064
  %v1066 = vsel %vm779, %v547, 4286644096
  %v1067 = vunpack.i.l.bf16 %v1066
  %v1068 = vunpack.i.h.bf16 %v1066
  %v1069 = vmax.f32 %v1067, %v1068
  %v1070 = vrot.slane %v1069, 4
  %v1071 = vmax.f32 %v1069, %v1070
  %v1072 = vrot.slane %v1071, 2
  %v1073 = vmax.f32 %v1071, %v1072
  %v1074 = vrot.slane %v1073, 1
  %v1075 = vmax.f32 %v1073, %v1074
  %v1076 = vpack.i.bf16 %v1075, %v1075
  %v1077 = vsel %vm779, %v548, 4286644096
  %v1078 = vunpack.i.l.bf16 %v1077
  %v1079 = vunpack.i.h.bf16 %v1077
  %v1080 = vmax.f32 %v1078, %v1079
  %v1081 = vrot.slane %v1080, 4
  %v1082 = vmax.f32 %v1080, %v1081
  %v1083 = vrot.slane %v1082, 2
  %v1084 = vmax.f32 %v1082, %v1083
  %v1085 = vrot.slane %v1084, 1
  %v1086 = vmax.f32 %v1084, %v1085
  %v1087 = vpack.i.bf16 %v1086, %v1086
  %v1088 = vsel %vm779, %v549, 4286644096
  %v1089 = vunpack.i.l.bf16 %v1088
  %v1090 = vunpack.i.h.bf16 %v1088
  %v1091 = vmax.f32 %v1089, %v1090
  %v1092 = vrot.slane %v1091, 4
  %v1093 = vmax.f32 %v1091, %v1092
  %v1094 = vrot.slane %v1093, 2
  %v1095 = vmax.f32 %v1093, %v1094
  %v1096 = vrot.slane %v1095, 1
  %v1097 = vmax.f32 %v1095, %v1096
  %v1098 = vpack.i.bf16 %v1097, %v1097
  %v1099 = vsel %vm779, %v550, 4286644096
  %v1100 = vunpack.i.l.bf16 %v1099
  %v1101 = vunpack.i.h.bf16 %v1099
  %v1102 = vmax.f32 %v1100, %v1101
  %v1103 = vrot.slane %v1102, 4
  %v1104 = vmax.f32 %v1102, %v1103
  %v1105 = vrot.slane %v1104, 2
  %v1106 = vmax.f32 %v1104, %v1105
  %v1107 = vrot.slane %v1106, 1
  %v1108 = vmax.f32 %v1106, %v1107
  %v1109 = vpack.i.bf16 %v1108, %v1108
  %v1110 = vsel %vm779, %v551, 4286644096
  %v1111 = vunpack.i.l.bf16 %v1110
  %v1112 = vunpack.i.h.bf16 %v1110
  %v1113 = vmax.f32 %v1111, %v1112
  %v1114 = vrot.slane %v1113, 4
  %v1115 = vmax.f32 %v1113, %v1114
  %v1116 = vrot.slane %v1115, 2
  %v1117 = vmax.f32 %v1115, %v1116
  %v1118 = vrot.slane %v1117, 1
  %v1119 = vmax.f32 %v1117, %v1118
  %v1120 = vpack.i.bf16 %v1119, %v1119
  %v1121 = vsel %vm779, %v552, 4286644096
  %v1122 = vunpack.i.l.bf16 %v1121
  %v1123 = vunpack.i.h.bf16 %v1121
  %v1124 = vmax.f32 %v1122, %v1123
  %v1125 = vrot.slane %v1124, 4
  %v1126 = vmax.f32 %v1124, %v1125
  %v1127 = vrot.slane %v1126, 2
  %v1128 = vmax.f32 %v1126, %v1127
  %v1129 = vrot.slane %v1128, 1
  %v1130 = vmax.f32 %v1128, %v1129
  %v1131 = vpack.i.bf16 %v1130, %v1130
  %v1132 = vsel %vm779, %v553, 4286644096
  %v1133 = vunpack.i.l.bf16 %v1132
  %v1134 = vunpack.i.h.bf16 %v1132
  %v1135 = vmax.f32 %v1133, %v1134
  %v1136 = vrot.slane %v1135, 4
  %v1137 = vmax.f32 %v1135, %v1136
  %v1138 = vrot.slane %v1137, 2
  %v1139 = vmax.f32 %v1137, %v1138
  %v1140 = vrot.slane %v1139, 1
  %v1141 = vmax.f32 %v1139, %v1140
  %v1142 = vpack.i.bf16 %v1141, %v1141
  %v1143 = vsel %vm779, %v554, 4286644096
  %v1144 = vunpack.i.l.bf16 %v1143
  %v1145 = vunpack.i.h.bf16 %v1143
  %v1146 = vmax.f32 %v1144, %v1145
  %v1147 = vrot.slane %v1146, 4
  %v1148 = vmax.f32 %v1146, %v1147
  %v1149 = vrot.slane %v1148, 2
  %v1150 = vmax.f32 %v1148, %v1149
  %v1151 = vrot.slane %v1150, 1
  %v1152 = vmax.f32 %v1150, %v1151
  %v1153 = vpack.i.bf16 %v1152, %v1152
  %v1154 = vsel %vm779, %v555, 4286644096
  %v1155 = vunpack.i.l.bf16 %v1154
  %v1156 = vunpack.i.h.bf16 %v1154
  %v1157 = vmax.f32 %v1155, %v1156
  %v1158 = vrot.slane %v1157, 4
  %v1159 = vmax.f32 %v1157, %v1158
  %v1160 = vrot.slane %v1159, 2
  %v1161 = vmax.f32 %v1159, %v1160
  %v1162 = vrot.slane %v1161, 1
  %v1163 = vmax.f32 %v1161, %v1162
  %v1164 = vpack.i.bf16 %v1163, %v1163
  %v1165 = vsel %vm779, %v556, 4286644096
  %v1166 = vunpack.i.l.bf16 %v1165
  %v1167 = vunpack.i.h.bf16 %v1165
  %v1168 = vmax.f32 %v1166, %v1167
  %v1169 = vrot.slane %v1168, 4
  %v1170 = vmax.f32 %v1168, %v1169
  %v1171 = vrot.slane %v1170, 2
  %v1172 = vmax.f32 %v1170, %v1171
  %v1173 = vrot.slane %v1172, 1
  %v1174 = vmax.f32 %v1172, %v1173
  %v1175 = vpack.i.bf16 %v1174, %v1174
  %v1176 = vsel %vm779, %v557, 4286644096
  %v1177 = vunpack.i.l.bf16 %v1176
  %v1178 = vunpack.i.h.bf16 %v1176
  %v1179 = vmax.f32 %v1177, %v1178
  %v1180 = vrot.slane %v1179, 4
  %v1181 = vmax.f32 %v1179, %v1180
  %v1182 = vrot.slane %v1181, 2
  %v1183 = vmax.f32 %v1181, %v1182
  %v1184 = vrot.slane %v1183, 1
  %v1185 = vmax.f32 %v1183, %v1184
  %v1186 = vpack.i.bf16 %v1185, %v1185
  %v1187 = vsel %vm779, %v558, 4286644096
  %v1188 = vunpack.i.l.bf16 %v1187
  %v1189 = vunpack.i.h.bf16 %v1187
  %v1190 = vmax.f32 %v1188, %v1189
  %v1191 = vrot.slane %v1190, 4
  %v1192 = vmax.f32 %v1190, %v1191
  %v1193 = vrot.slane %v1192, 2
  %v1194 = vmax.f32 %v1192, %v1193
  %v1195 = vrot.slane %v1194, 1
  %v1196 = vmax.f32 %v1194, %v1195
  %v1197 = vpack.i.bf16 %v1196, %v1196
  %v1198 = vsel %vm779, %v559, 4286644096
  %v1199 = vunpack.i.l.bf16 %v1198
  %v1200 = vunpack.i.h.bf16 %v1198
  %v1201 = vmax.f32 %v1199, %v1200
  %v1202 = vrot.slane %v1201, 4
  %v1203 = vmax.f32 %v1201, %v1202
  %v1204 = vrot.slane %v1203, 2
  %v1205 = vmax.f32 %v1203, %v1204
  %v1206 = vrot.slane %v1205, 1
  %v1207 = vmax.f32 %v1205, %v1206
  %v1208 = vpack.i.bf16 %v1207, %v1207
  %v1209 = vsel %vm779, %v560, 4286644096
  %v1210 = vunpack.i.l.bf16 %v1209
  %v1211 = vunpack.i.h.bf16 %v1209
  %v1212 = vmax.f32 %v1210, %v1211
  %v1213 = vrot.slane %v1212, 4
  %v1214 = vmax.f32 %v1212, %v1213
  %v1215 = vrot.slane %v1214, 2
  %v1216 = vmax.f32 %v1214, %v1215
  %v1217 = vrot.slane %v1216, 1
  %v1218 = vmax.f32 %v1216, %v1217
  %v1219 = vpack.i.bf16 %v1218, %v1218
  %v1220 = vsel %vm779, %v561, 4286644096
  %v1221 = vunpack.i.l.bf16 %v1220
  %v1222 = vunpack.i.h.bf16 %v1220
  %v1223 = vmax.f32 %v1221, %v1222
  %v1224 = vrot.slane %v1223, 4
  %v1225 = vmax.f32 %v1223, %v1224
  %v1226 = vrot.slane %v1225, 2
  %v1227 = vmax.f32 %v1225, %v1226
  %v1228 = vrot.slane %v1227, 1
  %v1229 = vmax.f32 %v1227, %v1228
  %v1230 = vpack.i.bf16 %v1229, %v1229
  %v1231 = vsel %vm779, %v562, 4286644096
  %v1232 = vunpack.i.l.bf16 %v1231
  %v1233 = vunpack.i.h.bf16 %v1231
  %v1234 = vmax.f32 %v1232, %v1233
  %v1235 = vrot.slane %v1234, 4
  %v1236 = vmax.f32 %v1234, %v1235
  %v1237 = vrot.slane %v1236, 2
  %v1238 = vmax.f32 %v1236, %v1237
  %v1239 = vrot.slane %v1238, 1
  %v1240 = vmax.f32 %v1238, %v1239
  %v1241 = vpack.i.bf16 %v1240, %v1240
  %v1242 = vsel %vm779, %v563, 4286644096
  %v1243 = vunpack.i.l.bf16 %v1242
  %v1244 = vunpack.i.h.bf16 %v1242
  %v1245 = vmax.f32 %v1243, %v1244
  %v1246 = vrot.slane %v1245, 4
  %v1247 = vmax.f32 %v1245, %v1246
  %v1248 = vrot.slane %v1247, 2
  %v1249 = vmax.f32 %v1247, %v1248
  %v1250 = vrot.slane %v1249, 1
  %v1251 = vmax.f32 %v1249, %v1250
  %v1252 = vpack.i.bf16 %v1251, %v1251
  %v1253 = vsel %vm779, %v564, 4286644096
  %v1254 = vunpack.i.l.bf16 %v1253
  %v1255 = vunpack.i.h.bf16 %v1253
  %v1256 = vmax.f32 %v1254, %v1255
  %v1257 = vrot.slane %v1256, 4
  %v1258 = vmax.f32 %v1256, %v1257
  %v1259 = vrot.slane %v1258, 2
  %v1260 = vmax.f32 %v1258, %v1259
  %v1261 = vrot.slane %v1260, 1
  %v1262 = vmax.f32 %v1260, %v1261
  %v1263 = vpack.i.bf16 %v1262, %v1262
  %v1264 = vsel %vm779, %v565, 4286644096
  %v1265 = vunpack.i.l.bf16 %v1264
  %v1266 = vunpack.i.h.bf16 %v1264
  %v1267 = vmax.f32 %v1265, %v1266
  %v1268 = vrot.slane %v1267, 4
  %v1269 = vmax.f32 %v1267, %v1268
  %v1270 = vrot.slane %v1269, 2
  %v1271 = vmax.f32 %v1269, %v1270
  %v1272 = vrot.slane %v1271, 1
  %v1273 = vmax.f32 %v1271, %v1272
  %v1274 = vpack.i.bf16 %v1273, %v1273
  %v1275 = vsel %vm779, %v566, 4286644096
  %v1276 = vunpack.i.l.bf16 %v1275
  %v1277 = vunpack.i.h.bf16 %v1275
  %v1278 = vmax.f32 %v1276, %v1277
  %v1279 = vrot.slane %v1278, 4
  %v1280 = vmax.f32 %v1278, %v1279
  %v1281 = vrot.slane %v1280, 2
  %v1282 = vmax.f32 %v1280, %v1281
  %v1283 = vrot.slane %v1282, 1
  %v1284 = vmax.f32 %v1282, %v1283
  %v1285 = vpack.i.bf16 %v1284, %v1284
  %v1286 = vsel %vm779, %v567, 4286644096
  %v1287 = vunpack.i.l.bf16 %v1286
  %v1288 = vunpack.i.h.bf16 %v1286
  %v1289 = vmax.f32 %v1287, %v1288
  %v1290 = vrot.slane %v1289, 4
  %v1291 = vmax.f32 %v1289, %v1290
  %v1292 = vrot.slane %v1291, 2
  %v1293 = vmax.f32 %v1291, %v1292
  %v1294 = vrot.slane %v1293, 1
  %v1295 = vmax.f32 %v1293, %v1294
  %v1296 = vpack.i.bf16 %v1295, %v1295
  %v1297 = vsel %vm779, %v568, 4286644096
  %v1298 = vunpack.i.l.bf16 %v1297
  %v1299 = vunpack.i.h.bf16 %v1297
  %v1300 = vmax.f32 %v1298, %v1299
  %v1301 = vrot.slane %v1300, 4
  %v1302 = vmax.f32 %v1300, %v1301
  %v1303 = vrot.slane %v1302, 2
  %v1304 = vmax.f32 %v1302, %v1303
  %v1305 = vrot.slane %v1304, 1
  %v1306 = vmax.f32 %v1304, %v1305
  %v1307 = vpack.i.bf16 %v1306, %v1306
  %v1308 = vsel %vm779, %v569, 4286644096
  %v1309 = vunpack.i.l.bf16 %v1308
  %v1310 = vunpack.i.h.bf16 %v1308
  %v1311 = vmax.f32 %v1309, %v1310
  %v1312 = vrot.slane %v1311, 4
  %v1313 = vmax.f32 %v1311, %v1312
  %v1314 = vrot.slane %v1313, 2
  %v1315 = vmax.f32 %v1313, %v1314
  %v1316 = vrot.slane %v1315, 1
  %v1317 = vmax.f32 %v1315, %v1316
  %v1318 = vpack.i.bf16 %v1317, %v1317
  %v1319 = vsel %vm779, %v570, 4286644096
  %v1320 = vunpack.i.l.bf16 %v1319
  %v1321 = vunpack.i.h.bf16 %v1319
  %v1322 = vmax.f32 %v1320, %v1321
  %v1323 = vrot.slane %v1322, 4
  %v1324 = vmax.f32 %v1322, %v1323
  %v1325 = vrot.slane %v1324, 2
  %v1326 = vmax.f32 %v1324, %v1325
  %v1327 = vrot.slane %v1326, 1
  %v1328 = vmax.f32 %v1326, %v1327
  %v1329 = vpack.i.bf16 %v1328, %v1328
  %v1330 = vsel %vm779, %v571, 4286644096
  %v1331 = vunpack.i.l.bf16 %v1330
  %v1332 = vunpack.i.h.bf16 %v1330
  %v1333 = vmax.f32 %v1331, %v1332
  %v1334 = vrot.slane %v1333, 4
  %v1335 = vmax.f32 %v1333, %v1334
  %v1336 = vrot.slane %v1335, 2
  %v1337 = vmax.f32 %v1335, %v1336
  %v1338 = vrot.slane %v1337, 1
  %v1339 = vmax.f32 %v1337, %v1338
  %v1340 = vpack.i.bf16 %v1339, %v1339
  %v1341 = vsel %vm779, %v572, 4286644096
  %v1342 = vunpack.i.l.bf16 %v1341
  %v1343 = vunpack.i.h.bf16 %v1341
  %v1344 = vmax.f32 %v1342, %v1343
  %v1345 = vrot.slane %v1344, 4
  %v1346 = vmax.f32 %v1344, %v1345
  %v1347 = vrot.slane %v1346, 2
  %v1348 = vmax.f32 %v1346, %v1347
  %v1349 = vrot.slane %v1348, 1
  %v1350 = vmax.f32 %v1348, %v1349
  %v1351 = vpack.i.bf16 %v1350, %v1350
  %v1352 = vsel %vm779, %v573, 4286644096
  %v1353 = vunpack.i.l.bf16 %v1352
  %v1354 = vunpack.i.h.bf16 %v1352
  %v1355 = vmax.f32 %v1353, %v1354
  %v1356 = vrot.slane %v1355, 4
  %v1357 = vmax.f32 %v1355, %v1356
  %v1358 = vrot.slane %v1357, 2
  %v1359 = vmax.f32 %v1357, %v1358
  %v1360 = vrot.slane %v1359, 1
  %v1361 = vmax.f32 %v1359, %v1360
  %v1362 = vpack.i.bf16 %v1361, %v1361
  %v1363 = vsel %vm779, %v574, 4286644096
  %v1364 = vunpack.i.l.bf16 %v1363
  %v1365 = vunpack.i.h.bf16 %v1363
  %v1366 = vmax.f32 %v1364, %v1365
  %v1367 = vrot.slane %v1366, 4
  %v1368 = vmax.f32 %v1366, %v1367
  %v1369 = vrot.slane %v1368, 2
  %v1370 = vmax.f32 %v1368, %v1369
  %v1371 = vrot.slane %v1370, 1
  %v1372 = vmax.f32 %v1370, %v1371
  %v1373 = vpack.i.bf16 %v1372, %v1372
  %v1374 = vsel %vm779, %v575, 4286644096
  %v1375 = vunpack.i.l.bf16 %v1374
  %v1376 = vunpack.i.h.bf16 %v1374
  %v1377 = vmax.f32 %v1375, %v1376
  %v1378 = vrot.slane %v1377, 4
  %v1379 = vmax.f32 %v1377, %v1378
  %v1380 = vrot.slane %v1379, 2
  %v1381 = vmax.f32 %v1379, %v1380
  %v1382 = vrot.slane %v1381, 1
  %v1383 = vmax.f32 %v1381, %v1382
  %v1384 = vpack.i.bf16 %v1383, %v1383
  %v1385 = vsel %vm779, %v576, 4286644096
  %v1386 = vunpack.i.l.bf16 %v1385
  %v1387 = vunpack.i.h.bf16 %v1385
  %v1388 = vmax.f32 %v1386, %v1387
  %v1389 = vrot.slane %v1388, 4
  %v1390 = vmax.f32 %v1388, %v1389
  %v1391 = vrot.slane %v1390, 2
  %v1392 = vmax.f32 %v1390, %v1391
  %v1393 = vrot.slane %v1392, 1
  %v1394 = vmax.f32 %v1392, %v1393
  %v1395 = vpack.i.bf16 %v1394, %v1394
  %v1396 = vsel %vm779, %v577, 4286644096
  %v1397 = vunpack.i.l.bf16 %v1396
  %v1398 = vunpack.i.h.bf16 %v1396
  %v1399 = vmax.f32 %v1397, %v1398
  %v1400 = vrot.slane %v1399, 4
  %v1401 = vmax.f32 %v1399, %v1400
  %v1402 = vrot.slane %v1401, 2
  %v1403 = vmax.f32 %v1401, %v1402
  %v1404 = vrot.slane %v1403, 1
  %v1405 = vmax.f32 %v1403, %v1404
  %v1406 = vpack.i.bf16 %v1405, %v1405
  %v1407 = vsel %vm779, %v578, 4286644096
  %v1408 = vunpack.i.l.bf16 %v1407
  %v1409 = vunpack.i.h.bf16 %v1407
  %v1410 = vmax.f32 %v1408, %v1409
  %v1411 = vrot.slane %v1410, 4
  %v1412 = vmax.f32 %v1410, %v1411
  %v1413 = vrot.slane %v1412, 2
  %v1414 = vmax.f32 %v1412, %v1413
  %v1415 = vrot.slane %v1414, 1
  %v1416 = vmax.f32 %v1414, %v1415
  %v1417 = vpack.i.bf16 %v1416, %v1416
  %v1418 = vsel %vm779, %v579, 4286644096
  %v1419 = vunpack.i.l.bf16 %v1418
  %v1420 = vunpack.i.h.bf16 %v1418
  %v1421 = vmax.f32 %v1419, %v1420
  %v1422 = vrot.slane %v1421, 4
  %v1423 = vmax.f32 %v1421, %v1422
  %v1424 = vrot.slane %v1423, 2
  %v1425 = vmax.f32 %v1423, %v1424
  %v1426 = vrot.slane %v1425, 1
  %v1427 = vmax.f32 %v1425, %v1426
  %v1428 = vpack.i.bf16 %v1427, %v1427
  %v1429 = vsel %vm779, %v580, 4286644096
  %v1430 = vunpack.i.l.bf16 %v1429
  %v1431 = vunpack.i.h.bf16 %v1429
  %v1432 = vmax.f32 %v1430, %v1431
  %v1433 = vrot.slane %v1432, 4
  %v1434 = vmax.f32 %v1432, %v1433
  %v1435 = vrot.slane %v1434, 2
  %v1436 = vmax.f32 %v1434, %v1435
  %v1437 = vrot.slane %v1436, 1
  %v1438 = vmax.f32 %v1436, %v1437
  %v1439 = vpack.i.bf16 %v1438, %v1438
  %v1440 = vsel %vm779, %v581, 4286644096
  %v1441 = vunpack.i.l.bf16 %v1440
  %v1442 = vunpack.i.h.bf16 %v1440
  %v1443 = vmax.f32 %v1441, %v1442
  %v1444 = vrot.slane %v1443, 4
  %v1445 = vmax.f32 %v1443, %v1444
  %v1446 = vrot.slane %v1445, 2
  %v1447 = vmax.f32 %v1445, %v1446
  %v1448 = vrot.slane %v1447, 1
  %v1449 = vmax.f32 %v1447, %v1448
  %v1450 = vpack.i.bf16 %v1449, %v1449
  %v1451 = vsel %vm779, %v582, 4286644096
  %v1452 = vunpack.i.l.bf16 %v1451
  %v1453 = vunpack.i.h.bf16 %v1451
  %v1454 = vmax.f32 %v1452, %v1453
  %v1455 = vrot.slane %v1454, 4
  %v1456 = vmax.f32 %v1454, %v1455
  %v1457 = vrot.slane %v1456, 2
  %v1458 = vmax.f32 %v1456, %v1457
  %v1459 = vrot.slane %v1458, 1
  %v1460 = vmax.f32 %v1458, %v1459
  %v1461 = vpack.i.bf16 %v1460, %v1460
  %v1462 = vsel %vm779, %v583, 4286644096
  %v1463 = vunpack.i.l.bf16 %v1462
  %v1464 = vunpack.i.h.bf16 %v1462
  %v1465 = vmax.f32 %v1463, %v1464
  %v1466 = vrot.slane %v1465, 4
  %v1467 = vmax.f32 %v1465, %v1466
  %v1468 = vrot.slane %v1467, 2
  %v1469 = vmax.f32 %v1467, %v1468
  %v1470 = vrot.slane %v1469, 1
  %v1471 = vmax.f32 %v1469, %v1470
  %v1472 = vpack.i.bf16 %v1471, %v1471
  %v1473 = vsel %vm779, %v584, 4286644096
  %v1474 = vunpack.i.l.bf16 %v1473
  %v1475 = vunpack.i.h.bf16 %v1473
  %v1476 = vmax.f32 %v1474, %v1475
  %v1477 = vrot.slane %v1476, 4
  %v1478 = vmax.f32 %v1476, %v1477
  %v1479 = vrot.slane %v1478, 2
  %v1480 = vmax.f32 %v1478, %v1479
  %v1481 = vrot.slane %v1480, 1
  %v1482 = vmax.f32 %v1480, %v1481
  %v1483 = vpack.i.bf16 %v1482, %v1482
  %v1484 = vsel %vm779, %v585, 4286644096
  %v1485 = vunpack.i.l.bf16 %v1484
  %v1486 = vunpack.i.h.bf16 %v1484
  %v1487 = vmax.f32 %v1485, %v1486
  %v1488 = vrot.slane %v1487, 4
  %v1489 = vmax.f32 %v1487, %v1488
  %v1490 = vrot.slane %v1489, 2
  %v1491 = vmax.f32 %v1489, %v1490
  %v1492 = vrot.slane %v1491, 1
  %v1493 = vmax.f32 %v1491, %v1492
  %v1494 = vpack.i.bf16 %v1493, %v1493
  %v1495 = vsel %vm779, %v586, 4286644096
  %v1496 = vunpack.i.l.bf16 %v1495
  %v1497 = vunpack.i.h.bf16 %v1495
  %v1498 = vmax.f32 %v1496, %v1497
  %v1499 = vrot.slane %v1498, 4
  %v1500 = vmax.f32 %v1498, %v1499
  %v1501 = vrot.slane %v1500, 2
  %v1502 = vmax.f32 %v1500, %v1501
  %v1503 = vrot.slane %v1502, 1
  %v1504 = vmax.f32 %v1502, %v1503
  %v1505 = vpack.i.bf16 %v1504, %v1504
  %v1506 = vsel %vm779, %v587, 4286644096
  %v1507 = vunpack.i.l.bf16 %v1506
  %v1508 = vunpack.i.h.bf16 %v1506
  %v1509 = vmax.f32 %v1507, %v1508
  %v1510 = vrot.slane %v1509, 4
  %v1511 = vmax.f32 %v1509, %v1510
  %v1512 = vrot.slane %v1511, 2
  %v1513 = vmax.f32 %v1511, %v1512
  %v1514 = vrot.slane %v1513, 1
  %v1515 = vmax.f32 %v1513, %v1514
  %v1516 = vpack.i.bf16 %v1515, %v1515
  %v1517 = vsel %vm779, %v588, 4286644096
  %v1518 = vunpack.i.l.bf16 %v1517
  %v1519 = vunpack.i.h.bf16 %v1517
  %v1520 = vmax.f32 %v1518, %v1519
  %v1521 = vrot.slane %v1520, 4
  %v1522 = vmax.f32 %v1520, %v1521
  %v1523 = vrot.slane %v1522, 2
  %v1524 = vmax.f32 %v1522, %v1523
  %v1525 = vrot.slane %v1524, 1
  %v1526 = vmax.f32 %v1524, %v1525
  %v1527 = vpack.i.bf16 %v1526, %v1526
  %v1528 = vsel %vm779, %v589, 4286644096
  %v1529 = vunpack.i.l.bf16 %v1528
  %v1530 = vunpack.i.h.bf16 %v1528
  %v1531 = vmax.f32 %v1529, %v1530
  %v1532 = vrot.slane %v1531, 4
  %v1533 = vmax.f32 %v1531, %v1532
  %v1534 = vrot.slane %v1533, 2
  %v1535 = vmax.f32 %v1533, %v1534
  %v1536 = vrot.slane %v1535, 1
  %v1537 = vmax.f32 %v1535, %v1536
  %v1538 = vpack.i.bf16 %v1537, %v1537
  %v1539 = vsel %vm779, %v590, 4286644096
  %v1540 = vunpack.i.l.bf16 %v1539
  %v1541 = vunpack.i.h.bf16 %v1539
  %v1542 = vmax.f32 %v1540, %v1541
  %v1543 = vrot.slane %v1542, 4
  %v1544 = vmax.f32 %v1542, %v1543
  %v1545 = vrot.slane %v1544, 2
  %v1546 = vmax.f32 %v1544, %v1545
  %v1547 = vrot.slane %v1546, 1
  %v1548 = vmax.f32 %v1546, %v1547
  %v1549 = vpack.i.bf16 %v1548, %v1548
  %v1550 = vsel %vm779, %v591, 4286644096
  %v1551 = vunpack.i.l.bf16 %v1550
  %v1552 = vunpack.i.h.bf16 %v1550
  %v1553 = vmax.f32 %v1551, %v1552
  %v1554 = vrot.slane %v1553, 4
  %v1555 = vmax.f32 %v1553, %v1554
  %v1556 = vrot.slane %v1555, 2
  %v1557 = vmax.f32 %v1555, %v1556
  %v1558 = vrot.slane %v1557, 1
  %v1559 = vmax.f32 %v1557, %v1558
  %v1560 = vpack.i.bf16 %v1559, %v1559
  %v1561 = vsel %vm779, %v592, 4286644096
  %v1562 = vunpack.i.l.bf16 %v1561
  %v1563 = vunpack.i.h.bf16 %v1561
  %v1564 = vmax.f32 %v1562, %v1563
  %v1565 = vrot.slane %v1564, 4
  %v1566 = vmax.f32 %v1564, %v1565
  %v1567 = vrot.slane %v1566, 2
  %v1568 = vmax.f32 %v1566, %v1567
  %v1569 = vrot.slane %v1568, 1
  %v1570 = vmax.f32 %v1568, %v1569
  %v1571 = vpack.i.bf16 %v1570, %v1570
  %v1572 = vsel %vm779, %v593, 4286644096
  %v1573 = vunpack.i.l.bf16 %v1572
  %v1574 = vunpack.i.h.bf16 %v1572
  %v1575 = vmax.f32 %v1573, %v1574
  %v1576 = vrot.slane %v1575, 4
  %v1577 = vmax.f32 %v1575, %v1576
  %v1578 = vrot.slane %v1577, 2
  %v1579 = vmax.f32 %v1577, %v1578
  %v1580 = vrot.slane %v1579, 1
  %v1581 = vmax.f32 %v1579, %v1580
  %v1582 = vpack.i.bf16 %v1581, %v1581
  %v1583 = vsel %vm779, %v594, 4286644096
  %v1584 = vunpack.i.l.bf16 %v1583
  %v1585 = vunpack.i.h.bf16 %v1583
  %v1586 = vmax.f32 %v1584, %v1585
  %v1587 = vrot.slane %v1586, 4
  %v1588 = vmax.f32 %v1586, %v1587
  %v1589 = vrot.slane %v1588, 2
  %v1590 = vmax.f32 %v1588, %v1589
  %v1591 = vrot.slane %v1590, 1
  %v1592 = vmax.f32 %v1590, %v1591
  %v1593 = vpack.i.bf16 %v1592, %v1592
  %v1594 = vsel %vm779, %v595, 4286644096
  %v1595 = vunpack.i.l.bf16 %v1594
  %v1596 = vunpack.i.h.bf16 %v1594
  %v1597 = vmax.f32 %v1595, %v1596
  %v1598 = vrot.slane %v1597, 4
  %v1599 = vmax.f32 %v1597, %v1598
  %v1600 = vrot.slane %v1599, 2
  %v1601 = vmax.f32 %v1599, %v1600
  %v1602 = vrot.slane %v1601, 1
  %v1603 = vmax.f32 %v1601, %v1602
  %v1604 = vpack.i.bf16 %v1603, %v1603
  %v1605 = vsel %vm779, %v596, 4286644096
  %v1606 = vunpack.i.l.bf16 %v1605
  %v1607 = vunpack.i.h.bf16 %v1605
  %v1608 = vmax.f32 %v1606, %v1607
  %v1609 = vrot.slane %v1608, 4
  %v1610 = vmax.f32 %v1608, %v1609
  %v1611 = vrot.slane %v1610, 2
  %v1612 = vmax.f32 %v1610, %v1611
  %v1613 = vrot.slane %v1612, 1
  %v1614 = vmax.f32 %v1612, %v1613
  %v1615 = vpack.i.bf16 %v1614, %v1614
  %v1616 = vsel %vm779, %v597, 4286644096
  %v1617 = vunpack.i.l.bf16 %v1616
  %v1618 = vunpack.i.h.bf16 %v1616
  %v1619 = vmax.f32 %v1617, %v1618
  %v1620 = vrot.slane %v1619, 4
  %v1621 = vmax.f32 %v1619, %v1620
  %v1622 = vrot.slane %v1621, 2
  %v1623 = vmax.f32 %v1621, %v1622
  %v1624 = vrot.slane %v1623, 1
  %v1625 = vmax.f32 %v1623, %v1624
  %v1626 = vpack.i.bf16 %v1625, %v1625
  %v1627 = vsel %vm779, %v598, 4286644096
  %v1628 = vunpack.i.l.bf16 %v1627
  %v1629 = vunpack.i.h.bf16 %v1627
  %v1630 = vmax.f32 %v1628, %v1629
  %v1631 = vrot.slane %v1630, 4
  %v1632 = vmax.f32 %v1630, %v1631
  %v1633 = vrot.slane %v1632, 2
  %v1634 = vmax.f32 %v1632, %v1633
  %v1635 = vrot.slane %v1634, 1
  %v1636 = vmax.f32 %v1634, %v1635
  %v1637 = vpack.i.bf16 %v1636, %v1636
  %v1638 = vsel %vm779, %v599, 4286644096
  %v1639 = vunpack.i.l.bf16 %v1638
  %v1640 = vunpack.i.h.bf16 %v1638
  %v1641 = vmax.f32 %v1639, %v1640
  %v1642 = vrot.slane %v1641, 4
  %v1643 = vmax.f32 %v1641, %v1642
  %v1644 = vrot.slane %v1643, 2
  %v1645 = vmax.f32 %v1643, %v1644
  %v1646 = vrot.slane %v1645, 1
  %v1647 = vmax.f32 %v1645, %v1646
  %v1648 = vpack.i.bf16 %v1647, %v1647
  %v1649 = vsel %vm779, %v600, 4286644096
  %v1650 = vunpack.i.l.bf16 %v1649
  %v1651 = vunpack.i.h.bf16 %v1649
  %v1652 = vmax.f32 %v1650, %v1651
  %v1653 = vrot.slane %v1652, 4
  %v1654 = vmax.f32 %v1652, %v1653
  %v1655 = vrot.slane %v1654, 2
  %v1656 = vmax.f32 %v1654, %v1655
  %v1657 = vrot.slane %v1656, 1
  %v1658 = vmax.f32 %v1656, %v1657
  %v1659 = vpack.i.bf16 %v1658, %v1658
  %v1660 = vsel %vm779, %v601, 4286644096
  %v1661 = vunpack.i.l.bf16 %v1660
  %v1662 = vunpack.i.h.bf16 %v1660
  %v1663 = vmax.f32 %v1661, %v1662
  %v1664 = vrot.slane %v1663, 4
  %v1665 = vmax.f32 %v1663, %v1664
  %v1666 = vrot.slane %v1665, 2
  %v1667 = vmax.f32 %v1665, %v1666
  %v1668 = vrot.slane %v1667, 1
  %v1669 = vmax.f32 %v1667, %v1668
  %v1670 = vpack.i.bf16 %v1669, %v1669
  %v1671 = vsel %vm779, %v602, 4286644096
  %v1672 = vunpack.i.l.bf16 %v1671
  %v1673 = vunpack.i.h.bf16 %v1671
  %v1674 = vmax.f32 %v1672, %v1673
  %v1675 = vrot.slane %v1674, 4
  %v1676 = vmax.f32 %v1674, %v1675
  %v1677 = vrot.slane %v1676, 2
  %v1678 = vmax.f32 %v1676, %v1677
  %v1679 = vrot.slane %v1678, 1
  %v1680 = vmax.f32 %v1678, %v1679
  %v1681 = vpack.i.bf16 %v1680, %v1680
  %v1682 = vsel %vm779, %v603, 4286644096
  %v1683 = vunpack.i.l.bf16 %v1682
  %v1684 = vunpack.i.h.bf16 %v1682
  %v1685 = vmax.f32 %v1683, %v1684
  %v1686 = vrot.slane %v1685, 4
  %v1687 = vmax.f32 %v1685, %v1686
  %v1688 = vrot.slane %v1687, 2
  %v1689 = vmax.f32 %v1687, %v1688
  %v1690 = vrot.slane %v1689, 1
  %v1691 = vmax.f32 %v1689, %v1690
  %v1692 = vpack.i.bf16 %v1691, %v1691
  %v1693 = vsel %vm779, %v604, 4286644096
  %v1694 = vunpack.i.l.bf16 %v1693
  %v1695 = vunpack.i.h.bf16 %v1693
  %v1696 = vmax.f32 %v1694, %v1695
  %v1697 = vrot.slane %v1696, 4
  %v1698 = vmax.f32 %v1696, %v1697
  %v1699 = vrot.slane %v1698, 2
  %v1700 = vmax.f32 %v1698, %v1699
  %v1701 = vrot.slane %v1700, 1
  %v1702 = vmax.f32 %v1700, %v1701
  %v1703 = vpack.i.bf16 %v1702, %v1702
  %v1704 = vsel %vm779, %v605, 4286644096
  %v1705 = vunpack.i.l.bf16 %v1704
  %v1706 = vunpack.i.h.bf16 %v1704
  %v1707 = vmax.f32 %v1705, %v1706
  %v1708 = vrot.slane %v1707, 4
  %v1709 = vmax.f32 %v1707, %v1708
  %v1710 = vrot.slane %v1709, 2
  %v1711 = vmax.f32 %v1709, %v1710
  %v1712 = vrot.slane %v1711, 1
  %v1713 = vmax.f32 %v1711, %v1712
  %v1714 = vpack.i.bf16 %v1713, %v1713
  %v1715 = vsel %vm779, %v606, 4286644096
  %v1716 = vunpack.i.l.bf16 %v1715
  %v1717 = vunpack.i.h.bf16 %v1715
  %v1718 = vmax.f32 %v1716, %v1717
  %v1719 = vrot.slane %v1718, 4
  %v1720 = vmax.f32 %v1718, %v1719
  %v1721 = vrot.slane %v1720, 2
  %v1722 = vmax.f32 %v1720, %v1721
  %v1723 = vrot.slane %v1722, 1
  %v1724 = vmax.f32 %v1722, %v1723
  %v1725 = vpack.i.bf16 %v1724, %v1724
  %v1726 = vsel %vm779, %v607, 4286644096
  %v1727 = vunpack.i.l.bf16 %v1726
  %v1728 = vunpack.i.h.bf16 %v1726
  %v1729 = vmax.f32 %v1727, %v1728
  %v1730 = vrot.slane %v1729, 4
  %v1731 = vmax.f32 %v1729, %v1730
  %v1732 = vrot.slane %v1731, 2
  %v1733 = vmax.f32 %v1731, %v1732
  %v1734 = vrot.slane %v1733, 1
  %v1735 = vmax.f32 %v1733, %v1734
  %v1736 = vpack.i.bf16 %v1735, %v1735
  %v1737 = vsel %vm779, %v608, 4286644096
  %v1738 = vunpack.i.l.bf16 %v1737
  %v1739 = vunpack.i.h.bf16 %v1737
  %v1740 = vmax.f32 %v1738, %v1739
  %v1741 = vrot.slane %v1740, 4
  %v1742 = vmax.f32 %v1740, %v1741
  %v1743 = vrot.slane %v1742, 2
  %v1744 = vmax.f32 %v1742, %v1743
  %v1745 = vrot.slane %v1744, 1
  %v1746 = vmax.f32 %v1744, %v1745
  %v1747 = vpack.i.bf16 %v1746, %v1746
  %v1748 = vsel %vm779, %v609, 4286644096
  %v1749 = vunpack.i.l.bf16 %v1748
  %v1750 = vunpack.i.h.bf16 %v1748
  %v1751 = vmax.f32 %v1749, %v1750
  %v1752 = vrot.slane %v1751, 4
  %v1753 = vmax.f32 %v1751, %v1752
  %v1754 = vrot.slane %v1753, 2
  %v1755 = vmax.f32 %v1753, %v1754
  %v1756 = vrot.slane %v1755, 1
  %v1757 = vmax.f32 %v1755, %v1756
  %v1758 = vpack.i.bf16 %v1757, %v1757
  %v1759 = vsel %vm779, %v610, 4286644096
  %v1760 = vunpack.i.l.bf16 %v1759
  %v1761 = vunpack.i.h.bf16 %v1759
  %v1762 = vmax.f32 %v1760, %v1761
  %v1763 = vrot.slane %v1762, 4
  %v1764 = vmax.f32 %v1762, %v1763
  %v1765 = vrot.slane %v1764, 2
  %v1766 = vmax.f32 %v1764, %v1765
  %v1767 = vrot.slane %v1766, 1
  %v1768 = vmax.f32 %v1766, %v1767
  %v1769 = vpack.i.bf16 %v1768, %v1768
  %v1770 = vsel %vm779, %v611, 4286644096
  %v1771 = vunpack.i.l.bf16 %v1770
  %v1772 = vunpack.i.h.bf16 %v1770
  %v1773 = vmax.f32 %v1771, %v1772
  %v1774 = vrot.slane %v1773, 4
  %v1775 = vmax.f32 %v1773, %v1774
  %v1776 = vrot.slane %v1775, 2
  %v1777 = vmax.f32 %v1775, %v1776
  %v1778 = vrot.slane %v1777, 1
  %v1779 = vmax.f32 %v1777, %v1778
  %v1780 = vpack.i.bf16 %v1779, %v1779
  %v1781 = vsel %vm779, %v612, 4286644096
  %v1782 = vunpack.i.l.bf16 %v1781
  %v1783 = vunpack.i.h.bf16 %v1781
  %v1784 = vmax.f32 %v1782, %v1783
  %v1785 = vrot.slane %v1784, 4
  %v1786 = vmax.f32 %v1784, %v1785
  %v1787 = vrot.slane %v1786, 2
  %v1788 = vmax.f32 %v1786, %v1787
  %v1789 = vrot.slane %v1788, 1
  %v1790 = vmax.f32 %v1788, %v1789
  %v1791 = vpack.i.bf16 %v1790, %v1790
  %v1792 = vsel %vm779, %v613, 4286644096
  %v1793 = vunpack.i.l.bf16 %v1792
  %v1794 = vunpack.i.h.bf16 %v1792
  %v1795 = vmax.f32 %v1793, %v1794
  %v1796 = vrot.slane %v1795, 4
  %v1797 = vmax.f32 %v1795, %v1796
  %v1798 = vrot.slane %v1797, 2
  %v1799 = vmax.f32 %v1797, %v1798
  %v1800 = vrot.slane %v1799, 1
  %v1801 = vmax.f32 %v1799, %v1800
  %v1802 = vpack.i.bf16 %v1801, %v1801
  %v1803 = vsel %vm779, %v614, 4286644096
  %v1804 = vunpack.i.l.bf16 %v1803
  %v1805 = vunpack.i.h.bf16 %v1803
  %v1806 = vmax.f32 %v1804, %v1805
  %v1807 = vrot.slane %v1806, 4
  %v1808 = vmax.f32 %v1806, %v1807
  %v1809 = vrot.slane %v1808, 2
  %v1810 = vmax.f32 %v1808, %v1809
  %v1811 = vrot.slane %v1810, 1
  %v1812 = vmax.f32 %v1810, %v1811
  %v1813 = vpack.i.bf16 %v1812, %v1812
  %v1814 = vsel %vm779, %v615, 4286644096
  %v1815 = vunpack.i.l.bf16 %v1814
  %v1816 = vunpack.i.h.bf16 %v1814
  %v1817 = vmax.f32 %v1815, %v1816
  %v1818 = vrot.slane %v1817, 4
  %v1819 = vmax.f32 %v1817, %v1818
  %v1820 = vrot.slane %v1819, 2
  %v1821 = vmax.f32 %v1819, %v1820
  %v1822 = vrot.slane %v1821, 1
  %v1823 = vmax.f32 %v1821, %v1822
  %v1824 = vpack.i.bf16 %v1823, %v1823
  %v1825 = vsel %vm779, %v616, 4286644096
  %v1826 = vunpack.i.l.bf16 %v1825
  %v1827 = vunpack.i.h.bf16 %v1825
  %v1828 = vmax.f32 %v1826, %v1827
  %v1829 = vrot.slane %v1828, 4
  %v1830 = vmax.f32 %v1828, %v1829
  %v1831 = vrot.slane %v1830, 2
  %v1832 = vmax.f32 %v1830, %v1831
  %v1833 = vrot.slane %v1832, 1
  %v1834 = vmax.f32 %v1832, %v1833
  %v1835 = vpack.i.bf16 %v1834, %v1834
  %v1836 = vsel %vm779, %v617, 4286644096
  %v1837 = vunpack.i.l.bf16 %v1836
  %v1838 = vunpack.i.h.bf16 %v1836
  %v1839 = vmax.f32 %v1837, %v1838
  %v1840 = vrot.slane %v1839, 4
  %v1841 = vmax.f32 %v1839, %v1840
  %v1842 = vrot.slane %v1841, 2
  %v1843 = vmax.f32 %v1841, %v1842
  %v1844 = vrot.slane %v1843, 1
  %v1845 = vmax.f32 %v1843, %v1844
  %v1846 = vpack.i.bf16 %v1845, %v1845
  %v1847 = vsel %vm779, %v618, 4286644096
  %v1848 = vunpack.i.l.bf16 %v1847
  %v1849 = vunpack.i.h.bf16 %v1847
  %v1850 = vmax.f32 %v1848, %v1849
  %v1851 = vrot.slane %v1850, 4
  %v1852 = vmax.f32 %v1850, %v1851
  %v1853 = vrot.slane %v1852, 2
  %v1854 = vmax.f32 %v1852, %v1853
  %v1855 = vrot.slane %v1854, 1
  %v1856 = vmax.f32 %v1854, %v1855
  %v1857 = vpack.i.bf16 %v1856, %v1856
  %v1858 = vsel %vm779, %v619, 4286644096
  %v1859 = vunpack.i.l.bf16 %v1858
  %v1860 = vunpack.i.h.bf16 %v1858
  %v1861 = vmax.f32 %v1859, %v1860
  %v1862 = vrot.slane %v1861, 4
  %v1863 = vmax.f32 %v1861, %v1862
  %v1864 = vrot.slane %v1863, 2
  %v1865 = vmax.f32 %v1863, %v1864
  %v1866 = vrot.slane %v1865, 1
  %v1867 = vmax.f32 %v1865, %v1866
  %v1868 = vpack.i.bf16 %v1867, %v1867
  %v1869 = vsel %vm779, %v620, 4286644096
  %v1870 = vunpack.i.l.bf16 %v1869
  %v1871 = vunpack.i.h.bf16 %v1869
  %v1872 = vmax.f32 %v1870, %v1871
  %v1873 = vrot.slane %v1872, 4
  %v1874 = vmax.f32 %v1872, %v1873
  %v1875 = vrot.slane %v1874, 2
  %v1876 = vmax.f32 %v1874, %v1875
  %v1877 = vrot.slane %v1876, 1
  %v1878 = vmax.f32 %v1876, %v1877
  %v1879 = vpack.i.bf16 %v1878, %v1878
  %v1880 = vsel %vm779, %v621, 4286644096
  %v1881 = vunpack.i.l.bf16 %v1880
  %v1882 = vunpack.i.h.bf16 %v1880
  %v1883 = vmax.f32 %v1881, %v1882
  %v1884 = vrot.slane %v1883, 4
  %v1885 = vmax.f32 %v1883, %v1884
  %v1886 = vrot.slane %v1885, 2
  %v1887 = vmax.f32 %v1885, %v1886
  %v1888 = vrot.slane %v1887, 1
  %v1889 = vmax.f32 %v1887, %v1888
  %v1890 = vpack.i.bf16 %v1889, %v1889
  %v1891 = vsel %vm779, %v622, 4286644096
  %v1892 = vunpack.i.l.bf16 %v1891
  %v1893 = vunpack.i.h.bf16 %v1891
  %v1894 = vmax.f32 %v1892, %v1893
  %v1895 = vrot.slane %v1894, 4
  %v1896 = vmax.f32 %v1894, %v1895
  %v1897 = vrot.slane %v1896, 2
  %v1898 = vmax.f32 %v1896, %v1897
  %v1899 = vrot.slane %v1898, 1
  %v1900 = vmax.f32 %v1898, %v1899
  %v1901 = vpack.i.bf16 %v1900, %v1900
  %v1902 = vsel %vm779, %v623, 4286644096
  %v1903 = vunpack.i.l.bf16 %v1902
  %v1904 = vunpack.i.h.bf16 %v1902
  %v1905 = vmax.f32 %v1903, %v1904
  %v1906 = vrot.slane %v1905, 4
  %v1907 = vmax.f32 %v1905, %v1906
  %v1908 = vrot.slane %v1907, 2
  %v1909 = vmax.f32 %v1907, %v1908
  %v1910 = vrot.slane %v1909, 1
  %v1911 = vmax.f32 %v1909, %v1910
  %v1912 = vpack.i.bf16 %v1911, %v1911
  %v1913 = vsel %vm779, %v624, 4286644096
  %v1914 = vunpack.i.l.bf16 %v1913
  %v1915 = vunpack.i.h.bf16 %v1913
  %v1916 = vmax.f32 %v1914, %v1915
  %v1917 = vrot.slane %v1916, 4
  %v1918 = vmax.f32 %v1916, %v1917
  %v1919 = vrot.slane %v1918, 2
  %v1920 = vmax.f32 %v1918, %v1919
  %v1921 = vrot.slane %v1920, 1
  %v1922 = vmax.f32 %v1920, %v1921
  %v1923 = vpack.i.bf16 %v1922, %v1922
  %v1924 = vsel %vm779, %v625, 4286644096
  %v1925 = vunpack.i.l.bf16 %v1924
  %v1926 = vunpack.i.h.bf16 %v1924
  %v1927 = vmax.f32 %v1925, %v1926
  %v1928 = vrot.slane %v1927, 4
  %v1929 = vmax.f32 %v1927, %v1928
  %v1930 = vrot.slane %v1929, 2
  %v1931 = vmax.f32 %v1929, %v1930
  %v1932 = vrot.slane %v1931, 1
  %v1933 = vmax.f32 %v1931, %v1932
  %v1934 = vpack.i.bf16 %v1933, %v1933
  %v1935 = vsel %vm779, %v626, 4286644096
  %v1936 = vunpack.i.l.bf16 %v1935
  %v1937 = vunpack.i.h.bf16 %v1935
  %v1938 = vmax.f32 %v1936, %v1937
  %v1939 = vrot.slane %v1938, 4
  %v1940 = vmax.f32 %v1938, %v1939
  %v1941 = vrot.slane %v1940, 2
  %v1942 = vmax.f32 %v1940, %v1941
  %v1943 = vrot.slane %v1942, 1
  %v1944 = vmax.f32 %v1942, %v1943
  %v1945 = vpack.i.bf16 %v1944, %v1944
  %v1946 = vsel %vm779, %v627, 4286644096
  %v1947 = vunpack.i.l.bf16 %v1946
  %v1948 = vunpack.i.h.bf16 %v1946
  %v1949 = vmax.f32 %v1947, %v1948
  %v1950 = vrot.slane %v1949, 4
  %v1951 = vmax.f32 %v1949, %v1950
  %v1952 = vrot.slane %v1951, 2
  %v1953 = vmax.f32 %v1951, %v1952
  %v1954 = vrot.slane %v1953, 1
  %v1955 = vmax.f32 %v1953, %v1954
  %v1956 = vpack.i.bf16 %v1955, %v1955
  %v1957 = vsel %vm779, %v628, 4286644096
  %v1958 = vunpack.i.l.bf16 %v1957
  %v1959 = vunpack.i.h.bf16 %v1957
  %v1960 = vmax.f32 %v1958, %v1959
  %v1961 = vrot.slane %v1960, 4
  %v1962 = vmax.f32 %v1960, %v1961
  %v1963 = vrot.slane %v1962, 2
  %v1964 = vmax.f32 %v1962, %v1963
  %v1965 = vrot.slane %v1964, 1
  %v1966 = vmax.f32 %v1964, %v1965
  %v1967 = vpack.i.bf16 %v1966, %v1966
  %v1968 = vsel %vm779, %v629, 4286644096
  %v1969 = vunpack.i.l.bf16 %v1968
  %v1970 = vunpack.i.h.bf16 %v1968
  %v1971 = vmax.f32 %v1969, %v1970
  %v1972 = vrot.slane %v1971, 4
  %v1973 = vmax.f32 %v1971, %v1972
  %v1974 = vrot.slane %v1973, 2
  %v1975 = vmax.f32 %v1973, %v1974
  %v1976 = vrot.slane %v1975, 1
  %v1977 = vmax.f32 %v1975, %v1976
  %v1978 = vpack.i.bf16 %v1977, %v1977
  %v1979 = vsel %vm779, %v630, 4286644096
  %v1980 = vunpack.i.l.bf16 %v1979
  %v1981 = vunpack.i.h.bf16 %v1979
  %v1982 = vmax.f32 %v1980, %v1981
  %v1983 = vrot.slane %v1982, 4
  %v1984 = vmax.f32 %v1982, %v1983
  %v1985 = vrot.slane %v1984, 2
  %v1986 = vmax.f32 %v1984, %v1985
  %v1987 = vrot.slane %v1986, 1
  %v1988 = vmax.f32 %v1986, %v1987
  %v1989 = vpack.i.bf16 %v1988, %v1988
  %v1990 = vsel %vm779, %v631, 4286644096
  %v1991 = vunpack.i.l.bf16 %v1990
  %v1992 = vunpack.i.h.bf16 %v1990
  %v1993 = vmax.f32 %v1991, %v1992
  %v1994 = vrot.slane %v1993, 4
  %v1995 = vmax.f32 %v1993, %v1994
  %v1996 = vrot.slane %v1995, 2
  %v1997 = vmax.f32 %v1995, %v1996
  %v1998 = vrot.slane %v1997, 1
  %v1999 = vmax.f32 %v1997, %v1998
  %v2000 = vpack.i.bf16 %v1999, %v1999
  %v2001 = vsel %vm779, %v632, 4286644096
  %v2002 = vunpack.i.l.bf16 %v2001
  %v2003 = vunpack.i.h.bf16 %v2001
  %v2004 = vmax.f32 %v2002, %v2003
  %v2005 = vrot.slane %v2004, 4
  %v2006 = vmax.f32 %v2004, %v2005
  %v2007 = vrot.slane %v2006, 2
  %v2008 = vmax.f32 %v2006, %v2007
  %v2009 = vrot.slane %v2008, 1
  %v2010 = vmax.f32 %v2008, %v2009
  %v2011 = vpack.i.bf16 %v2010, %v2010
  %v2012 = vsel %vm779, %v633, 4286644096
  %v2013 = vunpack.i.l.bf16 %v2012
  %v2014 = vunpack.i.h.bf16 %v2012
  %v2015 = vmax.f32 %v2013, %v2014
  %v2016 = vrot.slane %v2015, 4
  %v2017 = vmax.f32 %v2015, %v2016
  %v2018 = vrot.slane %v2017, 2
  %v2019 = vmax.f32 %v2017, %v2018
  %v2020 = vrot.slane %v2019, 1
  %v2021 = vmax.f32 %v2019, %v2020
  %v2022 = vpack.i.bf16 %v2021, %v2021
  %v2023 = vsel %vm779, %v634, 4286644096
  %v2024 = vunpack.i.l.bf16 %v2023
  %v2025 = vunpack.i.h.bf16 %v2023
  %v2026 = vmax.f32 %v2024, %v2025
  %v2027 = vrot.slane %v2026, 4
  %v2028 = vmax.f32 %v2026, %v2027
  %v2029 = vrot.slane %v2028, 2
  %v2030 = vmax.f32 %v2028, %v2029
  %v2031 = vrot.slane %v2030, 1
  %v2032 = vmax.f32 %v2030, %v2031
  %v2033 = vpack.i.bf16 %v2032, %v2032
  %v2034 = vsel %vm779, %v635, 4286644096
  %v2035 = vunpack.i.l.bf16 %v2034
  %v2036 = vunpack.i.h.bf16 %v2034
  %v2037 = vmax.f32 %v2035, %v2036
  %v2038 = vrot.slane %v2037, 4
  %v2039 = vmax.f32 %v2037, %v2038
  %v2040 = vrot.slane %v2039, 2
  %v2041 = vmax.f32 %v2039, %v2040
  %v2042 = vrot.slane %v2041, 1
  %v2043 = vmax.f32 %v2041, %v2042
  %v2044 = vpack.i.bf16 %v2043, %v2043
  %v2045 = vsel %vm779, %v636, 4286644096
  %v2046 = vunpack.i.l.bf16 %v2045
  %v2047 = vunpack.i.h.bf16 %v2045
  %v2048 = vmax.f32 %v2046, %v2047
  %v2049 = vrot.slane %v2048, 4
  %v2050 = vmax.f32 %v2048, %v2049
  %v2051 = vrot.slane %v2050, 2
  %v2052 = vmax.f32 %v2050, %v2051
  %v2053 = vrot.slane %v2052, 1
  %v2054 = vmax.f32 %v2052, %v2053
  %v2055 = vpack.i.bf16 %v2054, %v2054
  %v2056 = vsel %vm779, %v637, 4286644096
  %v2057 = vunpack.i.l.bf16 %v2056
  %v2058 = vunpack.i.h.bf16 %v2056
  %v2059 = vmax.f32 %v2057, %v2058
  %v2060 = vrot.slane %v2059, 4
  %v2061 = vmax.f32 %v2059, %v2060
  %v2062 = vrot.slane %v2061, 2
  %v2063 = vmax.f32 %v2061, %v2062
  %v2064 = vrot.slane %v2063, 1
  %v2065 = vmax.f32 %v2063, %v2064
  %v2066 = vpack.i.bf16 %v2065, %v2065
  %v2067 = vsel %vm779, %v638, 4286644096
  %v2068 = vunpack.i.l.bf16 %v2067
  %v2069 = vunpack.i.h.bf16 %v2067
  %v2070 = vmax.f32 %v2068, %v2069
  %v2071 = vrot.slane %v2070, 4
  %v2072 = vmax.f32 %v2070, %v2071
  %v2073 = vrot.slane %v2072, 2
  %v2074 = vmax.f32 %v2072, %v2073
  %v2075 = vrot.slane %v2074, 1
  %v2076 = vmax.f32 %v2074, %v2075
  %v2077 = vpack.i.bf16 %v2076, %v2076
  %v2078 = vsel %vm779, %v639, 4286644096
  %v2079 = vunpack.i.l.bf16 %v2078
  %v2080 = vunpack.i.h.bf16 %v2078
  %v2081 = vmax.f32 %v2079, %v2080
  %v2082 = vrot.slane %v2081, 4
  %v2083 = vmax.f32 %v2081, %v2082
  %v2084 = vrot.slane %v2083, 2
  %v2085 = vmax.f32 %v2083, %v2084
  %v2086 = vrot.slane %v2085, 1
  %v2087 = vmax.f32 %v2085, %v2086
  %v2088 = vpack.i.bf16 %v2087, %v2087
  %v2089 = vsel %vm779, %v640, 4286644096
  %v2090 = vunpack.i.l.bf16 %v2089
  %v2091 = vunpack.i.h.bf16 %v2089
  %v2092 = vmax.f32 %v2090, %v2091
  %v2093 = vrot.slane %v2092, 4
  %v2094 = vmax.f32 %v2092, %v2093
  %v2095 = vrot.slane %v2094, 2
  %v2096 = vmax.f32 %v2094, %v2095
  %v2097 = vrot.slane %v2096, 1
  %v2098 = vmax.f32 %v2096, %v2097
  %v2099 = vpack.i.bf16 %v2098, %v2098
  %v2100 = vsel %vm779, %v641, 4286644096
  %v2101 = vunpack.i.l.bf16 %v2100
  %v2102 = vunpack.i.h.bf16 %v2100
  %v2103 = vmax.f32 %v2101, %v2102
  %v2104 = vrot.slane %v2103, 4
  %v2105 = vmax.f32 %v2103, %v2104
  %v2106 = vrot.slane %v2105, 2
  %v2107 = vmax.f32 %v2105, %v2106
  %v2108 = vrot.slane %v2107, 1
  %v2109 = vmax.f32 %v2107, %v2108
  %v2110 = vpack.i.bf16 %v2109, %v2109
  %v2111 = vsel %vm779, %v642, 4286644096
  %v2112 = vunpack.i.l.bf16 %v2111
  %v2113 = vunpack.i.h.bf16 %v2111
  %v2114 = vmax.f32 %v2112, %v2113
  %v2115 = vrot.slane %v2114, 4
  %v2116 = vmax.f32 %v2114, %v2115
  %v2117 = vrot.slane %v2116, 2
  %v2118 = vmax.f32 %v2116, %v2117
  %v2119 = vrot.slane %v2118, 1
  %v2120 = vmax.f32 %v2118, %v2119
  %v2121 = vpack.i.bf16 %v2120, %v2120
  %v2122 = vsel %vm779, %v643, 4286644096
  %v2123 = vunpack.i.l.bf16 %v2122
  %v2124 = vunpack.i.h.bf16 %v2122
  %v2125 = vmax.f32 %v2123, %v2124
  %v2126 = vrot.slane %v2125, 4
  %v2127 = vmax.f32 %v2125, %v2126
  %v2128 = vrot.slane %v2127, 2
  %v2129 = vmax.f32 %v2127, %v2128
  %v2130 = vrot.slane %v2129, 1
  %v2131 = vmax.f32 %v2129, %v2130
  %v2132 = vpack.i.bf16 %v2131, %v2131
  %v2133 = vsel %vm779, %v644, 4286644096
  %v2134 = vunpack.i.l.bf16 %v2133
  %v2135 = vunpack.i.h.bf16 %v2133
  %v2136 = vmax.f32 %v2134, %v2135
  %v2137 = vrot.slane %v2136, 4
  %v2138 = vmax.f32 %v2136, %v2137
  %v2139 = vrot.slane %v2138, 2
  %v2140 = vmax.f32 %v2138, %v2139
  %v2141 = vrot.slane %v2140, 1
  %v2142 = vmax.f32 %v2140, %v2141
  %v2143 = vpack.i.bf16 %v2142, %v2142
  %v2144 = vsel %vm779, %v645, 4286644096
  %v2145 = vunpack.i.l.bf16 %v2144
  %v2146 = vunpack.i.h.bf16 %v2144
  %v2147 = vmax.f32 %v2145, %v2146
  %v2148 = vrot.slane %v2147, 4
  %v2149 = vmax.f32 %v2147, %v2148
  %v2150 = vrot.slane %v2149, 2
  %v2151 = vmax.f32 %v2149, %v2150
  %v2152 = vrot.slane %v2151, 1
  %v2153 = vmax.f32 %v2151, %v2152
  %v2154 = vpack.i.bf16 %v2153, %v2153
  %v2155 = vsel %vm779, %v646, 4286644096
  %v2156 = vunpack.i.l.bf16 %v2155
  %v2157 = vunpack.i.h.bf16 %v2155
  %v2158 = vmax.f32 %v2156, %v2157
  %v2159 = vrot.slane %v2158, 4
  %v2160 = vmax.f32 %v2158, %v2159
  %v2161 = vrot.slane %v2160, 2
  %v2162 = vmax.f32 %v2160, %v2161
  %v2163 = vrot.slane %v2162, 1
  %v2164 = vmax.f32 %v2162, %v2163
  %v2165 = vpack.i.bf16 %v2164, %v2164
  %v2166 = vsel %vm779, %v647, 4286644096
  %v2167 = vunpack.i.l.bf16 %v2166
  %v2168 = vunpack.i.h.bf16 %v2166
  %v2169 = vmax.f32 %v2167, %v2168
  %v2170 = vrot.slane %v2169, 4
  %v2171 = vmax.f32 %v2169, %v2170
  %v2172 = vrot.slane %v2171, 2
  %v2173 = vmax.f32 %v2171, %v2172
  %v2174 = vrot.slane %v2173, 1
  %v2175 = vmax.f32 %v2173, %v2174
  %v2176 = vpack.i.bf16 %v2175, %v2175
  %v2177 = vsel %vm779, %v648, 4286644096
  %v2178 = vunpack.i.l.bf16 %v2177
  %v2179 = vunpack.i.h.bf16 %v2177
  %v2180 = vmax.f32 %v2178, %v2179
  %v2181 = vrot.slane %v2180, 4
  %v2182 = vmax.f32 %v2180, %v2181
  %v2183 = vrot.slane %v2182, 2
  %v2184 = vmax.f32 %v2182, %v2183
  %v2185 = vrot.slane %v2184, 1
  %v2186 = vmax.f32 %v2184, %v2185
  %v2187 = vpack.i.bf16 %v2186, %v2186
  %v2316 = vcombine.low %v790, %v801
  %v2317 = vcombine.low %v812, %v823
  %v2318 = vcombine.low %v834, %v845
  %v2319 = vcombine.low %v856, %v867
  %v2321 = vunpack.c.l.s4 1966171168
  %v2322 = vunpack.c.0.s8 %v2321
  %v2323 = vlaneseq
  %v2324 = vshrl.u32 %v2323, 7
  %v2325 = vsub.s32 %v2322, %v2324
  %v2326 = vrot.slane %v2316, %v2325
  %v2328 = vunpack.c.l.s4 1966171168
  %v2329 = vunpack.c.0.s8 %v2328
  %v2330 = vlaneseq
  %v2331 = vshrl.u32 %v2330, 7
  %v2332 = vsub.s32 %v2329, %v2331
  %v2333 = vrot.slane %v2317, %v2332
  %v2335 = vunpack.c.l.s4 1966171168
  %v2336 = vunpack.c.0.s8 %v2335
  %v2337 = vlaneseq
  %v2338 = vshrl.u32 %v2337, 7
  %v2339 = vsub.s32 %v2336, %v2338
  %v2340 = vrot.slane %v2318, %v2339
  %v2342 = vunpack.c.l.s4 1966171168
  %v2343 = vunpack.c.0.s8 %v2342
  %v2344 = vlaneseq
  %v2345 = vshrl.u32 %v2344, 7
  %v2346 = vsub.s32 %v2343, %v2345
  %v2347 = vrot.slane %v2319, %v2346
  %v2348 = vcombine.low %v2326, %v2333
  %v2349 = vcombine.low %v2340, %v2347
  %v2351 = vunpack.c.l.s4 1966171168
  %v2352 = vunpack.c.0.s8 %v2351
  %v2353 = vlaneseq
  %v2354 = vshrl.u32 %v2353, 7
  %v2355 = vsub.s32 %v2352, %v2354
  %v2356 = vrot.slane %v2348, %v2355
  %v2358 = vunpack.c.l.s4 1966171168
  %v2359 = vunpack.c.0.s8 %v2358
  %v2360 = vlaneseq
  %v2361 = vshrl.u32 %v2360, 7
  %v2362 = vsub.s32 %v2359, %v2361
  %v2363 = vrot.slane %v2349, %v2362
  %v2364 = vcombine.low %v2356, %v2363
  %v2365 = vcombine.low %v878, %v889
  %v2366 = vcombine.low %v900, %v911
  %v2367 = vcombine.low %v922, %v933
  %v2368 = vcombine.low %v944, %v955
  %v2370 = vunpack.c.l.s4 1966171168
  %v2371 = vunpack.c.0.s8 %v2370
  %v2372 = vlaneseq
  %v2373 = vshrl.u32 %v2372, 7
  %v2374 = vsub.s32 %v2371, %v2373
  %v2375 = vrot.slane %v2365, %v2374
  %v2377 = vunpack.c.l.s4 1966171168
  %v2378 = vunpack.c.0.s8 %v2377
  %v2379 = vlaneseq
  %v2380 = vshrl.u32 %v2379, 7
  %v2381 = vsub.s32 %v2378, %v2380
  %v2382 = vrot.slane %v2366, %v2381
  %v2384 = vunpack.c.l.s4 1966171168
  %v2385 = vunpack.c.0.s8 %v2384
  %v2386 = vlaneseq
  %v2387 = vshrl.u32 %v2386, 7
  %v2388 = vsub.s32 %v2385, %v2387
  %v2389 = vrot.slane %v2367, %v2388
  %v2391 = vunpack.c.l.s4 1966171168
  %v2392 = vunpack.c.0.s8 %v2391
  %v2393 = vlaneseq
  %v2394 = vshrl.u32 %v2393, 7
  %v2395 = vsub.s32 %v2392, %v2394
  %v2396 = vrot.slane %v2368, %v2395
  %v2397 = vcombine.low %v2375, %v2382
  %v2398 = vcombine.low %v2389, %v2396
  %v2400 = vunpack.c.l.s4 1966171168
  %v2401 = vunpack.c.0.s8 %v2400
  %v2402 = vlaneseq
  %v2403 = vshrl.u32 %v2402, 7
  %v2404 = vsub.s32 %v2401, %v2403
  %v2405 = vrot.slane %v2397, %v2404
  %v2407 = vunpack.c.l.s4 1966171168
  %v2408 = vunpack.c.0.s8 %v2407
  %v2409 = vlaneseq
  %v2410 = vshrl.u32 %v2409, 7
  %v2411 = vsub.s32 %v2408, %v2410
  %v2412 = vrot.slane %v2398, %v2411
  %v2413 = vcombine.low %v2405, %v2412
  %v2414 = vcombine.low %v966, %v977
  %v2415 = vcombine.low %v988, %v999
  %v2416 = vcombine.low %v1010, %v1021
  %v2417 = vcombine.low %v1032, %v1043
  %v2419 = vunpack.c.l.s4 1966171168
  %v2420 = vunpack.c.0.s8 %v2419
  %v2421 = vlaneseq
  %v2422 = vshrl.u32 %v2421, 7
  %v2423 = vsub.s32 %v2420, %v2422
  %v2424 = vrot.slane %v2414, %v2423
  %v2426 = vunpack.c.l.s4 1966171168
  %v2427 = vunpack.c.0.s8 %v2426
  %v2428 = vlaneseq
  %v2429 = vshrl.u32 %v2428, 7
  %v2430 = vsub.s32 %v2427, %v2429
  %v2431 = vrot.slane %v2415, %v2430
  %v2433 = vunpack.c.l.s4 1966171168
  %v2434 = vunpack.c.0.s8 %v2433
  %v2435 = vlaneseq
  %v2436 = vshrl.u32 %v2435, 7
  %v2437 = vsub.s32 %v2434, %v2436
  %v2438 = vrot.slane %v2416, %v2437
  %v2440 = vunpack.c.l.s4 1966171168
  %v2441 = vunpack.c.0.s8 %v2440
  %v2442 = vlaneseq
  %v2443 = vshrl.u32 %v2442, 7
  %v2444 = vsub.s32 %v2441, %v2443
  %v2445 = vrot.slane %v2417, %v2444
  %v2446 = vcombine.low %v2424, %v2431
  %v2447 = vcombine.low %v2438, %v2445
  %v2449 = vunpack.c.l.s4 1966171168
  %v2450 = vunpack.c.0.s8 %v2449
  %v2451 = vlaneseq
  %v2452 = vshrl.u32 %v2451, 7
  %v2453 = vsub.s32 %v2450, %v2452
  %v2454 = vrot.slane %v2446, %v2453
  %v2456 = vunpack.c.l.s4 1966171168
  %v2457 = vunpack.c.0.s8 %v2456
  %v2458 = vlaneseq
  %v2459 = vshrl.u32 %v2458, 7
  %v2460 = vsub.s32 %v2457, %v2459
  %v2461 = vrot.slane %v2447, %v2460
  %v2462 = vcombine.low %v2454, %v2461
  %v2463 = vcombine.low %v1054, %v1065
  %v2464 = vcombine.low %v1076, %v1087
  %v2465 = vcombine.low %v1098, %v1109
  %v2466 = vcombine.low %v1120, %v1131
  %v2468 = vunpack.c.l.s4 1966171168
  %v2469 = vunpack.c.0.s8 %v2468
  %v2470 = vlaneseq
  %v2471 = vshrl.u32 %v2470, 7
  %v2472 = vsub.s32 %v2469, %v2471
  %v2473 = vrot.slane %v2463, %v2472
  %v2475 = vunpack.c.l.s4 1966171168
  %v2476 = vunpack.c.0.s8 %v2475
  %v2477 = vlaneseq
  %v2478 = vshrl.u32 %v2477, 7
  %v2479 = vsub.s32 %v2476, %v2478
  %v2480 = vrot.slane %v2464, %v2479
  %v2482 = vunpack.c.l.s4 1966171168
  %v2483 = vunpack.c.0.s8 %v2482
  %v2484 = vlaneseq
  %v2485 = vshrl.u32 %v2484, 7
  %v2486 = vsub.s32 %v2483, %v2485
  %v2487 = vrot.slane %v2465, %v2486
  %v2489 = vunpack.c.l.s4 1966171168
  %v2490 = vunpack.c.0.s8 %v2489
  %v2491 = vlaneseq
  %v2492 = vshrl.u32 %v2491, 7
  %v2493 = vsub.s32 %v2490, %v2492
  %v2494 = vrot.slane %v2466, %v2493
  %v2495 = vcombine.low %v2473, %v2480
  %v2496 = vcombine.low %v2487, %v2494
  %v2498 = vunpack.c.l.s4 1966171168
  %v2499 = vunpack.c.0.s8 %v2498
  %v2500 = vlaneseq
  %v2501 = vshrl.u32 %v2500, 7
  %v2502 = vsub.s32 %v2499, %v2501
  %v2503 = vrot.slane %v2495, %v2502
  %v2505 = vunpack.c.l.s4 1966171168
  %v2506 = vunpack.c.0.s8 %v2505
  %v2507 = vlaneseq
  %v2508 = vshrl.u32 %v2507, 7
  %v2509 = vsub.s32 %v2506, %v2508
  %v2510 = vrot.slane %v2496, %v2509
  %v2511 = vcombine.low %v2503, %v2510
  %v2512 = vcombine.low %v1142, %v1153
  %v2513 = vcombine.low %v1164, %v1175
  %v2514 = vcombine.low %v1186, %v1197
  %v2515 = vcombine.low %v1208, %v1219
  %v2517 = vunpack.c.l.s4 1966171168
  %v2518 = vunpack.c.0.s8 %v2517
  %v2519 = vlaneseq
  %v2520 = vshrl.u32 %v2519, 7
  %v2521 = vsub.s32 %v2518, %v2520
  %v2522 = vrot.slane %v2512, %v2521
  %v2524 = vunpack.c.l.s4 1966171168
  %v2525 = vunpack.c.0.s8 %v2524
  %v2526 = vlaneseq
  %v2527 = vshrl.u32 %v2526, 7
  %v2528 = vsub.s32 %v2525, %v2527
  %v2529 = vrot.slane %v2513, %v2528
  %v2531 = vunpack.c.l.s4 1966171168
  %v2532 = vunpack.c.0.s8 %v2531
  %v2533 = vlaneseq
  %v2534 = vshrl.u32 %v2533, 7
  %v2535 = vsub.s32 %v2532, %v2534
  %v2536 = vrot.slane %v2514, %v2535
  %v2538 = vunpack.c.l.s4 1966171168
  %v2539 = vunpack.c.0.s8 %v2538
  %v2540 = vlaneseq
  %v2541 = vshrl.u32 %v2540, 7
  %v2542 = vsub.s32 %v2539, %v2541
  %v2543 = vrot.slane %v2515, %v2542
  %v2544 = vcombine.low %v2522, %v2529
  %v2545 = vcombine.low %v2536, %v2543
  %v2547 = vunpack.c.l.s4 1966171168
  %v2548 = vunpack.c.0.s8 %v2547
  %v2549 = vlaneseq
  %v2550 = vshrl.u32 %v2549, 7
  %v2551 = vsub.s32 %v2548, %v2550
  %v2552 = vrot.slane %v2544, %v2551
  %v2554 = vunpack.c.l.s4 1966171168
  %v2555 = vunpack.c.0.s8 %v2554
  %v2556 = vlaneseq
  %v2557 = vshrl.u32 %v2556, 7
  %v2558 = vsub.s32 %v2555, %v2557
  %v2559 = vrot.slane %v2545, %v2558
  %v2560 = vcombine.low %v2552, %v2559
  %v2561 = vcombine.low %v1230, %v1241
  %v2562 = vcombine.low %v1252, %v1263
  %v2563 = vcombine.low %v1274, %v1285
  %v2564 = vcombine.low %v1296, %v1307
  %v2566 = vunpack.c.l.s4 1966171168
  %v2567 = vunpack.c.0.s8 %v2566
  %v2568 = vlaneseq
  %v2569 = vshrl.u32 %v2568, 7
  %v2570 = vsub.s32 %v2567, %v2569
  %v2571 = vrot.slane %v2561, %v2570
  %v2573 = vunpack.c.l.s4 1966171168
  %v2574 = vunpack.c.0.s8 %v2573
  %v2575 = vlaneseq
  %v2576 = vshrl.u32 %v2575, 7
  %v2577 = vsub.s32 %v2574, %v2576
  %v2578 = vrot.slane %v2562, %v2577
  %v2580 = vunpack.c.l.s4 1966171168
  %v2581 = vunpack.c.0.s8 %v2580
  %v2582 = vlaneseq
  %v2583 = vshrl.u32 %v2582, 7
  %v2584 = vsub.s32 %v2581, %v2583
  %v2585 = vrot.slane %v2563, %v2584
  %v2587 = vunpack.c.l.s4 1966171168
  %v2588 = vunpack.c.0.s8 %v2587
  %v2589 = vlaneseq
  %v2590 = vshrl.u32 %v2589, 7
  %v2591 = vsub.s32 %v2588, %v2590
  %v2592 = vrot.slane %v2564, %v2591
  %v2593 = vcombine.low %v2571, %v2578
  %v2594 = vcombine.low %v2585, %v2592
  %v2596 = vunpack.c.l.s4 1966171168
  %v2597 = vunpack.c.0.s8 %v2596
  %v2598 = vlaneseq
  %v2599 = vshrl.u32 %v2598, 7
  %v2600 = vsub.s32 %v2597, %v2599
  %v2601 = vrot.slane %v2593, %v2600
  %v2603 = vunpack.c.l.s4 1966171168
  %v2604 = vunpack.c.0.s8 %v2603
  %v2605 = vlaneseq
  %v2606 = vshrl.u32 %v2605, 7
  %v2607 = vsub.s32 %v2604, %v2606
  %v2608 = vrot.slane %v2594, %v2607
  %v2609 = vcombine.low %v2601, %v2608
  %v2610 = vcombine.low %v1318, %v1329
  %v2611 = vcombine.low %v1340, %v1351
  %v2612 = vcombine.low %v1362, %v1373
  %v2613 = vcombine.low %v1384, %v1395
  %v2615 = vunpack.c.l.s4 1966171168
  %v2616 = vunpack.c.0.s8 %v2615
  %v2617 = vlaneseq
  %v2618 = vshrl.u32 %v2617, 7
  %v2619 = vsub.s32 %v2616, %v2618
  %v2620 = vrot.slane %v2610, %v2619
  %v2622 = vunpack.c.l.s4 1966171168
  %v2623 = vunpack.c.0.s8 %v2622
  %v2624 = vlaneseq
  %v2625 = vshrl.u32 %v2624, 7
  %v2626 = vsub.s32 %v2623, %v2625
  %v2627 = vrot.slane %v2611, %v2626
  %v2629 = vunpack.c.l.s4 1966171168
  %v2630 = vunpack.c.0.s8 %v2629
  %v2631 = vlaneseq
  %v2632 = vshrl.u32 %v2631, 7
  %v2633 = vsub.s32 %v2630, %v2632
  %v2634 = vrot.slane %v2612, %v2633
  %v2636 = vunpack.c.l.s4 1966171168
  %v2637 = vunpack.c.0.s8 %v2636
  %v2638 = vlaneseq
  %v2639 = vshrl.u32 %v2638, 7
  %v2640 = vsub.s32 %v2637, %v2639
  %v2641 = vrot.slane %v2613, %v2640
  %v2642 = vcombine.low %v2620, %v2627
  %v2643 = vcombine.low %v2634, %v2641
  %v2645 = vunpack.c.l.s4 1966171168
  %v2646 = vunpack.c.0.s8 %v2645
  %v2647 = vlaneseq
  %v2648 = vshrl.u32 %v2647, 7
  %v2649 = vsub.s32 %v2646, %v2648
  %v2650 = vrot.slane %v2642, %v2649
  %v2652 = vunpack.c.l.s4 1966171168
  %v2653 = vunpack.c.0.s8 %v2652
  %v2654 = vlaneseq
  %v2655 = vshrl.u32 %v2654, 7
  %v2656 = vsub.s32 %v2653, %v2655
  %v2657 = vrot.slane %v2643, %v2656
  %v2658 = vcombine.low %v2650, %v2657
  %v2659 = vcombine.low %v1406, %v1417
  %v2660 = vcombine.low %v1428, %v1439
  %v2661 = vcombine.low %v1450, %v1461
  %v2662 = vcombine.low %v1472, %v1483
  %v2664 = vunpack.c.l.s4 1966171168
  %v2665 = vunpack.c.0.s8 %v2664
  %v2666 = vlaneseq
  %v2667 = vshrl.u32 %v2666, 7
  %v2668 = vsub.s32 %v2665, %v2667
  %v2669 = vrot.slane %v2659, %v2668
  %v2671 = vunpack.c.l.s4 1966171168
  %v2672 = vunpack.c.0.s8 %v2671
  %v2673 = vlaneseq
  %v2674 = vshrl.u32 %v2673, 7
  %v2675 = vsub.s32 %v2672, %v2674
  %v2676 = vrot.slane %v2660, %v2675
  %v2678 = vunpack.c.l.s4 1966171168
  %v2679 = vunpack.c.0.s8 %v2678
  %v2680 = vlaneseq
  %v2681 = vshrl.u32 %v2680, 7
  %v2682 = vsub.s32 %v2679, %v2681
  %v2683 = vrot.slane %v2661, %v2682
  %v2685 = vunpack.c.l.s4 1966171168
  %v2686 = vunpack.c.0.s8 %v2685
  %v2687 = vlaneseq
  %v2688 = vshrl.u32 %v2687, 7
  %v2689 = vsub.s32 %v2686, %v2688
  %v2690 = vrot.slane %v2662, %v2689
  %v2691 = vcombine.low %v2669, %v2676
  %v2692 = vcombine.low %v2683, %v2690
  %v2694 = vunpack.c.l.s4 1966171168
  %v2695 = vunpack.c.0.s8 %v2694
  %v2696 = vlaneseq
  %v2697 = vshrl.u32 %v2696, 7
  %v2698 = vsub.s32 %v2695, %v2697
  %v2699 = vrot.slane %v2691, %v2698
  %v2701 = vunpack.c.l.s4 1966171168
  %v2702 = vunpack.c.0.s8 %v2701
  %v2703 = vlaneseq
  %v2704 = vshrl.u32 %v2703, 7
  %v2705 = vsub.s32 %v2702, %v2704
  %v2706 = vrot.slane %v2692, %v2705
  %v2707 = vcombine.low %v2699, %v2706
  %v2708 = vcombine.low %v1494, %v1505
  %v2709 = vcombine.low %v1516, %v1527
  %v2710 = vcombine.low %v1538, %v1549
  %v2711 = vcombine.low %v1560, %v1571
  %v2713 = vunpack.c.l.s4 1966171168
  %v2714 = vunpack.c.0.s8 %v2713
  %v2715 = vlaneseq
  %v2716 = vshrl.u32 %v2715, 7
  %v2717 = vsub.s32 %v2714, %v2716
  %v2718 = vrot.slane %v2708, %v2717
  %v2720 = vunpack.c.l.s4 1966171168
  %v2721 = vunpack.c.0.s8 %v2720
  %v2722 = vlaneseq
  %v2723 = vshrl.u32 %v2722, 7
  %v2724 = vsub.s32 %v2721, %v2723
  %v2725 = vrot.slane %v2709, %v2724
  %v2727 = vunpack.c.l.s4 1966171168
  %v2728 = vunpack.c.0.s8 %v2727
  %v2729 = vlaneseq
  %v2730 = vshrl.u32 %v2729, 7
  %v2731 = vsub.s32 %v2728, %v2730
  %v2732 = vrot.slane %v2710, %v2731
  %v2734 = vunpack.c.l.s4 1966171168
  %v2735 = vunpack.c.0.s8 %v2734
  %v2736 = vlaneseq
  %v2737 = vshrl.u32 %v2736, 7
  %v2738 = vsub.s32 %v2735, %v2737
  %v2739 = vrot.slane %v2711, %v2738
  %v2740 = vcombine.low %v2718, %v2725
  %v2741 = vcombine.low %v2732, %v2739
  %v2743 = vunpack.c.l.s4 1966171168
  %v2744 = vunpack.c.0.s8 %v2743
  %v2745 = vlaneseq
  %v2746 = vshrl.u32 %v2745, 7
  %v2747 = vsub.s32 %v2744, %v2746
  %v2748 = vrot.slane %v2740, %v2747
  %v2750 = vunpack.c.l.s4 1966171168
  %v2751 = vunpack.c.0.s8 %v2750
  %v2752 = vlaneseq
  %v2753 = vshrl.u32 %v2752, 7
  %v2754 = vsub.s32 %v2751, %v2753
  %v2755 = vrot.slane %v2741, %v2754
  %v2756 = vcombine.low %v2748, %v2755
  %v2757 = vcombine.low %v1582, %v1593
  %v2758 = vcombine.low %v1604, %v1615
  %v2759 = vcombine.low %v1626, %v1637
  %v2760 = vcombine.low %v1648, %v1659
  %v2762 = vunpack.c.l.s4 1966171168
  %v2763 = vunpack.c.0.s8 %v2762
  %v2764 = vlaneseq
  %v2765 = vshrl.u32 %v2764, 7
  %v2766 = vsub.s32 %v2763, %v2765
  %v2767 = vrot.slane %v2757, %v2766
  %v2769 = vunpack.c.l.s4 1966171168
  %v2770 = vunpack.c.0.s8 %v2769
  %v2771 = vlaneseq
  %v2772 = vshrl.u32 %v2771, 7
  %v2773 = vsub.s32 %v2770, %v2772
  %v2774 = vrot.slane %v2758, %v2773
  %v2776 = vunpack.c.l.s4 1966171168
  %v2777 = vunpack.c.0.s8 %v2776
  %v2778 = vlaneseq
  %v2779 = vshrl.u32 %v2778, 7
  %v2780 = vsub.s32 %v2777, %v2779
  %v2781 = vrot.slane %v2759, %v2780
  %v2783 = vunpack.c.l.s4 1966171168
  %v2784 = vunpack.c.0.s8 %v2783
  %v2785 = vlaneseq
  %v2786 = vshrl.u32 %v2785, 7
  %v2787 = vsub.s32 %v2784, %v2786
  %v2788 = vrot.slane %v2760, %v2787
  %v2789 = vcombine.low %v2767, %v2774
  %v2790 = vcombine.low %v2781, %v2788
  %v2792 = vunpack.c.l.s4 1966171168
  %v2793 = vunpack.c.0.s8 %v2792
  %v2794 = vlaneseq
  %v2795 = vshrl.u32 %v2794, 7
  %v2796 = vsub.s32 %v2793, %v2795
  %v2797 = vrot.slane %v2789, %v2796
  %v2799 = vunpack.c.l.s4 1966171168
  %v2800 = vunpack.c.0.s8 %v2799
  %v2801 = vlaneseq
  %v2802 = vshrl.u32 %v2801, 7
  %v2803 = vsub.s32 %v2800, %v2802
  %v2804 = vrot.slane %v2790, %v2803
  %v2805 = vcombine.low %v2797, %v2804
  %v2806 = vcombine.low %v1670, %v1681
  %v2807 = vcombine.low %v1692, %v1703
  %v2808 = vcombine.low %v1714, %v1725
  %v2809 = vcombine.low %v1736, %v1747
  %v2811 = vunpack.c.l.s4 1966171168
  %v2812 = vunpack.c.0.s8 %v2811
  %v2813 = vlaneseq
  %v2814 = vshrl.u32 %v2813, 7
  %v2815 = vsub.s32 %v2812, %v2814
  %v2816 = vrot.slane %v2806, %v2815
  %v2818 = vunpack.c.l.s4 1966171168
  %v2819 = vunpack.c.0.s8 %v2818
  %v2820 = vlaneseq
  %v2821 = vshrl.u32 %v2820, 7
  %v2822 = vsub.s32 %v2819, %v2821
  %v2823 = vrot.slane %v2807, %v2822
  %v2825 = vunpack.c.l.s4 1966171168
  %v2826 = vunpack.c.0.s8 %v2825
  %v2827 = vlaneseq
  %v2828 = vshrl.u32 %v2827, 7
  %v2829 = vsub.s32 %v2826, %v2828
  %v2830 = vrot.slane %v2808, %v2829
  %v2832 = vunpack.c.l.s4 1966171168
  %v2833 = vunpack.c.0.s8 %v2832
  %v2834 = vlaneseq
  %v2835 = vshrl.u32 %v2834, 7
  %v2836 = vsub.s32 %v2833, %v2835
  %v2837 = vrot.slane %v2809, %v2836
  %v2838 = vcombine.low %v2816, %v2823
  %v2839 = vcombine.low %v2830, %v2837
  %v2841 = vunpack.c.l.s4 1966171168
  %v2842 = vunpack.c.0.s8 %v2841
  %v2843 = vlaneseq
  %v2844 = vshrl.u32 %v2843, 7
  %v2845 = vsub.s32 %v2842, %v2844
  %v2846 = vrot.slane %v2838, %v2845
  %v2848 = vunpack.c.l.s4 1966171168
  %v2849 = vunpack.c.0.s8 %v2848
  %v2850 = vlaneseq
  %v2851 = vshrl.u32 %v2850, 7
  %v2852 = vsub.s32 %v2849, %v2851
  %v2853 = vrot.slane %v2839, %v2852
  %v2854 = vcombine.low %v2846, %v2853
  %v2855 = vcombine.low %v1758, %v1769
  %v2856 = vcombine.low %v1780, %v1791
  %v2857 = vcombine.low %v1802, %v1813
  %v2858 = vcombine.low %v1824, %v1835
  %v2860 = vunpack.c.l.s4 1966171168
  %v2861 = vunpack.c.0.s8 %v2860
  %v2862 = vlaneseq
  %v2863 = vshrl.u32 %v2862, 7
  %v2864 = vsub.s32 %v2861, %v2863
  %v2865 = vrot.slane %v2855, %v2864
  %v2867 = vunpack.c.l.s4 1966171168
  %v2868 = vunpack.c.0.s8 %v2867
  %v2869 = vlaneseq
  %v2870 = vshrl.u32 %v2869, 7
  %v2871 = vsub.s32 %v2868, %v2870
  %v2872 = vrot.slane %v2856, %v2871
  %v2874 = vunpack.c.l.s4 1966171168
  %v2875 = vunpack.c.0.s8 %v2874
  %v2876 = vlaneseq
  %v2877 = vshrl.u32 %v2876, 7
  %v2878 = vsub.s32 %v2875, %v2877
  %v2879 = vrot.slane %v2857, %v2878
  %v2881 = vunpack.c.l.s4 1966171168
  %v2882 = vunpack.c.0.s8 %v2881
  %v2883 = vlaneseq
  %v2884 = vshrl.u32 %v2883, 7
  %v2885 = vsub.s32 %v2882, %v2884
  %v2886 = vrot.slane %v2858, %v2885
  %v2887 = vcombine.low %v2865, %v2872
  %v2888 = vcombine.low %v2879, %v2886
  %v2890 = vunpack.c.l.s4 1966171168
  %v2891 = vunpack.c.0.s8 %v2890
  %v2892 = vlaneseq
  %v2893 = vshrl.u32 %v2892, 7
  %v2894 = vsub.s32 %v2891, %v2893
  %v2895 = vrot.slane %v2887, %v2894
  %v2897 = vunpack.c.l.s4 1966171168
  %v2898 = vunpack.c.0.s8 %v2897
  %v2899 = vlaneseq
  %v2900 = vshrl.u32 %v2899, 7
  %v2901 = vsub.s32 %v2898, %v2900
  %v2902 = vrot.slane %v2888, %v2901
  %v2903 = vcombine.low %v2895, %v2902
  %v2904 = vcombine.low %v1846, %v1857
  %v2905 = vcombine.low %v1868, %v1879
  %v2906 = vcombine.low %v1890, %v1901
  %v2907 = vcombine.low %v1912, %v1923
  %v2909 = vunpack.c.l.s4 1966171168
  %v2910 = vunpack.c.0.s8 %v2909
  %v2911 = vlaneseq
  %v2912 = vshrl.u32 %v2911, 7
  %v2913 = vsub.s32 %v2910, %v2912
  %v2914 = vrot.slane %v2904, %v2913
  %v2916 = vunpack.c.l.s4 1966171168
  %v2917 = vunpack.c.0.s8 %v2916
  %v2918 = vlaneseq
  %v2919 = vshrl.u32 %v2918, 7
  %v2920 = vsub.s32 %v2917, %v2919
  %v2921 = vrot.slane %v2905, %v2920
  %v2923 = vunpack.c.l.s4 1966171168
  %v2924 = vunpack.c.0.s8 %v2923
  %v2925 = vlaneseq
  %v2926 = vshrl.u32 %v2925, 7
  %v2927 = vsub.s32 %v2924, %v2926
  %v2928 = vrot.slane %v2906, %v2927
  %v2930 = vunpack.c.l.s4 1966171168
  %v2931 = vunpack.c.0.s8 %v2930
  %v2932 = vlaneseq
  %v2933 = vshrl.u32 %v2932, 7
  %v2934 = vsub.s32 %v2931, %v2933
  %v2935 = vrot.slane %v2907, %v2934
  %v2936 = vcombine.low %v2914, %v2921
  %v2937 = vcombine.low %v2928, %v2935
  %v2939 = vunpack.c.l.s4 1966171168
  %v2940 = vunpack.c.0.s8 %v2939
  %v2941 = vlaneseq
  %v2942 = vshrl.u32 %v2941, 7
  %v2943 = vsub.s32 %v2940, %v2942
  %v2944 = vrot.slane %v2936, %v2943
  %v2946 = vunpack.c.l.s4 1966171168
  %v2947 = vunpack.c.0.s8 %v2946
  %v2948 = vlaneseq
  %v2949 = vshrl.u32 %v2948, 7
  %v2950 = vsub.s32 %v2947, %v2949
  %v2951 = vrot.slane %v2937, %v2950
  %v2952 = vcombine.low %v2944, %v2951
  %v2953 = vcombine.low %v1934, %v1945
  %v2954 = vcombine.low %v1956, %v1967
  %v2955 = vcombine.low %v1978, %v1989
  %v2956 = vcombine.low %v2000, %v2011
  %v2958 = vunpack.c.l.s4 1966171168
  %v2959 = vunpack.c.0.s8 %v2958
  %v2960 = vlaneseq
  %v2961 = vshrl.u32 %v2960, 7
  %v2962 = vsub.s32 %v2959, %v2961
  %v2963 = vrot.slane %v2953, %v2962
  %v2965 = vunpack.c.l.s4 1966171168
  %v2966 = vunpack.c.0.s8 %v2965
  %v2967 = vlaneseq
  %v2968 = vshrl.u32 %v2967, 7
  %v2969 = vsub.s32 %v2966, %v2968
  %v2970 = vrot.slane %v2954, %v2969
  %v2972 = vunpack.c.l.s4 1966171168
  %v2973 = vunpack.c.0.s8 %v2972
  %v2974 = vlaneseq
  %v2975 = vshrl.u32 %v2974, 7
  %v2976 = vsub.s32 %v2973, %v2975
  %v2977 = vrot.slane %v2955, %v2976
  %v2979 = vunpack.c.l.s4 1966171168
  %v2980 = vunpack.c.0.s8 %v2979
  %v2981 = vlaneseq
  %v2982 = vshrl.u32 %v2981, 7
  %v2983 = vsub.s32 %v2980, %v2982
  %v2984 = vrot.slane %v2956, %v2983
  %v2985 = vcombine.low %v2963, %v2970
  %v2986 = vcombine.low %v2977, %v2984
  %v2988 = vunpack.c.l.s4 1966171168
  %v2989 = vunpack.c.0.s8 %v2988
  %v2990 = vlaneseq
  %v2991 = vshrl.u32 %v2990, 7
  %v2992 = vsub.s32 %v2989, %v2991
  %v2993 = vrot.slane %v2985, %v2992
  %v2995 = vunpack.c.l.s4 1966171168
  %v2996 = vunpack.c.0.s8 %v2995
  %v2997 = vlaneseq
  %v2998 = vshrl.u32 %v2997, 7
  %v2999 = vsub.s32 %v2996, %v2998
  %v3000 = vrot.slane %v2986, %v2999
  %v3001 = vcombine.low %v2993, %v3000
  %v3002 = vcombine.low %v2022, %v2033
  %v3003 = vcombine.low %v2044, %v2055
  %v3004 = vcombine.low %v2066, %v2077
  %v3005 = vcombine.low %v2088, %v2099
  %v3007 = vunpack.c.l.s4 1966171168
  %v3008 = vunpack.c.0.s8 %v3007
  %v3009 = vlaneseq
  %v3010 = vshrl.u32 %v3009, 7
  %v3011 = vsub.s32 %v3008, %v3010
  %v3012 = vrot.slane %v3002, %v3011
  %v3014 = vunpack.c.l.s4 1966171168
  %v3015 = vunpack.c.0.s8 %v3014
  %v3016 = vlaneseq
  %v3017 = vshrl.u32 %v3016, 7
  %v3018 = vsub.s32 %v3015, %v3017
  %v3019 = vrot.slane %v3003, %v3018
  %v3021 = vunpack.c.l.s4 1966171168
  %v3022 = vunpack.c.0.s8 %v3021
  %v3023 = vlaneseq
  %v3024 = vshrl.u32 %v3023, 7
  %v3025 = vsub.s32 %v3022, %v3024
  %v3026 = vrot.slane %v3004, %v3025
  %v3028 = vunpack.c.l.s4 1966171168
  %v3029 = vunpack.c.0.s8 %v3028
  %v3030 = vlaneseq
  %v3031 = vshrl.u32 %v3030, 7
  %v3032 = vsub.s32 %v3029, %v3031
  %v3033 = vrot.slane %v3005, %v3032
  %v3034 = vcombine.low %v3012, %v3019
  %v3035 = vcombine.low %v3026, %v3033
  %v3037 = vunpack.c.l.s4 1966171168
  %v3038 = vunpack.c.0.s8 %v3037
  %v3039 = vlaneseq
  %v3040 = vshrl.u32 %v3039, 7
  %v3041 = vsub.s32 %v3038, %v3040
  %v3042 = vrot.slane %v3034, %v3041
  %v3044 = vunpack.c.l.s4 1966171168
  %v3045 = vunpack.c.0.s8 %v3044
  %v3046 = vlaneseq
  %v3047 = vshrl.u32 %v3046, 7
  %v3048 = vsub.s32 %v3045, %v3047
  %v3049 = vrot.slane %v3035, %v3048
  %v3050 = vcombine.low %v3042, %v3049
  %v3051 = vcombine.low %v2110, %v2121
  %v3052 = vcombine.low %v2132, %v2143
  %v3053 = vcombine.low %v2154, %v2165
  %v3054 = vcombine.low %v2176, %v2187
  %v3056 = vunpack.c.l.s4 1966171168
  %v3057 = vunpack.c.0.s8 %v3056
  %v3058 = vlaneseq
  %v3059 = vshrl.u32 %v3058, 7
  %v3060 = vsub.s32 %v3057, %v3059
  %v3061 = vrot.slane %v3051, %v3060
  %v3063 = vunpack.c.l.s4 1966171168
  %v3064 = vunpack.c.0.s8 %v3063
  %v3065 = vlaneseq
  %v3066 = vshrl.u32 %v3065, 7
  %v3067 = vsub.s32 %v3064, %v3066
  %v3068 = vrot.slane %v3052, %v3067
  %v3070 = vunpack.c.l.s4 1966171168
  %v3071 = vunpack.c.0.s8 %v3070
  %v3072 = vlaneseq
  %v3073 = vshrl.u32 %v3072, 7
  %v3074 = vsub.s32 %v3071, %v3073
  %v3075 = vrot.slane %v3053, %v3074
  %v3077 = vunpack.c.l.s4 1966171168
  %v3078 = vunpack.c.0.s8 %v3077
  %v3079 = vlaneseq
  %v3080 = vshrl.u32 %v3079, 7
  %v3081 = vsub.s32 %v3078, %v3080
  %v3082 = vrot.slane %v3054, %v3081
  %v3083 = vcombine.low %v3061, %v3068
  %v3084 = vcombine.low %v3075, %v3082
  %v3086 = vunpack.c.l.s4 1966171168
  %v3087 = vunpack.c.0.s8 %v3086
  %v3088 = vlaneseq
  %v3089 = vshrl.u32 %v3088, 7
  %v3090 = vsub.s32 %v3087, %v3089
  %v3091 = vrot.slane %v3083, %v3090
  %v3093 = vunpack.c.l.s4 1966171168
  %v3094 = vunpack.c.0.s8 %v3093
  %v3095 = vlaneseq
  %v3096 = vshrl.u32 %v3095, 7
  %v3097 = vsub.s32 %v3094, %v3096
  %v3098 = vrot.slane %v3084, %v3097
  %v3099 = vcombine.low %v3091, %v3098
  %vm3116 = vcmask 1040384
  %vm3117 = vsmask.f32 256
  %vm3118 = vmand %vm3116, %vm3117
  %vm3119 = vcmask 1041409
  %vm3120 = vsmask.f32 1280
  %vm3121 = vmand %vm3119, %vm3120
  %vm3122 = vmor %vm3121, %vm3118
  %vm3123 = vcmask 1042434
  %vm3124 = vsmask.f32 2304
  %vm3125 = vmand %vm3123, %vm3124
  %vm3126 = vmor %vm3125, %vm3122
  %vm3127 = vcmask 1043459
  %vm3128 = vsmask.f32 3328
  %vm3129 = vmand %vm3127, %vm3128
  %vm3130 = vmor %vm3129, %vm3126
  %vm3131 = vcmask 1044484
  %vm3132 = vmand %vm3131, %vm778
  %vm3133 = vmor %vm3132, %vm3130
  %vm3134 = vcmask 1045509
  %vm3135 = vsmask.f32 5376
  %vm3136 = vmand %vm3134, %vm3135
  %vm3137 = vmor %vm3136, %vm3133
  %vm3138 = vcmask 1046534
  %vm3139 = vsmask.f32 6400
  %vm3140 = vmand %vm3138, %vm3139
  %vm3141 = vmor %vm3140, %vm3137
  %vm3142 = vcmask 1047559
  %vm3143 = vsmask.f32 7424
  %vm3144 = vmand %vm3142, %vm3143
  %vm3145 = vmor %vm3144, %vm3141
  %v3146 = vld [vmem:[%s1] sm:$0xff]
  %v3147 = vsel %vm3145, %v2364, %v3146
  %3148 = vst [vmem:[%s1] sm:$0xff] %v3147
  %v3149 = vld [vmem:[%s1 + $0x8] sm:$0xff]
  %v3150 = vsel %vm3145, %v2413, %v3149
  %3151 = vst [vmem:[%s1 + $0x8] sm:$0xff] %v3150
  %v3152 = vld [vmem:[%s1 + $0x10] sm:$0xff]
  %v3153 = vsel %vm3145, %v2462, %v3152
  %3154 = vst [vmem:[%s1 + $0x10] sm:$0xff] %v3153
  %v3155 = vld [vmem:[%s1 + $0x18] sm:$0xff]
  %v3156 = vsel %vm3145, %v2511, %v3155
  %3157 = vst [vmem:[%s1 + $0x18] sm:$0xff] %v3156
  %v3158 = vld [vmem:[%s1 + $0x20] sm:$0xff]
  %v3159 = vsel %vm3145, %v2560, %v3158
  %3160 = vst [vmem:[%s1 + $0x20] sm:$0xff] %v3159
  %v3161 = vld [vmem:[%s1 + $0x28] sm:$0xff]
  %v3162 = vsel %vm3145, %v2609, %v3161
  %3163 = vst [vmem:[%s1 + $0x28] sm:$0xff] %v3162
  %v3164 = vld [vmem:[%s1 + $0x30] sm:$0xff]
  %v3165 = vsel %vm3145, %v2658, %v3164
  %3166 = vst [vmem:[%s1 + $0x30] sm:$0xff] %v3165
  %v3167 = vld [vmem:[%s1 + $0x38] sm:$0xff]
  %v3168 = vsel %vm3145, %v2707, %v3167
  %3169 = vst [vmem:[%s1 + $0x38] sm:$0xff] %v3168
  %v3170 = vld [vmem:[%s1 + $0x40] sm:$0xff]
  %v3171 = vsel %vm3145, %v2756, %v3170
  %3172 = vst [vmem:[%s1 + $0x40] sm:$0xff] %v3171
  %v3173 = vld [vmem:[%s1 + $0x48] sm:$0xff]
  %v3174 = vsel %vm3145, %v2805, %v3173
  %3175 = vst [vmem:[%s1 + $0x48] sm:$0xff] %v3174
  %v3176 = vld [vmem:[%s1 + $0x50] sm:$0xff]
  %v3177 = vsel %vm3145, %v2854, %v3176
  %3178 = vst [vmem:[%s1 + $0x50] sm:$0xff] %v3177
  %v3179 = vld [vmem:[%s1 + $0x58] sm:$0xff]
  %v3180 = vsel %vm3145, %v2903, %v3179
  %3181 = vst [vmem:[%s1 + $0x58] sm:$0xff] %v3180
  %v3182 = vld [vmem:[%s1 + $0x60] sm:$0xff]
  %v3183 = vsel %vm3145, %v2952, %v3182
  %3184 = vst [vmem:[%s1 + $0x60] sm:$0xff] %v3183
  %v3185 = vld [vmem:[%s1 + $0x68] sm:$0xff]
  %v3186 = vsel %vm3145, %v3001, %v3185
  %3187 = vst [vmem:[%s1 + $0x68] sm:$0xff] %v3186
  %v3188 = vld [vmem:[%s1 + $0x70] sm:$0xff]
  %v3189 = vsel %vm3145, %v3050, %v3188
  %3190 = vst [vmem:[%s1 + $0x70] sm:$0xff] %v3189
  %v3191 = vld [vmem:[%s1 + $0x78] sm:$0xff]
  %v3192 = vsel %vm3145, %v3099, %v3191
  %3193 = vst [vmem:[%s1 + $0x78] sm:$0xff] %v3192
  // Predicated region
  $region6: #{_stem.3} parent=0 // pred_check
    _
  $region7: #{_stem.3} parent=0 // pred_check_branch
    %3195 = sbr.rel (0) target = $region9
  $region8: #{_stem.3} parent=0 // pred_region
    _
  $region9: #{_stem.3} parent=0 // pred_fallthru
    _
  // Predicated region
  $region10: #{_stem.3} parent=0 // pred_check
    _
  $region11: #{_stem.3} parent=0 // pred_check_branch
    %3197 = sbr.rel (0) target = $region13
  $region12: #{_stem.3} parent=0 // pred_region
    _
  $region13: #{_stem.3} parent=0 // pred_fallthru
    _

// kernel: squeeze.1
$region0: #{squeeze.1}
  %s0 = inlined_call_operand.vmem [shape: bf16[16384], index: 0, kind: input, shape index: {}]
  %s1 = inlined_call_operand.hbm [shape: bf16[1,16,16,64], index: 1, kind: output, shape index: {}]
  $region1: #{squeeze.1} parent=0
    #allocation0 [shape = 'u8[65536]{0}', space=vmem, size = 0x10000, scoped, tag = 'operand span for operand 1']
    #allocation1 [shape = 's32[1]{0}', space=sflag, size = 0x4, scoped, tag = 'scoped memory for squeeze.1']
    #allocation2 [shape = 'u8[131072]{0}', space=vmem, size = 0x20000, scoped, tag = 'scoped mem for output reshape']
    #allocation3 [shape = 'u8[65536]{0}', space=vmem, size = 0x10000, scoped, tag = 'scoped mem for input reshape']
    %2 = vsyncpa [#allocation1], 0
    %s4 = smul.u32 4, 2
    %s5 = sshllo.u32 0, %s4
    %s6 = smul.addr 4, 15
    %s7 = scalar_lea.vmem %s0, %s6
    %s8 = sshrl.u32 %s5, 1
    %s9 = sor.u32 %s5, %s8
    %s10 = sand.u32 %s9, 85
    %s11 = sshrl.u32 %s10, 1
    %s12 = sor.u32 %s10, %s11
    %s13 = sand.u32 51, %s12
    %s14 = sshrl.u32 %s13, 2
    %s15 = sor.u32 %s13, %s14
    %s16 = sand.u32 15, %s15
    %v17 = vld [vmem:[%s7] sm:%s16]
    %v18 = vunpack.c.l.bf16 %v17
    %v19 = vunpack.c.h.bf16 %v17
    %s20 = scalar_lea.vmem [#allocation3], 120
    %21 = vst [vmem:[%s20] sm:%s5] %v18
    %s22 = smul.addr 4, 14
    %s23 = scalar_lea.vmem %s0, %s22
    %s24 = sshrl.u32 %s5, 1
    %s25 = sor.u32 %s5, %s24
    %s26 = sand.u32 %s25, 85
    %s27 = sshrl.u32 %s26, 1
    %s28 = sor.u32 %s26, %s27
    %s29 = sand.u32 51, %s28
    %s30 = sshrl.u32 %s29, 2
    %s31 = sor.u32 %s29, %s30
    %s32 = sand.u32 15, %s31
    %v33 = vld [vmem:[%s23] sm:%s32]
    %v34 = vunpack.c.l.bf16 %v33
    %v35 = vunpack.c.h.bf16 %v33
    %s36 = scalar_lea.vmem [#allocation3], 112
    %37 = vst [vmem:[%s36] sm:%s5] %v34
    %s38 = smul.addr 4, 13
    %s39 = scalar_lea.vmem %s0, %s38
    %s40 = sshrl.u32 %s5, 1
    %s41 = sor.u32 %s5, %s40
    %s42 = sand.u32 %s41, 85
    %s43 = sshrl.u32 %s42, 1
    %s44 = sor.u32 %s42, %s43
    %s45 = sand.u32 51, %s44
    %s46 = sshrl.u32 %s45, 2
    %s47 = sor.u32 %s45, %s46
    %s48 = sand.u32 15, %s47
    %v49 = vld [vmem:[%s39] sm:%s48]
    %v50 = vunpack.c.l.bf16 %v49
    %v51 = vunpack.c.h.bf16 %v49
    %s52 = scalar_lea.vmem [#allocation3], 104
    %53 = vst [vmem:[%s52] sm:%s5] %v50
    %s54 = smul.addr 4, 12
    %s55 = scalar_lea.vmem %s0, %s54
    %s56 = sshrl.u32 %s5, 1
    %s57 = sor.u32 %s5, %s56
    %s58 = sand.u32 %s57, 85
    %s59 = sshrl.u32 %s58, 1
    %s60 = sor.u32 %s58, %s59
    %s61 = sand.u32 51, %s60
    %s62 = sshrl.u32 %s61, 2
    %s63 = sor.u32 %s61, %s62
    %s64 = sand.u32 15, %s63
    %v65 = vld [vmem:[%s55] sm:%s64]
    %v66 = vunpack.c.l.bf16 %v65
    %v67 = vunpack.c.h.bf16 %v65
    %s68 = scalar_lea.vmem [#allocation3], 96
    %69 = vst [vmem:[%s68] sm:%s5] %v66
    %s70 = smul.addr 4, 11
    %s71 = scalar_lea.vmem %s0, %s70
    %s72 = sshrl.u32 %s5, 1
    %s73 = sor.u32 %s5, %s72
    %s74 = sand.u32 %s73, 85
    %s75 = sshrl.u32 %s74, 1
    %s76 = sor.u32 %s74, %s75
    %s77 = sand.u32 51, %s76
    %s78 = sshrl.u32 %s77, 2
    %s79 = sor.u32 %s77, %s78
    %s80 = sand.u32 15, %s79
    %v81 = vld [vmem:[%s71] sm:%s80]
    %v82 = vunpack.c.l.bf16 %v81
    %v83 = vunpack.c.h.bf16 %v81
    %s84 = scalar_lea.vmem [#allocation3], 88
    %85 = vst [vmem:[%s84] sm:%s5] %v82
    %s86 = smul.addr 4, 10
    %s87 = scalar_lea.vmem %s0, %s86
    %s88 = sshrl.u32 %s5, 1
    %s89 = sor.u32 %s5, %s88
    %s90 = sand.u32 %s89, 85
    %s91 = sshrl.u32 %s90, 1
    %s92 = sor.u32 %s90, %s91
    %s93 = sand.u32 51, %s92
    %s94 = sshrl.u32 %s93, 2
    %s95 = sor.u32 %s93, %s94
    %s96 = sand.u32 15, %s95
    %v97 = vld [vmem:[%s87] sm:%s96]
    %v98 = vunpack.c.l.bf16 %v97
    %v99 = vunpack.c.h.bf16 %v97
    %s100 = scalar_lea.vmem [#allocation3], 80
    %101 = vst [vmem:[%s100] sm:%s5] %v98
    %s102 = smul.addr 4, 9
    %s103 = scalar_lea.vmem %s0, %s102
    %s104 = sshrl.u32 %s5, 1
    %s105 = sor.u32 %s5, %s104
    %s106 = sand.u32 %s105, 85
    %s107 = sshrl.u32 %s106, 1
    %s108 = sor.u32 %s106, %s107
    %s109 = sand.u32 51, %s108
    %s110 = sshrl.u32 %s109, 2
    %s111 = sor.u32 %s109, %s110
    %s112 = sand.u32 15, %s111
    %v113 = vld [vmem:[%s103] sm:%s112]
    %v114 = vunpack.c.l.bf16 %v113
    %v115 = vunpack.c.h.bf16 %v113
    %s116 = scalar_lea.vmem [#allocation3], 72
    %117 = vst [vmem:[%s116] sm:%s5] %v114
    %s118 = smul.addr 4, 8
    %s119 = scalar_lea.vmem %s0, %s118
    %s120 = sshrl.u32 %s5, 1
    %s121 = sor.u32 %s5, %s120
    %s122 = sand.u32 %s121, 85
    %s123 = sshrl.u32 %s122, 1
    %s124 = sor.u32 %s122, %s123
    %s125 = sand.u32 51, %s124
    %s126 = sshrl.u32 %s125, 2
    %s127 = sor.u32 %s125, %s126
    %s128 = sand.u32 15, %s127
    %v129 = vld [vmem:[%s119] sm:%s128]
    %v130 = vunpack.c.l.bf16 %v129
    %v131 = vunpack.c.h.bf16 %v129
    %s132 = scalar_lea.vmem [#allocation3], 64
    %133 = vst [vmem:[%s132] sm:%s5] %v130
    %s134 = smul.addr 4, 7
    %s135 = scalar_lea.vmem %s0, %s134
    %s136 = sshrl.u32 %s5, 1
    %s137 = sor.u32 %s5, %s136
    %s138 = sand.u32 %s137, 85
    %s139 = sshrl.u32 %s138, 1
    %s140 = sor.u32 %s138, %s139
    %s141 = sand.u32 51, %s140
    %s142 = sshrl.u32 %s141, 2
    %s143 = sor.u32 %s141, %s142
    %s144 = sand.u32 15, %s143
    %v145 = vld [vmem:[%s135] sm:%s144]
    %v146 = vunpack.c.l.bf16 %v145
    %v147 = vunpack.c.h.bf16 %v145
    %s148 = scalar_lea.vmem [#allocation3], 56
    %149 = vst [vmem:[%s148] sm:%s5] %v146
    %s150 = smul.addr 4, 6
    %s151 = scalar_lea.vmem %s0, %s150
    %s152 = sshrl.u32 %s5, 1
    %s153 = sor.u32 %s5, %s152
    %s154 = sand.u32 %s153, 85
    %s155 = sshrl.u32 %s154, 1
    %s156 = sor.u32 %s154, %s155
    %s157 = sand.u32 51, %s156
    %s158 = sshrl.u32 %s157, 2
    %s159 = sor.u32 %s157, %s158
    %s160 = sand.u32 15, %s159
    %v161 = vld [vmem:[%s151] sm:%s160]
    %v162 = vunpack.c.l.bf16 %v161
    %v163 = vunpack.c.h.bf16 %v161
    %s164 = scalar_lea.vmem [#allocation3], 48
    %165 = vst [vmem:[%s164] sm:%s5] %v162
    %s166 = smul.addr 4, 5
    %s167 = scalar_lea.vmem %s0, %s166
    %s168 = sshrl.u32 %s5, 1
    %s169 = sor.u32 %s5, %s168
    %s170 = sand.u32 %s169, 85
    %s171 = sshrl.u32 %s170, 1
    %s172 = sor.u32 %s170, %s171
    %s173 = sand.u32 51, %s172
    %s174 = sshrl.u32 %s173, 2
    %s175 = sor.u32 %s173, %s174
    %s176 = sand.u32 15, %s175
    %v177 = vld [vmem:[%s167] sm:%s176]
    %v178 = vunpack.c.l.bf16 %v177
    %v179 = vunpack.c.h.bf16 %v177
    %s180 = scalar_lea.vmem [#allocation3], 40
    %181 = vst [vmem:[%s180] sm:%s5] %v178
    %s182 = smul.addr 4, 4
    %s183 = scalar_lea.vmem %s0, %s182
    %s184 = sshrl.u32 %s5, 1
    %s185 = sor.u32 %s5, %s184
    %s186 = sand.u32 %s185, 85
    %s187 = sshrl.u32 %s186, 1
    %s188 = sor.u32 %s186, %s187
    %s189 = sand.u32 51, %s188
    %s190 = sshrl.u32 %s189, 2
    %s191 = sor.u32 %s189, %s190
    %s192 = sand.u32 15, %s191
    %v193 = vld [vmem:[%s183] sm:%s192]
    %v194 = vunpack.c.l.bf16 %v193
    %v195 = vunpack.c.h.bf16 %v193
    %s196 = scalar_lea.vmem [#allocation3], 32
    %197 = vst [vmem:[%s196] sm:%s5] %v194
    %s198 = smul.addr 4, 3
    %s199 = scalar_lea.vmem %s0, %s198
    %s200 = sshrl.u32 %s5, 1
    %s201 = sor.u32 %s5, %s200
    %s202 = sand.u32 %s201, 85
    %s203 = sshrl.u32 %s202, 1
    %s204 = sor.u32 %s202, %s203
    %s205 = sand.u32 51, %s204
    %s206 = sshrl.u32 %s205, 2
    %s207 = sor.u32 %s205, %s206
    %s208 = sand.u32 15, %s207
    %v209 = vld [vmem:[%s199] sm:%s208]
    %v210 = vunpack.c.l.bf16 %v209
    %v211 = vunpack.c.h.bf16 %v209
    %s212 = scalar_lea.vmem [#allocation3], 24
    %213 = vst [vmem:[%s212] sm:%s5] %v210
    %s214 = smul.addr 4, 2
    %s215 = scalar_lea.vmem %s0, %s214
    %s216 = sshrl.u32 %s5, 1
    %s217 = sor.u32 %s5, %s216
    %s218 = sand.u32 %s217, 85
    %s219 = sshrl.u32 %s218, 1
    %s220 = sor.u32 %s218, %s219
    %s221 = sand.u32 51, %s220
    %s222 = sshrl.u32 %s221, 2
    %s223 = sor.u32 %s221, %s222
    %s224 = sand.u32 15, %s223
    %v225 = vld [vmem:[%s215] sm:%s224]
    %v226 = vunpack.c.l.bf16 %v225
    %v227 = vunpack.c.h.bf16 %v225
    %s228 = scalar_lea.vmem [#allocation3], 16
    %229 = vst [vmem:[%s228] sm:%s5] %v226
    %s230 = scalar_lea.vmem %s0, 4
    %s231 = sshrl.u32 %s5, 1
    %s232 = sor.u32 %s5, %s231
    %s233 = sand.u32 %s232, 85
    %s234 = sshrl.u32 %s233, 1
    %s235 = sor.u32 %s233, %s234
    %s236 = sand.u32 51, %s235
    %s237 = sshrl.u32 %s236, 2
    %s238 = sor.u32 %s236, %s237
    %s239 = sand.u32 15, %s238
    %v240 = vld [vmem:[%s230] sm:%s239]
    %v241 = vunpack.c.l.bf16 %v240
    %v242 = vunpack.c.h.bf16 %v240
    %s243 = scalar_lea.vmem [#allocation3], 8
    %244 = vst [vmem:[%s243] sm:%s5] %v241
    %s245 = sshrl.u32 %s5, 1
    %s246 = sor.u32 %s5, %s245
    %s247 = sand.u32 %s246, 85
    %s248 = sshrl.u32 %s247, 1
    %s249 = sor.u32 %s247, %s248
    %s250 = sand.u32 51, %s249
    %s251 = sshrl.u32 %s250, 2
    %s252 = sor.u32 %s250, %s251
    %s253 = sand.u32 15, %s252
    %v254 = vld [vmem:[%s0] sm:%s253]
    %v255 = vunpack.c.l.bf16 %v254
    %v256 = vunpack.c.h.bf16 %v254
    %257 = vst [vmem:[#allocation3] sm:%s5] %v255
    %v258 = vld [vmem:[#allocation3] sm:$0xff]
    %vm259 = vcmask 523264
    %260 = vst.msk [vmem:[#allocation2] ss:$2 sm:$0xff] %vm259, %v258
    %s261 = scalar_lea.vmem [#allocation3], 8
    %v262 = vld [vmem:[%s261] sm:$0xff]
    %vm263 = vcmask 523264
    %s264 = scalar_lea.vmem [#allocation2], 16
    %265 = vst.msk [vmem:[%s264] ss:$2 sm:$0xff] %vm263, %v262
    %s266 = scalar_lea.vmem [#allocation3], 16
    %v267 = vld [vmem:[%s266] sm:$0xff]
    %vm268 = vcmask 523264
    %s269 = scalar_lea.vmem [#allocation2], 32
    %270 = vst.msk [vmem:[%s269] ss:$2 sm:$0xff] %vm268, %v267
    %s271 = scalar_lea.vmem [#allocation3], 24
    %v272 = vld [vmem:[%s271] sm:$0xff]
    %vm273 = vcmask 523264
    %s274 = scalar_lea.vmem [#allocation2], 48
    %275 = vst.msk [vmem:[%s274] ss:$2 sm:$0xff] %vm273, %v272
    %s276 = scalar_lea.vmem [#allocation3], 32
    %v277 = vld [vmem:[%s276] sm:$0xff]
    %vm278 = vcmask 523264
    %s279 = scalar_lea.vmem [#allocation2], 64
    %280 = vst.msk [vmem:[%s279] ss:$2 sm:$0xff] %vm278, %v277
    %s281 = scalar_lea.vmem [#allocation3], 40
    %v282 = vld [vmem:[%s281] sm:$0xff]
    %vm283 = vcmask 523264
    %s284 = scalar_lea.vmem [#allocation2], 80
    %285 = vst.msk [vmem:[%s284] ss:$2 sm:$0xff] %vm283, %v282
    %s286 = scalar_lea.vmem [#allocation3], 48
    %v287 = vld [vmem:[%s286] sm:$0xff]
    %vm288 = vcmask 523264
    %s289 = scalar_lea.vmem [#allocation2], 96
    %290 = vst.msk [vmem:[%s289] ss:$2 sm:$0xff] %vm288, %v287
    %s291 = scalar_lea.vmem [#allocation3], 56
    %v292 = vld [vmem:[%s291] sm:$0xff]
    %vm293 = vcmask 523264
    %s294 = scalar_lea.vmem [#allocation2], 112
    %295 = vst.msk [vmem:[%s294] ss:$2 sm:$0xff] %vm293, %v292
    %s296 = scalar_lea.vmem [#allocation3], 64
    %v297 = vld [vmem:[%s296] sm:$0xff]
    %vm298 = vcmask 523264
    %s299 = scalar_lea.vmem [#allocation2], 128
    %300 = vst.msk [vmem:[%s299] ss:$2 sm:$0xff] %vm298, %v297
    %s301 = scalar_lea.vmem [#allocation3], 72
    %v302 = vld [vmem:[%s301] sm:$0xff]
    %vm303 = vcmask 523264
    %s304 = scalar_lea.vmem [#allocation2], 144
    %305 = vst.msk [vmem:[%s304] ss:$2 sm:$0xff] %vm303, %v302
    %s306 = scalar_lea.vmem [#allocation3], 80
    %v307 = vld [vmem:[%s306] sm:$0xff]
    %vm308 = vcmask 523264
    %s309 = scalar_lea.vmem [#allocation2], 160
    %310 = vst.msk [vmem:[%s309] ss:$2 sm:$0xff] %vm308, %v307
    %s311 = scalar_lea.vmem [#allocation3], 88
    %v312 = vld [vmem:[%s311] sm:$0xff]
    %vm313 = vcmask 523264
    %s314 = scalar_lea.vmem [#allocation2], 176
    %315 = vst.msk [vmem:[%s314] ss:$2 sm:$0xff] %vm313, %v312
    %s316 = scalar_lea.vmem [#allocation3], 96
    %v317 = vld [vmem:[%s316] sm:$0xff]
    %vm318 = vcmask 523264
    %s319 = scalar_lea.vmem [#allocation2], 192
    %320 = vst.msk [vmem:[%s319] ss:$2 sm:$0xff] %vm318, %v317
    %s321 = scalar_lea.vmem [#allocation3], 104
    %v322 = vld [vmem:[%s321] sm:$0xff]
    %vm323 = vcmask 523264
    %s324 = scalar_lea.vmem [#allocation2], 208
    %325 = vst.msk [vmem:[%s324] ss:$2 sm:$0xff] %vm323, %v322
    %s326 = scalar_lea.vmem [#allocation3], 112
    %v327 = vld [vmem:[%s326] sm:$0xff]
    %vm328 = vcmask 523264
    %s329 = scalar_lea.vmem [#allocation2], 224
    %330 = vst.msk [vmem:[%s329] ss:$2 sm:$0xff] %vm328, %v327
    %s331 = scalar_lea.vmem [#allocation3], 120
    %v332 = vld [vmem:[%s331] sm:$0xff]
    %vm333 = vcmask 523264
    %s334 = scalar_lea.vmem [#allocation2], 240
    %335 = vst.msk [vmem:[%s334] ss:$2 sm:$0xff] %vm333, %v332
    %v336 = vld [vmem:[#allocation3] sm:$0xff]
    %337 = vrot.lane.b32.xlu0 %v336, 64
    %v338 = vpop.permute.xlu0 %337
    %vm339 = vcmask 523264
    %s340 = scalar_lea.vmem [#allocation2], 1
    %341 = vst.msk [vmem:[%s340] ss:$2 sm:$0xff] %vm339, %v338
    %s342 = scalar_lea.vmem [#allocation3], 16
    %v343 = vld [vmem:[%s342] sm:$0xff]
    %344 = vrot.lane.b32.xlu0 %v343, 64
    %v345 = vpop.permute.xlu0 %344
    %vm346 = vcmask 523264
    %s347 = scalar_lea.vmem [#allocation2], 33
    %348 = vst.msk [vmem:[%s347] ss:$2 sm:$0xff] %vm346, %v345
    %s349 = scalar_lea.vmem [#allocation3], 32
    %v350 = vld [vmem:[%s349] sm:$0xff]
    %351 = vrot.lane.b32.xlu0 %v350, 64
    %v352 = vpop.permute.xlu0 %351
    %vm353 = vcmask 523264
    %s354 = scalar_lea.vmem [#allocation2], 65
    %355 = vst.msk [vmem:[%s354] ss:$2 sm:$0xff] %vm353, %v352
    %s356 = scalar_lea.vmem [#allocation3], 48
    %v357 = vld [vmem:[%s356] sm:$0xff]
    %358 = vrot.lane.b32.xlu0 %v357, 64
    %v359 = vpop.permute.xlu0 %358
    %vm360 = vcmask 523264
    %s361 = scalar_lea.vmem [#allocation2], 97
    %362 = vst.msk [vmem:[%s361] ss:$2 sm:$0xff] %vm360, %v359
    %s363 = scalar_lea.vmem [#allocation3], 64
    %v364 = vld [vmem:[%s363] sm:$0xff]
    %365 = vrot.lane.b32.xlu0 %v364, 64
    %v366 = vpop.permute.xlu0 %365
    %vm367 = vcmask 523264
    %s368 = scalar_lea.vmem [#allocation2], 129
    %369 = vst.msk [vmem:[%s368] ss:$2 sm:$0xff] %vm367, %v366
    %s370 = scalar_lea.vmem [#allocation3], 80
    %v371 = vld [vmem:[%s370] sm:$0xff]
    %372 = vrot.lane.b32.xlu0 %v371, 64
    %v373 = vpop.permute.xlu0 %372
    %vm374 = vcmask 523264
    %s375 = scalar_lea.vmem [#allocation2], 161
    %376 = vst.msk [vmem:[%s375] ss:$2 sm:$0xff] %vm374, %v373
    %s377 = scalar_lea.vmem [#allocation3], 96
    %v378 = vld [vmem:[%s377] sm:$0xff]
    %379 = vrot.lane.b32.xlu0 %v378, 64
    %v380 = vpop.permute.xlu0 %379
    %vm381 = vcmask 523264
    %s382 = scalar_lea.vmem [#allocation2], 193
    %383 = vst.msk [vmem:[%s382] ss:$2 sm:$0xff] %vm381, %v380
    %s384 = scalar_lea.vmem [#allocation3], 112
    %v385 = vld [vmem:[%s384] sm:$0xff]
    %386 = vrot.lane.b32.xlu0 %v385, 64
    %v387 = vpop.permute.xlu0 %386
    %vm388 = vcmask 523264
    %s389 = scalar_lea.vmem [#allocation2], 225
    %390 = vst.msk [vmem:[%s389] ss:$2 sm:$0xff] %vm388, %v387
    %s391 = scalar_lea.vmem [#allocation3], 8
    %v392 = vld [vmem:[%s391] sm:$0xff]
    %393 = vrot.lane.b32.xlu0 %v392, 64
    %v394 = vpop.permute.xlu0 %393
    %vm395 = vcmask 523264
    %s396 = scalar_lea.vmem [#allocation2], 17
    %397 = vst.msk [vmem:[%s396] ss:$2 sm:$0xff] %vm395, %v394
    %s398 = scalar_lea.vmem [#allocation3], 24
    %v399 = vld [vmem:[%s398] sm:$0xff]
    %400 = vrot.lane.b32.xlu0 %v399, 64
    %v401 = vpop.permute.xlu0 %400
    %vm402 = vcmask 523264
    %s403 = scalar_lea.vmem [#allocation2], 49
    %404 = vst.msk [vmem:[%s403] ss:$2 sm:$0xff] %vm402, %v401
    %s405 = scalar_lea.vmem [#allocation3], 40
    %v406 = vld [vmem:[%s405] sm:$0xff]
    %407 = vrot.lane.b32.xlu0 %v406, 64
    %v408 = vpop.permute.xlu0 %407
    %vm409 = vcmask 523264
    %s410 = scalar_lea.vmem [#allocation2], 81
    %411 = vst.msk [vmem:[%s410] ss:$2 sm:$0xff] %vm409, %v408
    %s412 = scalar_lea.vmem [#allocation3], 56
    %v413 = vld [vmem:[%s412] sm:$0xff]
    %414 = vrot.lane.b32.xlu0 %v413, 64
    %v415 = vpop.permute.xlu0 %414
    %vm416 = vcmask 523264
    %s417 = scalar_lea.vmem [#allocation2], 113
    %418 = vst.msk [vmem:[%s417] ss:$2 sm:$0xff] %vm416, %v415
    %s419 = scalar_lea.vmem [#allocation3], 72
    %v420 = vld [vmem:[%s419] sm:$0xff]
    %421 = vrot.lane.b32.xlu0 %v420, 64
    %v422 = vpop.permute.xlu0 %421
    %vm423 = vcmask 523264
    %s424 = scalar_lea.vmem [#allocation2], 145
    %425 = vst.msk [vmem:[%s424] ss:$2 sm:$0xff] %vm423, %v422
    %s426 = scalar_lea.vmem [#allocation3], 88
    %v427 = vld [vmem:[%s426] sm:$0xff]
    %428 = vrot.lane.b32.xlu0 %v427, 64
    %v429 = vpop.permute.xlu0 %428
    %vm430 = vcmask 523264
    %s431 = scalar_lea.vmem [#allocation2], 177
    %432 = vst.msk [vmem:[%s431] ss:$2 sm:$0xff] %vm430, %v429
    %s433 = scalar_lea.vmem [#allocation3], 104
    %v434 = vld [vmem:[%s433] sm:$0xff]
    %435 = vrot.lane.b32.xlu0 %v434, 64
    %v436 = vpop.permute.xlu0 %435
    %vm437 = vcmask 523264
    %s438 = scalar_lea.vmem [#allocation2], 209
    %439 = vst.msk [vmem:[%s438] ss:$2 sm:$0xff] %vm437, %v436
    %s440 = scalar_lea.vmem [#allocation3], 120
    %v441 = vld [vmem:[%s440] sm:$0xff]
    %442 = vrot.lane.b32.xlu0 %v441, 64
    %v443 = vpop.permute.xlu0 %442
    %vm444 = vcmask 523264
    %s445 = scalar_lea.vmem [#allocation2], 241
    %446 = vst.msk [vmem:[%s445] ss:$2 sm:$0xff] %vm444, %v443
    %s448 = smul.u32 4, 2
    %s449 = sshllo.u32 0, %s448
    %s450 = sshrl.u32 %s448, 1
    %v451 = vld [vmem:[#allocation2] sm:%s449]
    %v452 = vpack.c.bf16 0.0, %v451
    %s453 = sshllo.u32 0, %s450
    %454 = vst [vmem:[#allocation0] sm:%s453] %v452
    %s455 = scalar_lea.vmem [#allocation2], 8
    %v456 = vld [vmem:[%s455] sm:%s449]
    %v457 = vpack.c.bf16 0.0, %v456
    %s458 = sshllo.u32 0, %s450
    %s459 = scalar_lea.vmem [#allocation0], 4
    %460 = vst [vmem:[%s459] sm:%s458] %v457
    %s461 = scalar_lea.vmem [#allocation2], 16
    %v462 = vld [vmem:[%s461] sm:%s449]
    %v463 = vpack.c.bf16 0.0, %v462
    %s464 = sshllo.u32 0, %s450
    %s465 = smul.addr 4, 2
    %s466 = scalar_lea.vmem [#allocation0], %s465
    %467 = vst [vmem:[%s466] sm:%s464] %v463
    %s468 = scalar_lea.vmem [#allocation2], 24
    %v469 = vld [vmem:[%s468] sm:%s449]
    %v470 = vpack.c.bf16 0.0, %v469
    %s471 = sshllo.u32 0, %s450
    %s472 = smul.addr 4, 3
    %s473 = scalar_lea.vmem [#allocation0], %s472
    %474 = vst [vmem:[%s473] sm:%s471] %v470
    %s475 = scalar_lea.vmem [#allocation2], 32
    %v476 = vld [vmem:[%s475] sm:%s449]
    %v477 = vpack.c.bf16 0.0, %v476
    %s478 = sshllo.u32 0, %s450
    %s479 = smul.addr 4, 4
    %s480 = scalar_lea.vmem [#allocation0], %s479
    %481 = vst [vmem:[%s480] sm:%s478] %v477
    %s482 = scalar_lea.vmem [#allocation2], 40
    %v483 = vld [vmem:[%s482] sm:%s449]
    %v484 = vpack.c.bf16 0.0, %v483
    %s485 = sshllo.u32 0, %s450
    %s486 = smul.addr 4, 5
    %s487 = scalar_lea.vmem [#allocation0], %s486
    %488 = vst [vmem:[%s487] sm:%s485] %v484
    %s489 = scalar_lea.vmem [#allocation2], 48
    %v490 = vld [vmem:[%s489] sm:%s449]
    %v491 = vpack.c.bf16 0.0, %v490
    %s492 = sshllo.u32 0, %s450
    %s493 = smul.addr 4, 6
    %s494 = scalar_lea.vmem [#allocation0], %s493
    %495 = vst [vmem:[%s494] sm:%s492] %v491
    %s496 = scalar_lea.vmem [#allocation2], 56
    %v497 = vld [vmem:[%s496] sm:%s449]
    %v498 = vpack.c.bf16 0.0, %v497
    %s499 = sshllo.u32 0, %s450
    %s500 = smul.addr 4, 7
    %s501 = scalar_lea.vmem [#allocation0], %s500
    %502 = vst [vmem:[%s501] sm:%s499] %v498
    %s503 = scalar_lea.vmem [#allocation2], 64
    %v504 = vld [vmem:[%s503] sm:%s449]
    %v505 = vpack.c.bf16 0.0, %v504
    %s506 = sshllo.u32 0, %s450
    %s507 = smul.addr 4, 8
    %s508 = scalar_lea.vmem [#allocation0], %s507
    %509 = vst [vmem:[%s508] sm:%s506] %v505
    %s510 = scalar_lea.vmem [#allocation2], 72
    %v511 = vld [vmem:[%s510] sm:%s449]
    %v512 = vpack.c.bf16 0.0, %v511
    %s513 = sshllo.u32 0, %s450
    %s514 = smul.addr 4, 9
    %s515 = scalar_lea.vmem [#allocation0], %s514
    %516 = vst [vmem:[%s515] sm:%s513] %v512
    %s517 = scalar_lea.vmem [#allocation2], 80
    %v518 = vld [vmem:[%s517] sm:%s449]
    %v519 = vpack.c.bf16 0.0, %v518
    %s520 = sshllo.u32 0, %s450
    %s521 = smul.addr 4, 10
    %s522 = scalar_lea.vmem [#allocation0], %s521
    %523 = vst [vmem:[%s522] sm:%s520] %v519
    %s524 = scalar_lea.vmem [#allocation2], 88
    %v525 = vld [vmem:[%s524] sm:%s449]
    %v526 = vpack.c.bf16 0.0, %v525
    %s527 = sshllo.u32 0, %s450
    %s528 = smul.addr 4, 11
    %s529 = scalar_lea.vmem [#allocation0], %s528
    %530 = vst [vmem:[%s529] sm:%s527] %v526
    %s531 = scalar_lea.vmem [#allocation2], 96
    %v532 = vld [vmem:[%s531] sm:%s449]
    %v533 = vpack.c.bf16 0.0, %v532
    %s534 = sshllo.u32 0, %s450
    %s535 = smul.addr 4, 12
    %s536 = scalar_lea.vmem [#allocation0], %s535
    %537 = vst [vmem:[%s536] sm:%s534] %v533
    %s538 = scalar_lea.vmem [#allocation2], 104
    %v539 = vld [vmem:[%s538] sm:%s449]
    %v540 = vpack.c.bf16 0.0, %v539
    %s541 = sshllo.u32 0, %s450
    %s542 = smul.addr 4, 13
    %s543 = scalar_lea.vmem [#allocation0], %s542
    %544 = vst [vmem:[%s543] sm:%s541] %v540
    %s545 = scalar_lea.vmem [#allocation2], 112
    %v546 = vld [vmem:[%s545] sm:%s449]
    %v547 = vpack.c.bf16 0.0, %v546
    %s548 = sshllo.u32 0, %s450
    %s549 = smul.addr 4, 14
    %s550 = scalar_lea.vmem [#allocation0], %s549
    %551 = vst [vmem:[%s550] sm:%s548] %v547
    %s552 = scalar_lea.vmem [#allocation2], 120
    %v553 = vld [vmem:[%s552] sm:%s449]
    %v554 = vpack.c.bf16 0.0, %v553
    %s555 = sshllo.u32 0, %s450
    %s556 = smul.addr 4, 15
    %s557 = scalar_lea.vmem [#allocation0], %s556
    %558 = vst [vmem:[%s557] sm:%s555] %v554
    %s559 = scalar_lea.vmem [#allocation2], 128
    %v560 = vld [vmem:[%s559] sm:%s449]
    %v561 = vpack.c.bf16 0.0, %v560
    %s562 = sshllo.u32 0, %s450
    %s563 = smul.addr 4, 16
    %s564 = scalar_lea.vmem [#allocation0], %s563
    %565 = vst [vmem:[%s564] sm:%s562] %v561
    %s566 = scalar_lea.vmem [#allocation2], 136
    %v567 = vld [vmem:[%s566] sm:%s449]
    %v568 = vpack.c.bf16 0.0, %v567
    %s569 = sshllo.u32 0, %s450
    %s570 = smul.addr 4, 17
    %s571 = scalar_lea.vmem [#allocation0], %s570
    %572 = vst [vmem:[%s571] sm:%s569] %v568
    %s573 = scalar_lea.vmem [#allocation2], 144
    %v574 = vld [vmem:[%s573] sm:%s449]
    %v575 = vpack.c.bf16 0.0, %v574
    %s576 = sshllo.u32 0, %s450
    %s577 = smul.addr 4, 18
    %s578 = scalar_lea.vmem [#allocation0], %s577
    %579 = vst [vmem:[%s578] sm:%s576] %v575
    %s580 = scalar_lea.vmem [#allocation2], 152
    %v581 = vld [vmem:[%s580] sm:%s449]
    %v582 = vpack.c.bf16 0.0, %v581
    %s583 = sshllo.u32 0, %s450
    %s584 = smul.addr 4, 19
    %s585 = scalar_lea.vmem [#allocation0], %s584
    %586 = vst [vmem:[%s585] sm:%s583] %v582
    %s587 = scalar_lea.vmem [#allocation2], 160
    %v588 = vld [vmem:[%s587] sm:%s449]
    %v589 = vpack.c.bf16 0.0, %v588
    %s590 = sshllo.u32 0, %s450
    %s591 = smul.addr 4, 20
    %s592 = scalar_lea.vmem [#allocation0], %s591
    %593 = vst [vmem:[%s592] sm:%s590] %v589
    %s594 = scalar_lea.vmem [#allocation2], 168
    %v595 = vld [vmem:[%s594] sm:%s449]
    %v596 = vpack.c.bf16 0.0, %v595
    %s597 = sshllo.u32 0, %s450
    %s598 = smul.addr 4, 21
    %s599 = scalar_lea.vmem [#allocation0], %s598
    %600 = vst [vmem:[%s599] sm:%s597] %v596
    %s601 = scalar_lea.vmem [#allocation2], 176
    %v602 = vld [vmem:[%s601] sm:%s449]
    %v603 = vpack.c.bf16 0.0, %v602
    %s604 = sshllo.u32 0, %s450
    %s605 = smul.addr 4, 22
    %s606 = scalar_lea.vmem [#allocation0], %s605
    %607 = vst [vmem:[%s606] sm:%s604] %v603
    %s608 = scalar_lea.vmem [#allocation2], 184
    %v609 = vld [vmem:[%s608] sm:%s449]
    %v610 = vpack.c.bf16 0.0, %v609
    %s611 = sshllo.u32 0, %s450
    %s612 = smul.addr 4, 23
    %s613 = scalar_lea.vmem [#allocation0], %s612
    %614 = vst [vmem:[%s613] sm:%s611] %v610
    %s615 = scalar_lea.vmem [#allocation2], 192
    %v616 = vld [vmem:[%s615] sm:%s449]
    %v617 = vpack.c.bf16 0.0, %v616
    %s618 = sshllo.u32 0, %s450
    %s619 = smul.addr 4, 24
    %s620 = scalar_lea.vmem [#allocation0], %s619
    %621 = vst [vmem:[%s620] sm:%s618] %v617
    %s622 = scalar_lea.vmem [#allocation2], 200
    %v623 = vld [vmem:[%s622] sm:%s449]
    %v624 = vpack.c.bf16 0.0, %v623
    %s625 = sshllo.u32 0, %s450
    %s626 = smul.addr 4, 25
    %s627 = scalar_lea.vmem [#allocation0], %s626
    %628 = vst [vmem:[%s627] sm:%s625] %v624
    %s629 = scalar_lea.vmem [#allocation2], 208
    %v630 = vld [vmem:[%s629] sm:%s449]
    %v631 = vpack.c.bf16 0.0, %v630
    %s632 = sshllo.u32 0, %s450
    %s633 = smul.addr 4, 26
    %s634 = scalar_lea.vmem [#allocation0], %s633
    %635 = vst [vmem:[%s634] sm:%s632] %v631
    %s636 = scalar_lea.vmem [#allocation2], 216
    %v637 = vld [vmem:[%s636] sm:%s449]
    %v638 = vpack.c.bf16 0.0, %v637
    %s639 = sshllo.u32 0, %s450
    %s640 = smul.addr 4, 27
    %s641 = scalar_lea.vmem [#allocation0], %s640
    %642 = vst [vmem:[%s641] sm:%s639] %v638
    %s643 = scalar_lea.vmem [#allocation2], 224
    %v644 = vld [vmem:[%s643] sm:%s449]
    %v645 = vpack.c.bf16 0.0, %v644
    %s646 = sshllo.u32 0, %s450
    %s647 = smul.addr 4, 28
    %s648 = scalar_lea.vmem [#allocation0], %s647
    %649 = vst [vmem:[%s648] sm:%s646] %v645
    %s650 = scalar_lea.vmem [#allocation2], 232
    %v651 = vld [vmem:[%s650] sm:%s449]
    %v652 = vpack.c.bf16 0.0, %v651
    %s653 = sshllo.u32 0, %s450
    %s654 = smul.addr 4, 29
    %s655 = scalar_lea.vmem [#allocation0], %s654
    %656 = vst [vmem:[%s655] sm:%s653] %v652
    %s657 = scalar_lea.vmem [#allocation2], 240
    %v658 = vld [vmem:[%s657] sm:%s449]
    %v659 = vpack.c.bf16 0.0, %v658
    %s660 = sshllo.u32 0, %s450
    %s661 = smul.addr 4, 30
    %s662 = scalar_lea.vmem [#allocation0], %s661
    %663 = vst [vmem:[%s662] sm:%s660] %v659
    %s664 = scalar_lea.vmem [#allocation2], 248
    %v665 = vld [vmem:[%s664] sm:%s449]
    %v666 = vpack.c.bf16 0.0, %v665
    %s667 = sshllo.u32 0, %s450
    %s668 = smul.addr 4, 31
    %s669 = scalar_lea.vmem [#allocation0], %s668
    %670 = vst [vmem:[%s669] sm:%s667] %v666
    %s672 = ssub.s32 2048, 2048
    %673 = vsyncadd [#allocation1], %s672
    %s675 = sshll.u32 [#allocation0], 4
    %s676 = int_to_ptr.vmem [resolvable:$true] %s675
    %678 = dma.vmem_to_hbm [thread:$0]  %s676, 2048, %s1, [#allocation1]
    %679 = dma.done [#allocation1], 2048
    %680 = vsyncpa [#allocation1], 1

</llo_original>
